<compile_context>
chip_gen: v6e
topology: v6e:2x2x1
jax: 0.10.0
libtpu: 0.0.40
codegen_flags: <defaults>
</compile_context>

<pallas_src>
import jax
import jax.numpy as jnp
from jax.experimental import pallas as pl
from jax.experimental.pallas import tpu as pltpu


# ----------------------------------------------------------------------------
# Generation-aware tiling budgets
# ----------------------------------------------------------------------------
_ACC_BUDGET_BYTES = 2 * 1024 * 1024      # f32 accumulator tile (VMEM scratch)


def _chip_budgets():
    """(vmem_limit_bytes, band_budget_bytes) derived from physical VMEM."""
    try:
        cap = int(pltpu.get_tpu_info().vmem_capacity_bytes)
    except Exception:                     # interpret mode / unknown chip
        cap = 64 * 1024 * 1024            # conservative, v7x-sized default
    vmem_limit = min((3 * cap) // 4, 96 * 1024 * 1024)  # 48 MiB v7x, 96 MiB v5e/v6e
    band_budget = max(cap // 8, 4 * 1024 * 1024)        # 8 MiB v7x, 16 MiB v5e/v6e
    return vmem_limit, band_budget


def _pick_th(H, W, Cin, Cout, band_budget):
    """Largest divisor of H whose f32 acc tile and bf16 halo band fit budget."""
    for cand in range(H, 0, -1):
        if H % cand:
            continue
        acc_bytes = cand * W * Cout * 4
        band_bytes = (cand + 2) * (W + 2) * Cin * 2
        if acc_bytes <= _ACC_BUDGET_BYTES and band_bytes <= band_budget:
            return cand
    # Nothing satisfies the soft budgets (pathologically wide rows): fall back
    # to single-row bands and let vmem_limit_bytes be the hard backstop.
    return 1


# ----------------------------------------------------------------------------
# Pallas kernel: 3x3 same-padding conv + bias + ReLU
# grid = (batch, row-band); bf16 MXU matmuls, f32 VMEM-scratch accumulation
# ----------------------------------------------------------------------------
def _conv3x3_relu_kernel(x_ref, w_ref, b_ref, o_ref, acc_ref):
    # x_ref   : (1, TH+2, W+2, Cin)  bf16  zero-padded row band (incl. halo)
    # w_ref   : (3, 3, Cin, Cout)    bf16  full HWIO weights (VMEM-resident)
    # b_ref   : (1, Cout)            f32   bias
    # o_ref   : (1, TH, W, Cout)     bf16  output band
    # acc_ref : (TH*W, Cout)         f32   VMEM scratch accumulator
    _, TH, W, Cout = o_ref.shape
    Cin = x_ref.shape[-1]

    # Nine shifted (TH*W, Cin) x (Cin, Cout) bf16 matmuls accumulated in f32 on
    # the MXU.  Each tap loads directly from the pipelined input buffer: the dy
    # offset is a cheap leading-axis slice, dx a sublane-offset slice.
    first = True
    for dx in range(3):
        for dy in range(3):
            z = x_ref[0, dy:dy + TH, dx:dx + W, :].reshape(TH * W, Cin)
            p = jnp.dot(z, w_ref[dy, dx], preferred_element_type=jnp.float32)
            if first:
                acc_ref[...] = p
                first = False
            else:
                acc_ref[...] += p

    y = jnp.maximum(acc_ref[...] + b_ref[...], 0.0)      # bias + ReLU in f32
    o_ref[0] = y.reshape(TH, W, Cout).astype(o_ref.dtype)


def conv3x3_relu(x_nhwc, w, b):
    """3x3 'same' conv + bias + ReLU.  (N,H,W,Cin) -> (N,H,W,Cout) bf16."""
    N, H, W, Cin = x_nhwc.shape
    Cout = w.shape[-1]
    vmem_limit, band_budget = _chip_budgets()
    TH = _pick_th(H, W, Cin, Cout, band_budget)
    RB = H // TH

    x_bf = x_nhwc.astype(jnp.bfloat16)
    w_bf = w.astype(jnp.bfloat16)
    b2 = b.reshape(1, Cout).astype(jnp.float32)

    # Zero-pad for 'same' conv.
    # TODO(synk): replace with in-kernel halo DMA + zero-fill to save one HBM
    #             round trip of the activations per layer.
    xp = jnp.pad(x_bf, ((0, 0), (1, 1), (1, 1), (0, 0)))
    if RB == 1:
        xb = xp                                            # (N, H+2, W+2, Cin)
    else:
        # Fallback halo-band materialization.  With the 2 MiB accumulator TH is
        # large, so the duplicated halo is only ~2/TH of the activations.
        # TODO(synk): replace with in-kernel halo DMA (pl.ANY + make_async_copy).
        xb = jnp.stack(
            [xp[:, r * TH:r * TH + TH + 2] for r in range(RB)], axis=1
        ).reshape(N * RB, TH + 2, W + 2, Cin)

    flops = 2 * 9 * N * H * W * Cin * Cout
    bytes_accessed = (xb.size * 2 + w_bf.size * 2 + b2.size * 4
                      + N * H * W * Cout * 2)

    return pl.pallas_call(
        _conv3x3_relu_kernel,
        out_shape=jax.ShapeDtypeStruct((N, H, W, Cout), jnp.bfloat16),
        grid=(N, RB),
        in_specs=[
            pl.BlockSpec((1, TH + 2, W + 2, Cin),
                         lambda n, r: (n * RB + r, 0, 0, 0)),
            # Constant block index -> weights fetched once per layer and kept
            # resident in VMEM across all grid steps.
            pl.BlockSpec((3, 3, Cin, Cout), lambda n, r: (0, 0, 0, 0)),
            pl.BlockSpec((1, Cout), lambda n, r: (0, 0)),
        ],
        out_specs=pl.BlockSpec((1, TH, W, Cout), lambda n, r: (n, r, 0, 0)),
        scratch_shapes=[pltpu.VMEM((TH * W, Cout), jnp.float32)],
        compiler_params=pltpu.CompilerParams(
            dimension_semantics=("parallel", "parallel"),
            vmem_limit_bytes=vmem_limit,
        ),
        cost_estimate=pl.CostEstimate(
            flops=flops, transcendentals=0, bytes_accessed=bytes_accessed),
    )(xb, w_bf, b2)


# ----------------------------------------------------------------------------
# Pallas kernel: mean L1 (nn.L1Loss default), tiled sequential grid reduction
# ----------------------------------------------------------------------------
def l1_loss_mean(a, b):
    assert a.shape == b.shape
    C = a.shape[-1]
    a2 = a.reshape(-1, C)
    b2 = b.reshape(-1, C)
    rows = a2.shape[0]
    total = rows * C

    TB = 512                                       # row tile (multiple of 8)
    if rows <= TB:
        TB, nb = rows, 1
    else:
        pad = (-rows) % TB                         # zero rows contribute |0-0|=0
        if pad:
            a2 = jnp.pad(a2, ((0, pad), (0, 0)))
            b2 = jnp.pad(b2, ((0, pad), (0, 0)))
        nb = (rows + pad) // TB

    def kernel(a_ref, b_ref, o_ref):
        @pl.when(pl.program_id(0) == 0)
        def _():
            o_ref[0, 0] = jnp.float32(0.0)
        d = jnp.abs(a_ref[...].astype(jnp.float32)
                    - b_ref[...].astype(jnp.float32))
        o_ref[0, 0] += jnp.sum(d)                  # raw sum; scaled once outside

    out = pl.pallas_call(
        kernel,
        out_shape=jax.ShapeDtypeStruct((1, 1), jnp.float32),
        grid=(nb,),
        in_specs=[pl.BlockSpec((TB, C), lambda i: (i, 0)),
                  pl.BlockSpec((TB, C), lambda i: (i, 0))],
        out_specs=pl.BlockSpec(memory_space=pltpu.MemorySpace.SMEM),
        compiler_params=pltpu.CompilerParams(
            # Must stay sequential: the SMEM accumulation would race if this
            # axis were parallel / core-split.
            dimension_semantics=("arbitrary",)),
    )(a2, b2)
    return out[0, 0] / jnp.float32(total)


# ----------------------------------------------------------------------------
# Glue: 2x2 max-pool (stride 2) between Pallas conv kernels.
# ----------------------------------------------------------------------------
def maxpool2x2(x_nhwc):
    # TODO(synk): fuse into the preceding conv's epilogue (pooled output tile)
    #             to save ~1.5 HBM passes for each of the three pooled layers.
    N, H, W, C = x_nhwc.shape
    return jnp.max(x_nhwc.reshape(N, H // 2, 2, W // 2, 2, C), axis=(2, 4))


# ----------------------------------------------------------------------------
# VGG16 features[:23] (conv1_1 ... relu4_3), synthetic deterministic weights.
# ----------------------------------------------------------------------------
_VGG_CONV_DIMS = [
    (3, 64), (64, 64),                     # block1 (then pool)
    (64, 128), (128, 128),                 # block2 (then pool)
    (128, 256), (256, 256), (256, 256),    # block3 (then pool)
    (256, 512), (512, 512), (512, 512),    # block4 (stops at relu4_3)
]
_VGG_LAYOUT = ["C", "C", "P", "C", "C", "P", "C", "C", "C", "P", "C", "C", "C"]


def init_vgg16_features23_params(key):
    params = []
    for i, (cin, cout) in enumerate(_VGG_CONV_DIMS):
        kw, kb = jax.random.split(jax.random.fold_in(key, i))
        w = (jax.random.normal(kw, (3, 3, cin, cout), jnp.float32)
             * jnp.sqrt(2.0 / (9.0 * cin)))
        b = jax.random.normal(kb, (cout,), jnp.float32) * 0.01
        params.append((w, b))
    return params


def vgg16_features23(x_nhwc, params):
    # TODO(synk): the first conv (Cin=3) underutilizes the MXU (K=3); folding
    #             the 3x3 taps into a single K=27 im2col matmul would fix it.
    ci = 0
    for op in _VGG_LAYOUT:
        if op == "P":
            x_nhwc = maxpool2x2(x_nhwc)
        else:
            w, b = params[ci]
            ci += 1
            x_nhwc = conv3x3_relu(x_nhwc, w, b)
    return x_nhwc


# ----------------------------------------------------------------------------
# Perceptual_Loss.forward equivalent
# ----------------------------------------------------------------------------
def perceptual_loss(pred_nchw, real_nchw, params, mask=None):
    if mask is not None:
        pred_nchw = pred_nchw * mask
        real_nchw = real_nchw * mask
    n = pred_nchw.shape[0]
    # Single VGG pass over the concatenated batch: each layer's weights are
    # fetched once, the conv grid is twice as deep and the megacore split lands
    # on the even (2N) batch axis.
    x = jnp.concatenate([pred_nchw, real_nchw], axis=0)
    x = jnp.transpose(x, (0, 2, 3, 1)).astype(jnp.bfloat16)   # NCHW -> NHWC
    feats = vgg16_features23(x, params)
    return l1_loss_mean(feats[:n], feats[n:])


# ----------------------------------------------------------------------------
# Pure-JAX/XLA reference (same bf16/f32 mixed precision) for a self-check.
# ----------------------------------------------------------------------------
def _reference_perceptual_loss(pred_nchw, real_nchw, params, mask=None):
    def features(x_nchw):
        x = jnp.transpose(x_nchw, (0, 2, 3, 1)).astype(jnp.bfloat16)
        ci = 0
        for op in _VGG_LAYOUT:
            if op == "P":
                N, H, W, C = x.shape
                x = jnp.max(x.reshape(N, H // 2, 2, W // 2, 2, C), axis=(2, 4))
            else:
                w, b = params[ci]
                ci += 1
                y = jax.lax.conv_general_dilated(
                    x, w.astype(jnp.bfloat16), window_strides=(1, 1),
                    padding=((1, 1), (1, 1)),
                    dimension_numbers=("NHWC", "HWIO", "NHWC"),
                    preferred_element_type=jnp.float32)
                x = jnp.maximum(y + b.astype(jnp.float32), 0.0).astype(jnp.bfloat16)
        return x

    if mask is not None:
        pred_nchw = pred_nchw * mask
        real_nchw = real_nchw * mask
    fp = features(pred_nchw).astype(jnp.float32)
    fr = features(real_nchw).astype(jnp.float32)
    return jnp.mean(jnp.abs(fp - fr))


if __name__ == "__main__":
    key = jax.random.PRNGKey(0)
    k_params, k_pred, k_real = jax.random.split(key, 3)

    # VGG expects 3 input channels; 16x16 spatial keeps the /8 downsample even.
    pred = jax.random.normal(k_pred, (2, 3, 16, 16), jnp.float32)
    real = jax.random.normal(k_real, (2, 3, 16, 16), jnp.float32)
    params = init_vgg16_features23_params(k_params)

    loss = jax.block_until_ready(perceptual_loss(pred, real, params, mask=None))
    assert jnp.isfinite(loss)

    # Self-check vs. the XLA reference (loose tolerance: differences come only
    # from reduction order / bf16 rounding boundaries).
    ref = jax.block_until_ready(_reference_perceptual_loss(pred, real, params))
    assert abs(float(loss) - float(ref)) <= 5e-2 * abs(float(ref)) + 1e-2, (
        float(loss), float(ref))

    print("KERNEL_OK")
</pallas_src>

<mosaic_0001>
module attributes {stable_mosaic.version = 11 : i64} {
  func.func @_conv3x3_relu_kernel(%arg0: i32, %arg1: i32, %arg2: memref<1x18x18x3xbf16, #tpu.memory_space<vmem>>, %arg3: memref<3x3x3x64xbf16, #tpu.memory_space<vmem>>, %arg4: memref<1x64xf32, #tpu.memory_space<vmem>>, %arg5: memref<1x16x16x64xbf16, #tpu.memory_space<vmem>>, %arg6: memref<256x64xf32, #tpu.memory_space<vmem>>) attributes {dimension_semantics = [#tpu.dimension_semantics<parallel>, #tpu.dimension_semantics<parallel>], iteration_bounds = array<i64: 4, 1>, scalar_prefetch = 0 : i64, scratch_operands = 1 : i64, tpu.core_type = #tpu.core_type<tc>, window_params = [{transform_indices = @transform_0, window_bounds = array<i64: 1, 18, 18, 3>}, {pipeline_mode = #tpu.pipeline_mode<synchronous>, transform_indices = @transform_1, window_bounds = array<i64: 3, 3, 3, 64>}, {pipeline_mode = #tpu.pipeline_mode<synchronous>, transform_indices = @transform_2, window_bounds = array<i64: 1, 64>}, {transform_indices = @transform_3, window_bounds = array<i64: 1, 16, 16, 64>}]} {
    %c0 = arith.constant 0 : index
    %c0_0 = arith.constant 0 : index
    %c0_1 = arith.constant 0 : index
    %c0_2 = arith.constant 0 : index
    %0 = vector.load %arg2[%c0, %c0_0, %c0_1, %c0_2] : memref<1x18x18x3xbf16, #tpu.memory_space<vmem>>, vector<1x16x16x3xbf16>
    %1 = vector.shape_cast %0 : vector<1x16x16x3xbf16> to vector<16x16x3xbf16>
    %2 = vector.shape_cast %1 : vector<16x16x3xbf16> to vector<256x3xbf16>
    %c0_3 = arith.constant 0 : index
    %c0_4 = arith.constant 0 : index
    %c0_5 = arith.constant 0 : index
    %c0_6 = arith.constant 0 : index
    %3 = vector.load %arg3[%c0_3, %c0_4, %c0_5, %c0_6] : memref<3x3x3x64xbf16, #tpu.memory_space<vmem>>, vector<1x1x3x64xbf16>
    %4 = vector.shape_cast %3 : vector<1x1x3x64xbf16> to vector<3x64xbf16>
    %cst = arith.constant dense<0.000000e+00> : vector<256x64xf32>
    %5 = tpu.matmul %2, %4, %cst {dimension_numbers = #tpu.dot_dimension_numbers<[1], [0], [0], [1], [0, 0, 1, 1], [], []>} : vector<256x3xbf16>, vector<3x64xbf16>, vector<256x64xf32> -> vector<256x64xf32>
    %c0_7 = arith.constant 0 : index
    %c0_8 = arith.constant 0 : index
    %6 = vector.load %arg6[%c0_7, %c0_8] : memref<256x64xf32, #tpu.memory_space<vmem>>, vector<256x64xf32>
    tpu.vector_store %arg6[%c0_7, %c0_8], %5 {strides = array<i32>} : memref<256x64xf32, #tpu.memory_space<vmem>>, vector<256x64xf32>,
    %c0_9 = arith.constant 0 : index
    %c1 = arith.constant 1 : index
    %c0_10 = arith.constant 0 : index
    %c0_11 = arith.constant 0 : index
    %7 = vector.load %arg2[%c0_9, %c1, %c0_10, %c0_11] : memref<1x18x18x3xbf16, #tpu.memory_space<vmem>>, vector<1x16x16x3xbf16>
    %8 = vector.shape_cast %7 : vector<1x16x16x3xbf16> to vector<16x16x3xbf16>
    %9 = vector.shape_cast %8 : vector<16x16x3xbf16> to vector<256x3xbf16>
    %c1_12 = arith.constant 1 : index
    %c0_13 = arith.constant 0 : index
    %c0_14 = arith.constant 0 : index
    %c0_15 = arith.constant 0 : index
    %10 = vector.load %arg3[%c1_12, %c0_13, %c0_14, %c0_15] : memref<3x3x3x64xbf16, #tpu.memory_space<vmem>>, vector<1x1x3x64xbf16>
    %11 = vector.shape_cast %10 : vector<1x1x3x64xbf16> to vector<3x64xbf16>
    %cst_16 = arith.constant dense<0.000000e+00> : vector<256x64xf32>
    %12 = tpu.matmul %9, %11, %cst_16 {dimension_numbers = #tpu.dot_dimension_numbers<[1], [0], [0], [1], [0, 0, 1, 1], [], []>} : vector<256x3xbf16>, vector<3x64xbf16>, vector<256x64xf32> -> vector<256x64xf32>
    %c0_17 = arith.constant 0 : index
    %c0_18 = arith.constant 0 : index
    %13 = vector.load %arg6[%c0_17, %c0_18] : memref<256x64xf32, #tpu.memory_space<vmem>>, vector<256x64xf32>
    %14 = arith.addf %13, %12 : vector<256x64xf32>
    %c0_19 = arith.constant 0 : index
    %c0_20 = arith.constant 0 : index
    %15 = vector.load %arg6[%c0_19, %c0_20] : memref<256x64xf32, #tpu.memory_space<vmem>>, vector<256x64xf32>
    tpu.vector_store %arg6[%c0_19, %c0_20], %14 {strides = array<i32>} : memref<256x64xf32, #tpu.memory_space<vmem>>, vector<256x64xf32>,
    %c0_21 = arith.constant 0 : index
    %c2 = arith.constant 2 : index
    %c0_22 = arith.constant 0 : index
    %c0_23 = arith.constant 0 : index
    %16 = vector.load %arg2[%c0_21, %c2, %c0_22, %c0_23] : memref<1x18x18x3xbf16, #tpu.memory_space<vmem>>, vector<1x16x16x3xbf16>
    %17 = vector.shape_cast %16 : vector<1x16x16x3xbf16> to vector<16x16x3xbf16>
    %18 = vector.shape_cast %17 : vector<16x16x3xbf16> to vector<256x3xbf16>
    %c2_24 = arith.constant 2 : index
    %c0_25 = arith.constant 0 : index
    %c0_26 = arith.constant 0 : index
    %c0_27 = arith.constant 0 : index
    %19 = vector.load %arg3[%c2_24, %c0_25, %c0_26, %c0_27] : memref<3x3x3x64xbf16, #tpu.memory_space<vmem>>, vector<1x1x3x64xbf16>
    %20 = vector.shape_cast %19 : vector<1x1x3x64xbf16> to vector<3x64xbf16>
    %cst_28 = arith.constant dense<0.000000e+00> : vector<256x64xf32>
    %21 = tpu.matmul %18, %20, %cst_28 {dimension_numbers = #tpu.dot_dimension_numbers<[1], [0], [0], [1], [0, 0, 1, 1], [], []>} : vector<256x3xbf16>, vector<3x64xbf16>, vector<256x64xf32> -> vector<256x64xf32>
    %c0_29 = arith.constant 0 : index
    %c0_30 = arith.constant 0 : index
    %22 = vector.load %arg6[%c0_29, %c0_30] : memref<256x64xf32, #tpu.memory_space<vmem>>, vector<256x64xf32>
    %23 = arith.addf %22, %21 : vector<256x64xf32>
    %c0_31 = arith.constant 0 : index
    %c0_32 = arith.constant 0 : index
    %24 = vector.load %arg6[%c0_31, %c0_32] : memref<256x64xf32, #tpu.memory_space<vmem>>, vector<256x64xf32>
    tpu.vector_store %arg6[%c0_31, %c0_32], %23 {strides = array<i32>} : memref<256x64xf32, #tpu.memory_space<vmem>>, vector<256x64xf32>,
    %c0_33 = arith.constant 0 : index
    %c0_34 = arith.constant 0 : index
    %c1_35 = arith.constant 1 : index
    %c0_36 = arith.constant 0 : index
    %25 = vector.load %arg2[%c0_33, %c0_34, %c1_35, %c0_36] : memref<1x18x18x3xbf16, #tpu.memory_space<vmem>>, vector<1x16x16x3xbf16>
    %26 = vector.shape_cast %25 : vector<1x16x16x3xbf16> to vector<16x16x3xbf16>
    %27 = vector.shape_cast %26 : vector<16x16x3xbf16> to vector<256x3xbf16>
    %c0_37 = arith.constant 0 : index
    %c1_38 = arith.constant 1 : index
    %c0_39 = arith.constant 0 : index
    %c0_40 = arith.constant 0 : index
    %28 = vector.load %arg3[%c0_37, %c1_38, %c0_39, %c0_40] : memref<3x3x3x64xbf16, #tpu.memory_space<vmem>>, vector<1x1x3x64xbf16>
    %29 = vector.shape_cast %28 : vector<1x1x3x64xbf16> to vector<3x64xbf16>
    %cst_41 = arith.constant dense<0.000000e+00> : vector<256x64xf32>
    %30 = tpu.matmul %27, %29, %cst_41 {dimension_numbers = #tpu.dot_dimension_numbers<[1], [0], [0], [1], [0, 0, 1, 1], [], []>} : vector<256x3xbf16>, vector<3x64xbf16>, vector<256x64xf32> -> vector<256x64xf32>
    %c0_42 = arith.constant 0 : index
    %c0_43 = arith.constant 0 : index
    %31 = vector.load %arg6[%c0_42, %c0_43] : memref<256x64xf32, #tpu.memory_space<vmem>>, vector<256x64xf32>
    %32 = arith.addf %31, %30 : vector<256x64xf32>
    %c0_44 = arith.constant 0 : index
    %c0_45 = arith.constant 0 : index
    %33 = vector.load %arg6[%c0_44, %c0_45] : memref<256x64xf32, #tpu.memory_space<vmem>>, vector<256x64xf32>
    tpu.vector_store %arg6[%c0_44, %c0_45], %32 {strides = array<i32>} : memref<256x64xf32, #tpu.memory_space<vmem>>, vector<256x64xf32>,
    %c0_46 = arith.constant 0 : index
    %c1_47 = arith.constant 1 : index
    %c1_48 = arith.constant 1 : index
    %c0_49 = arith.constant 0 : index
    %34 = vector.load %arg2[%c0_46, %c1_47, %c1_48, %c0_49] : memref<1x18x18x3xbf16, #tpu.memory_space<vmem>>, vector<1x16x16x3xbf16>
    %35 = vector.shape_cast %34 : vector<1x16x16x3xbf16> to vector<16x16x3xbf16>
    %36 = vector.shape_cast %35 : vector<16x16x3xbf16> to vector<256x3xbf16>
    %c1_50 = arith.constant 1 : index
    %c1_51 = arith.constant 1 : index
    %c0_52 = arith.constant 0 : index
    %c0_53 = arith.constant 0 : index
    %37 = vector.load %arg3[%c1_50, %c1_51, %c0_52, %c0_53] : memref<3x3x3x64xbf16, #tpu.memory_space<vmem>>, vector<1x1x3x64xbf16>
    %38 = vector.shape_cast %37 : vector<1x1x3x64xbf16> to vector<3x64xbf16>
    %cst_54 = arith.constant dense<0.000000e+00> : vector<256x64xf32>
    %39 = tpu.matmul %36, %38, %cst_54 {dimension_numbers = #tpu.dot_dimension_numbers<[1], [0], [0], [1], [0, 0, 1, 1], [], []>} : vector<256x3xbf16>, vector<3x64xbf16>, vector<256x64xf32> -> vector<256x64xf32>
    %c0_55 = arith.constant 0 : index
    %c0_56 = arith.constant 0 : index
    %40 = vector.load %arg6[%c0_55, %c0_56] : memref<256x64xf32, #tpu.memory_space<vmem>>, vector<256x64xf32>
    %41 = arith.addf %40, %39 : vector<256x64xf32>
    %c0_57 = arith.constant 0 : index
    %c0_58 = arith.constant 0 : index
    %42 = vector.load %arg6[%c0_57, %c0_58] : memref<256x64xf32, #tpu.memory_space<vmem>>, vector<256x64xf32>
    tpu.vector_store %arg6[%c0_57, %c0_58], %41 {strides = array<i32>} : memref<256x64xf32, #tpu.memory_space<vmem>>, vector<256x64xf32>,
    %c0_59 = arith.constant 0 : index
    %c2_60 = arith.constant 2 : index
    %c1_61 = arith.constant 1 : index
    %c0_62 = arith.constant 0 : index
    %43 = vector.load %arg2[%c0_59, %c2_60, %c1_61, %c0_62] : memref<1x18x18x3xbf16, #tpu.memory_space<vmem>>, vector<1x16x16x3xbf16>
    %44 = vector.shape_cast %43 : vector<1x16x16x3xbf16> to vector<16x16x3xbf16>
    %45 = vector.shape_cast %44 : vector<16x16x3xbf16> to vector<256x3xbf16>
    %c2_63 = arith.constant 2 : index
    %c1_64 = arith.constant 1 : index
    %c0_65 = arith.constant 0 : index
    %c0_66 = arith.constant 0 : index
    %46 = vector.load %arg3[%c2_63, %c1_64, %c0_65, %c0_66] : memref<3x3x3x64xbf16, #tpu.memory_space<vmem>>, vector<1x1x3x64xbf16>
    %47 = vector.shape_cast %46 : vector<1x1x3x64xbf16> to vector<3x64xbf16>
    %cst_67 = arith.constant dense<0.000000e+00> : vector<256x64xf32>
    %48 = tpu.matmul %45, %47, %cst_67 {dimension_numbers = #tpu.dot_dimension_numbers<[1], [0], [0], [1], [0, 0, 1, 1], [], []>} : vector<256x3xbf16>, vector<3x64xbf16>, vector<256x64xf32> -> vector<256x64xf32>
    %c0_68 = arith.constant 0 : index
    %c0_69 = arith.constant 0 : index
    %49 = vector.load %arg6[%c0_68, %c0_69] : memref<256x64xf32, #tpu.memory_space<vmem>>, vector<256x64xf32>
    %50 = arith.addf %49, %48 : vector<256x64xf32>
    %c0_70 = arith.constant 0 : index
    %c0_71 = arith.constant 0 : index
    %51 = vector.load %arg6[%c0_70, %c0_71] : memref<256x64xf32, #tpu.memory_space<vmem>>, vector<256x64xf32>
    tpu.vector_store %arg6[%c0_70, %c0_71], %50 {strides = array<i32>} : memref<256x64xf32, #tpu.memory_space<vmem>>, vector<256x64xf32>,
    %c0_72 = arith.constant 0 : index
    %c0_73 = arith.constant 0 : index
    %c2_74 = arith.constant 2 : index
    %c0_75 = arith.constant 0 : index
    %52 = vector.load %arg2[%c0_72, %c0_73, %c2_74, %c0_75] : memref<1x18x18x3xbf16, #tpu.memory_space<vmem>>, vector<1x16x16x3xbf16>
    %53 = vector.shape_cast %52 : vector<1x16x16x3xbf16> to vector<16x16x3xbf16>
    %54 = vector.shape_cast %53 : vector<16x16x3xbf16> to vector<256x3xbf16>
    %c0_76 = arith.constant 0 : index
    %c2_77 = arith.constant 2 : index
    %c0_78 = arith.constant 0 : index
    %c0_79 = arith.constant 0 : index
    %55 = vector.load %arg3[%c0_76, %c2_77, %c0_78, %c0_79] : memref<3x3x3x64xbf16, #tpu.memory_space<vmem>>, vector<1x1x3x64xbf16>
    %56 = vector.shape_cast %55 : vector<1x1x3x64xbf16> to vector<3x64xbf16>
    %cst_80 = arith.constant dense<0.000000e+00> : vector<256x64xf32>
    %57 = tpu.matmul %54, %56, %cst_80 {dimension_numbers = #tpu.dot_dimension_numbers<[1], [0], [0], [1], [0, 0, 1, 1], [], []>} : vector<256x3xbf16>, vector<3x64xbf16>, vector<256x64xf32> -> vector<256x64xf32>
    %c0_81 = arith.constant 0 : index
    %c0_82 = arith.constant 0 : index
    %58 = vector.load %arg6[%c0_81, %c0_82] : memref<256x64xf32, #tpu.memory_space<vmem>>, vector<256x64xf32>
    %59 = arith.addf %58, %57 : vector<256x64xf32>
    %c0_83 = arith.constant 0 : index
    %c0_84 = arith.constant 0 : index
    %60 = vector.load %arg6[%c0_83, %c0_84] : memref<256x64xf32, #tpu.memory_space<vmem>>, vector<256x64xf32>
    tpu.vector_store %arg6[%c0_83, %c0_84], %59 {strides = array<i32>} : memref<256x64xf32, #tpu.memory_space<vmem>>, vector<256x64xf32>,
    %c0_85 = arith.constant 0 : index
    %c1_86 = arith.constant 1 : index
    %c2_87 = arith.constant 2 : index
    %c0_88 = arith.constant 0 : index
    %61 = vector.load %arg2[%c0_85, %c1_86, %c2_87, %c0_88] : memref<1x18x18x3xbf16, #tpu.memory_space<vmem>>, vector<1x16x16x3xbf16>
    %62 = vector.shape_cast %61 : vector<1x16x16x3xbf16> to vector<16x16x3xbf16>
    %63 = vector.shape_cast %62 : vector<16x16x3xbf16> to vector<256x3xbf16>
    %c1_89 = arith.constant 1 : index
    %c2_90 = arith.constant 2 : index
    %c0_91 = arith.constant 0 : index
    %c0_92 = arith.constant 0 : index
    %64 = vector.load %arg3[%c1_89, %c2_90, %c0_91, %c0_92] : memref<3x3x3x64xbf16, #tpu.memory_space<vmem>>, vector<1x1x3x64xbf16>
    %65 = vector.shape_cast %64 : vector<1x1x3x64xbf16> to vector<3x64xbf16>
    %cst_93 = arith.constant dense<0.000000e+00> : vector<256x64xf32>
    %66 = tpu.matmul %63, %65, %cst_93 {dimension_numbers = #tpu.dot_dimension_numbers<[1], [0], [0], [1], [0, 0, 1, 1], [], []>} : vector<256x3xbf16>, vector<3x64xbf16>, vector<256x64xf32> -> vector<256x64xf32>
    %c0_94 = arith.constant 0 : index
    %c0_95 = arith.constant 0 : index
    %67 = vector.load %arg6[%c0_94, %c0_95] : memref<256x64xf32, #tpu.memory_space<vmem>>, vector<256x64xf32>
    %68 = arith.addf %67, %66 : vector<256x64xf32>
    %c0_96 = arith.constant 0 : index
    %c0_97 = arith.constant 0 : index
    %69 = vector.load %arg6[%c0_96, %c0_97] : memref<256x64xf32, #tpu.memory_space<vmem>>, vector<256x64xf32>
    tpu.vector_store %arg6[%c0_96, %c0_97], %68 {strides = array<i32>} : memref<256x64xf32, #tpu.memory_space<vmem>>, vector<256x64xf32>,
    %c0_98 = arith.constant 0 : index
    %c2_99 = arith.constant 2 : index
    %c2_100 = arith.constant 2 : index
    %c0_101 = arith.constant 0 : index
    %70 = vector.load %arg2[%c0_98, %c2_99, %c2_100, %c0_101] : memref<1x18x18x3xbf16, #tpu.memory_space<vmem>>, vector<1x16x16x3xbf16>
    %71 = vector.shape_cast %70 : vector<1x16x16x3xbf16> to vector<16x16x3xbf16>
    %72 = vector.shape_cast %71 : vector<16x16x3xbf16> to vector<256x3xbf16>
    %c2_102 = arith.constant 2 : index
    %c2_103 = arith.constant 2 : index
    %c0_104 = arith.constant 0 : index
    %c0_105 = arith.constant 0 : index
    %73 = vector.load %arg3[%c2_102, %c2_103, %c0_104, %c0_105] : memref<3x3x3x64xbf16, #tpu.memory_space<vmem>>, vector<1x1x3x64xbf16>
    %74 = vector.shape_cast %73 : vector<1x1x3x64xbf16> to vector<3x64xbf16>
    %cst_106 = arith.constant dense<0.000000e+00> : vector<256x64xf32>
    %75 = tpu.matmul %72, %74, %cst_106 {dimension_numbers = #tpu.dot_dimension_numbers<[1], [0], [0], [1], [0, 0, 1, 1], [], []>} : vector<256x3xbf16>, vector<3x64xbf16>, vector<256x64xf32> -> vector<256x64xf32>
    %c0_107 = arith.constant 0 : index
    %c0_108 = arith.constant 0 : index
    %76 = vector.load %arg6[%c0_107, %c0_108] : memref<256x64xf32, #tpu.memory_space<vmem>>, vector<256x64xf32>
    %77 = arith.addf %76, %75 : vector<256x64xf32>
    %c0_109 = arith.constant 0 : index
    %c0_110 = arith.constant 0 : index
    %78 = vector.load %arg6[%c0_109, %c0_110] : memref<256x64xf32, #tpu.memory_space<vmem>>, vector<256x64xf32>
    tpu.vector_store %arg6[%c0_109, %c0_110], %77 {strides = array<i32>} : memref<256x64xf32, #tpu.memory_space<vmem>>, vector<256x64xf32>,
    %c0_111 = arith.constant 0 : index
    %c0_112 = arith.constant 0 : index
    %79 = vector.load %arg6[%c0_111, %c0_112] : memref<256x64xf32, #tpu.memory_space<vmem>>, vector<256x64xf32>
    %c0_113 = arith.constant 0 : index
    %c0_114 = arith.constant 0 : index
    %80 = vector.load %arg4[%c0_113, %c0_114] : memref<1x64xf32, #tpu.memory_space<vmem>>, vector<1x64xf32>
    %81 = vector.broadcast %80 : vector<1x64xf32> to vector<256x64xf32>
    %82 = arith.addf %79, %81 : vector<256x64xf32>
    %cst_115 = arith.constant 0.000000e+00 : f32
    %83 = vector.broadcast %cst_115 : f32 to vector<256x64xf32>
    %84 = arith.maximumf %82, %83 : vector<256x64xf32>
    %85 = vector.shape_cast %84 : vector<256x64xf32> to vector<16x16x64xf32>
    %86 = arith.truncf %85 : vector<16x16x64xf32> to vector<16x16x64xbf16>
    %c0_116 = arith.constant 0 : index
    %c0_117 = arith.constant 0 : index
    %c0_118 = arith.constant 0 : index
    %c0_119 = arith.constant 0 : index
    %87 = vector.load %arg5[%c0_116, %c0_117, %c0_118, %c0_119] : memref<1x16x16x64xbf16, #tpu.memory_space<vmem>>, vector<1x16x16x64xbf16>
    %88 = vector.shape_cast %87 : vector<1x16x16x64xbf16> to vector<16x16x64xbf16>
    %89 = vector.shape_cast %86 : vector<16x16x64xbf16> to vector<1x16x16x64xbf16>
    tpu.vector_store %arg5[%c0_116, %c0_117, %c0_118, %c0_119], %89 {strides = array<i32>} : memref<1x16x16x64xbf16, #tpu.memory_space<vmem>>, vector<1x16x16x64xbf16>,
    return
  }
  func.func @transform_0(%arg0: i32, %arg1: i32) -> (i32, i32, i32, i32) {
    %c1_i32 = arith.constant 1 : i32
    %0 = arith.muli %arg0, %c1_i32 : i32
    %1 = arith.addi %0, %arg1 : i32
    %c0_i32 = arith.constant 0 : i32
    %c0_i32_0 = arith.constant 0 : i32
    %c0_i32_1 = arith.constant 0 : i32
    %c0_i32_2 = arith.constant 0 : i32
    return %1, %c0_i32, %c0_i32_0, %c0_i32_1 : i32, i32, i32, i32
  }
  func.func @transform_1(%arg0: i32, %arg1: i32) -> (i32, i32, i32, i32) {
    %c0_i32 = arith.constant 0 : i32
    %c0_i32_0 = arith.constant 0 : i32
    %c0_i32_1 = arith.constant 0 : i32
    %c0_i32_2 = arith.constant 0 : i32
    %c0_i32_3 = arith.constant 0 : i32
    return %c0_i32, %c0_i32_0, %c0_i32_1, %c0_i32_2 : i32, i32, i32, i32
  }
  func.func @transform_2(%arg0: i32, %arg1: i32) -> (i32, i32) {
    %c0_i32 = arith.constant 0 : i32
    %c0_i32_0 = arith.constant 0 : i32
    %c0_i32_1 = arith.constant 0 : i32
    return %c0_i32, %c0_i32_0 : i32, i32
  }
  func.func @transform_3(%arg0: i32, %arg1: i32) -> (i32, i32, i32, i32) {
    %c0_i32 = arith.constant 0 : i32
    %c0_i32_0 = arith.constant 0 : i32
    %c0_i32_1 = arith.constant 0 : i32
    return %arg0, %arg1, %c0_i32, %c0_i32_0 : i32, i32, i32, i32
  }
}

</mosaic_0001>

<llo_original>
// kernel: tpu_custom_call.1
$region0: #{tpu_custom_call.1}
  #allocation0 [shape = 'u32[]', space=smem, size = 0x4, offset = 0x4, fixed_abs, tag = 'smem constant byte address 0x4 - core index']
  #allocation1 [shape = 'u32[144,128]{1,0:T(1,128)}', space=vmem, size = 0x12000, scoped, tag = 'internal scratch']
  #allocation2 [shape = 'f32[256,64]{1,0:T(8,128)}', space=vmem, size = 0x20000, scoped, tag = 'scratch operand']
  %s0 = inlined_call_operand.vmem [shape: bf16[4,18,18,3], index: 0, kind: input, shape index: {}]
  %s1 = inlined_call_operand.vmem [shape: bf16[3,3,3,64], index: 1, kind: input, shape index: {}]
  %s2 = inlined_call_operand.vmem [shape: f32[1,64], index: 2, kind: input, shape index: {}]
  %s3 = inlined_call_operand.hbm [shape: bf16[4,16,16,64], index: 3, kind: output, shape index: {}]
  %s4 = sld [smem:[#allocation0]]
  $region45: #{tpu_custom_call.1} parent=0
    _
  %s6 = ssub.s32 1, %s4
  %s7 = scalar_select 0, %s6, %s4
  $region1: #{tpu_custom_call.1} parent=0
    #allocation3 [shape = 'u8[131072]{0}', space=vmem, size = 0x20000, scoped, tag = 'output window, operand 0']
    #allocation4 [shape = 's32[2]{0}', space=sflag, size = 0x8, scoped, tag = 'scoped memory for tpu_custom_call.1']
    %8 = vsyncpa [#allocation4], 0
    %s9 = scalar_lea.sflag [#allocation4], 1
    %10 = vsyncpa %s9, 0
    loop: start=0, step=1, limit=6
    $region2: #{tpu_custom_call.1} parent=1 // loop_pre_header
      _
    $region3: #{tpu_custom_call.1} parent=1 // loop_header
      %s12 = sphi 0, %s16
      %p13 = scmp.ge.s32.totalorder %s12, 6
      %s19 = sphi 0, %s31
      %s20 = sphi 0, %s27
      %s21 = sphi 0, %s19
      %s22 = sphi 0, %s20
      %s23 = sphi 0, %s21
      %s24 = sphi 0, %s22
      %s36 = sphi 0, %s38
      %s39 = sphi 0, %s36
      %s40 = sphi 0, %s39
      %s56 = sphi 0, %s40
      %s60 = sphi 0, %s60
      %s62 = sphi 0, %s60
      %s63 = sphi 0, %s62
      %s77 = sphi 0, %s63
      %s81 = sphi 0, %s81
      %s83 = sphi 0, %s81
      %s84 = sphi 0, %s83
      %s98 = sphi 0, %s84
      %s106 = sphi 0, %s108
      %s109 = sphi 0, %s106
      %s110 = sphi 0, %s109
      %s126 = sphi 0, %s110
    $region4: #{tpu_custom_call.1} parent=1 // loop_header_branch
      %15 = sbr.rel (%p13) target = $region8
    $region5: #{tpu_custom_call.1} parent=1 // loop_body
      %s17 = ssub.s32 %s12, 1
      %s18 = ssub.s32 %s12, 2
      %s25 = sadd.s32 1, %s20
      %p26 = scmp.ge.s32.totalorder %s25, 1
      %s27 = scalar_select %p26, 0, %s25
      %s28 = sadd.s32 1, %s19
      %s29 = scalar_select %p26, %s28, %s19
      %p30 = scmp.ge.s32.totalorder %s29, 4
      %s31 = scalar_select %p30, 0, %s29
      %s32 = sadd.s32 %s19, %s20
      %s33 = sadd.s32 %s31, %s27
      %s34 = ssub.s32 %s32, %s33
      %p35 = scmp.eq.s32.totalorder %s34, 0
      %s37 = sadd.s32 %s36, 1
      %s38 = scalar_select %p35, %s36, %s37
      %p41 = pneg %p35
      %p42 = scmp.eq.s32.totalorder %s12, 3
      %p43 = por %p41, %p42
      %p44 = scmp.ne.s32.totalorder %s36, %s39
      %p45 = scmp.eq.s32.totalorder %s12, 0
      %p46 = por %p44, %p45
      %p47 = scmp.ne.s32.totalorder %s36, %s39
      %p48 = scmp.eq.s32.totalorder %s17, 3
      %p49 = por %p47, %p48
      %p50 = scmp.ne.s32.totalorder %s39, %s40
      %p51 = scmp.eq.s32.totalorder %s17, 0
      %p52 = por %p50, %p51
      %p53 = scmp.ne.s32.totalorder %s39, %s40
      %p54 = scmp.eq.s32.totalorder %s18, 3
      %p55 = por %p53, %p54
      %p57 = scmp.ne.s32.totalorder %s40, %s56
      %p58 = scmp.eq.s32.totalorder %s18, 0
      %p59 = por %p57, %p58
      %s61 = sadd.s32 %s60, 1
      %p64 = scmp.eq.s32.totalorder %s12, 3
      %p65 = scmp.ne.s32.totalorder %s60, %s62
      %p66 = scmp.eq.s32.totalorder %s12, 0
      %p67 = por %p65, %p66
      %p68 = scmp.ne.s32.totalorder %s60, %s62
      %p69 = scmp.eq.s32.totalorder %s17, 3
      %p70 = por %p68, %p69
      %p71 = scmp.ne.s32.totalorder %s62, %s63
      %p72 = scmp.eq.s32.totalorder %s17, 0
      %p73 = por %p71, %p72
      %p74 = scmp.ne.s32.totalorder %s62, %s63
      %p75 = scmp.eq.s32.totalorder %s18, 3
      %p76 = por %p74, %p75
      %p78 = scmp.ne.s32.totalorder %s63, %s77
      %p79 = scmp.eq.s32.totalorder %s18, 0
      %p80 = por %p78, %p79
      %s82 = sadd.s32 %s81, 1
      %p85 = scmp.eq.s32.totalorder %s12, 3
      %p86 = scmp.ne.s32.totalorder %s81, %s83
      %p87 = scmp.eq.s32.totalorder %s12, 0
      %p88 = por %p86, %p87
      %p89 = scmp.ne.s32.totalorder %s81, %s83
      %p90 = scmp.eq.s32.totalorder %s17, 3
      %p91 = por %p89, %p90
      %p92 = scmp.ne.s32.totalorder %s83, %s84
      %p93 = scmp.eq.s32.totalorder %s17, 0
      %p94 = por %p92, %p93
      %p95 = scmp.ne.s32.totalorder %s83, %s84
      %p96 = scmp.eq.s32.totalorder %s18, 3
      %p97 = por %p95, %p96
      %p99 = scmp.ne.s32.totalorder %s84, %s98
      %p100 = scmp.eq.s32.totalorder %s18, 0
      %p101 = por %p99, %p100
      %s102 = ssub.s32 %s19, %s31
      %s103 = ssub.s32 %s20, %s27
      %s104 = sor.u32 %s102, %s103
      %p105 = scmp.eq.s32.totalorder %s104, 0
      %s107 = sadd.s32 %s106, 1
      %s108 = scalar_select %p105, %s106, %s107
      %p111 = pneg %p105
      %p112 = scmp.eq.s32.totalorder %s12, 3
      %p113 = por %p111, %p112
      %p114 = scmp.ne.s32.totalorder %s106, %s109
      %p115 = scmp.eq.s32.totalorder %s12, 0
      %p116 = por %p114, %p115
      %p117 = scmp.ne.s32.totalorder %s106, %s109
      %p118 = scmp.eq.s32.totalorder %s17, 3
      %p119 = por %p117, %p118
      %p120 = scmp.ne.s32.totalorder %s109, %s110
      %p121 = scmp.eq.s32.totalorder %s17, 0
      %p122 = por %p120, %p121
      %p123 = scmp.ne.s32.totalorder %s109, %s110
      %p124 = scmp.eq.s32.totalorder %s18, 3
      %p125 = por %p123, %p124
      %p127 = scmp.ne.s32.totalorder %s110, %s126
      %p128 = scmp.eq.s32.totalorder %s18, 0
      %p129 = por %p127, %p128
      %p130 = scmp.le.s32.totalorder 1, %s12
      %p131 = scmp.lt.s32.totalorder %s12, 5
      %p132 = pnand %p130, %p131
      %p133 = pneg %p132
      // Predicated region
      $region9: #{tpu_custom_call.1} parent=5 // pred_check
        _
      $region10: #{tpu_custom_call.1} parent=5 // pred_check_branch
        %135 = sbr.rel (%p132) target = $region12
      $region11: #{tpu_custom_call.1} parent=5 // pred_region
        %s136 = ssub.s32 %s12, 1
        // Predicated region
        $region13: #{tpu_custom_call.1} parent=11 // pred_check
          %p137 = pneg %p73
        $region14: #{tpu_custom_call.1} parent=11 // pred_check_branch
          %139 = sbr.rel (%p137) target = $region16
        $region15: #{tpu_custom_call.1} parent=11 // pred_region
          _
        $region16: #{tpu_custom_call.1} parent=11 // pred_fallthru
          _
        // Predicated region
        $region17: #{tpu_custom_call.1} parent=11 // pred_check
          %p140 = pneg %p94
        $region18: #{tpu_custom_call.1} parent=11 // pred_check_branch
          %142 = sbr.rel (%p140) target = $region20
        $region19: #{tpu_custom_call.1} parent=11 // pred_region
          _
        $region20: #{tpu_custom_call.1} parent=11 // pred_fallthru
          _
      $region12: #{tpu_custom_call.1} parent=5 // pred_fallthru
        _
      %p143 = scmp.lt.s32.totalorder %s12, 4
      // Predicated region
      $region21: #{tpu_custom_call.1} parent=5 // pred_check
        %p144 = pneg %p143
      $region22: #{tpu_custom_call.1} parent=5 // pred_check_branch
        %146 = sbr.rel (%p144) target = $region24
      $region23: #{tpu_custom_call.1} parent=5 // pred_region
        // Predicated region
        $region25: #{tpu_custom_call.1} parent=23 // pred_check
          %p147 = pneg %p46
        $region26: #{tpu_custom_call.1} parent=23 // pred_check_branch
          %149 = sbr.rel (%p147) target = $region28
        $region27: #{tpu_custom_call.1} parent=23 // pred_region
          %s150 = sadd.s32 %s19, %s20
          %p151 = scmp.lt.s32.totalorder %s150, 3
          %s152 = scalar_select %p151, %s150, 3
          %s153 = smul.addr %s152, 54
          %s154 = smul.addr %s153, 4
          %s155 = scalar_lea.vmem %s0, %s154
          %s156 = sadd.s32 %s19, %s20
        $region28: #{tpu_custom_call.1} parent=23 // pred_fallthru
          _
      $region24: #{tpu_custom_call.1} parent=5 // pred_fallthru
        _
      %p157 = scmp.le.s32.totalorder 1, %s12
      %p158 = scmp.lt.s32.totalorder %s12, 5
      %p159 = pnand %p157, %p158
      %p160 = pneg %p159
      // Predicated region
      $region29: #{tpu_custom_call.1} parent=5 // pred_check
        _
      $region30: #{tpu_custom_call.1} parent=5 // pred_check_branch
        %162 = sbr.rel (%p159) target = $region32
      $region31: #{tpu_custom_call.1} parent=5 // pred_region
        %s163 = ssub.s32 %s12, 1
        %s164 = sadd.s32 %s21, %s22
        %p165 = scmp.lt.s32.totalorder %s164, 3
        %s166 = scalar_select %p165, %s164, 3
        %s167 = smul.addr %s166, 54
        %s168 = smul.addr %s167, 4
        %s169 = scalar_lea.vmem %s0, %s168
        %p170 = pneg %p52
        %p171 = pneg %p49
        %p172 = pneg %p73
        %p173 = pneg %p70
        %p174 = pneg %p94
        %p175 = pneg %p91
        %p176 = pneg %p122
        %p177 = pneg %p119
        %s178 = sand.u32 %s109, 1
        %s179 = scalar_lea.sflag [#allocation4], %s178
        %s180 = sand.u32 %s109, 1
        %s181 = smul.addr %s180, 128
        %s182 = scalar_lea.vmem [#allocation3], %s181
        %s183 = sadd.s32 %s21, %s22
        %p184 = scmp.lt.s32.totalorder %s183, 3
        %s185 = scalar_select %p184, %s183, 3
        %s186 = smul.addr %s185, 54
        %s187 = smul.addr %s186, 4
        %s188 = scalar_lea.vmem %s0, %s187
        %s189 = sadd.s32 %s21, %s22
        %s190 = smul.u32 16, %s22
        %v192 = vld [vmem:[%s188] sm:$0xf]
        %v193 = vld [vmem:[%s188 + $0x4] sm:$0xf]
        %v194 = vld [vmem:[%s188 + $0xc] sm:$0xf]
        %v195 = vld [vmem:[%s188 + $0x10] sm:$0xf]
        %v196 = vld [vmem:[%s188 + $0x18] sm:$0xf]
        %v197 = vld [vmem:[%s188 + $0x1c] sm:$0xf]
        %v198 = vld [vmem:[%s188 + $0x24] sm:$0xf]
        %v199 = vld [vmem:[%s188 + $0x28] sm:$0xf]
        %v200 = vld [vmem:[%s188 + $0x30] sm:$0xf]
        %v201 = vld [vmem:[%s188 + $0x34] sm:$0xf]
        %v202 = vld [vmem:[%s188 + $0x3c] sm:$0xf]
        %v203 = vld [vmem:[%s188 + $0x40] sm:$0xf]
        %v204 = vld [vmem:[%s188 + $0x48] sm:$0xf]
        %v205 = vld [vmem:[%s188 + $0x4c] sm:$0xf]
        %v206 = vld [vmem:[%s188 + $0x54] sm:$0xf]
        %v207 = vld [vmem:[%s188 + $0x58] sm:$0xf]
        %v208 = vld [vmem:[%s188 + $0x60] sm:$0xf]
        %v209 = vld [vmem:[%s188 + $0x64] sm:$0xf]
        %v210 = vld [vmem:[%s188 + $0x6c] sm:$0xf]
        %v211 = vld [vmem:[%s188 + $0x70] sm:$0xf]
        %v212 = vld [vmem:[%s188 + $0x78] sm:$0xf]
        %v213 = vld [vmem:[%s188 + $0x7c] sm:$0xf]
        %v214 = vld [vmem:[%s188 + $0x84] sm:$0xf]
        %v215 = vld [vmem:[%s188 + $0x88] sm:$0xf]
        %v216 = vld [vmem:[%s188 + $0x90] sm:$0xf]
        %v217 = vld [vmem:[%s188 + $0x94] sm:$0xf]
        %v218 = vld [vmem:[%s188 + $0x9c] sm:$0xf]
        %v219 = vld [vmem:[%s188 + $0xa0] sm:$0xf]
        %v220 = vld [vmem:[%s188 + $0xa8] sm:$0xf]
        %v221 = vld [vmem:[%s188 + $0xac] sm:$0xf]
        %v222 = vld [vmem:[%s188 + $0xb4] sm:$0xf]
        %v223 = vld [vmem:[%s188 + $0xb8] sm:$0xf]
        %v224 = vld [vmem:[%s1] sm:$0x3]
        %v257 = vunpack.c.l.b16 %v192
        %v258 = vunpack.c.l.b16 %v193
        %v259 = vunpack.c.l.b16 %v194
        %v260 = vunpack.c.l.b16 %v195
        %v261 = vunpack.c.l.b16 %v196
        %v262 = vunpack.c.l.b16 %v197
        %v263 = vunpack.c.l.b16 %v198
        %v264 = vunpack.c.l.b16 %v199
        %v265 = vunpack.c.l.b16 %v200
        %v266 = vunpack.c.l.b16 %v201
        %v267 = vunpack.c.l.b16 %v202
        %v268 = vunpack.c.l.b16 %v203
        %v269 = vunpack.c.l.b16 %v204
        %v270 = vunpack.c.l.b16 %v205
        %v271 = vunpack.c.l.b16 %v206
        %v272 = vunpack.c.l.b16 %v207
        %v273 = vunpack.c.l.b16 %v208
        %v274 = vunpack.c.l.b16 %v209
        %v275 = vunpack.c.l.b16 %v210
        %v276 = vunpack.c.l.b16 %v211
        %v277 = vunpack.c.l.b16 %v212
        %v278 = vunpack.c.l.b16 %v213
        %v279 = vunpack.c.l.b16 %v214
        %v280 = vunpack.c.l.b16 %v215
        %v281 = vunpack.c.l.b16 %v216
        %v282 = vunpack.c.l.b16 %v217
        %v283 = vunpack.c.l.b16 %v218
        %v284 = vunpack.c.l.b16 %v219
        %v285 = vunpack.c.l.b16 %v220
        %v286 = vunpack.c.l.b16 %v221
        %v287 = vunpack.c.l.b16 %v222
        %v288 = vunpack.c.l.b16 %v223
        %v289 = vpack.c.b16 %v258, %v257
        %v290 = vpack.c.b16 %v260, %v259
        %v291 = vpack.c.b16 %v262, %v261
        %v292 = vpack.c.b16 %v264, %v263
        %v293 = vpack.c.b16 %v266, %v265
        %v294 = vpack.c.b16 %v268, %v267
        %v295 = vpack.c.b16 %v270, %v269
        %v296 = vpack.c.b16 %v272, %v271
        %v297 = vpack.c.b16 %v274, %v273
        %v298 = vpack.c.b16 %v276, %v275
        %v299 = vpack.c.b16 %v278, %v277
        %v300 = vpack.c.b16 %v280, %v279
        %v301 = vpack.c.b16 %v282, %v281
        %v302 = vpack.c.b16 %v284, %v283
        %v303 = vpack.c.b16 %v286, %v285
        %v304 = vpack.c.b16 %v288, %v287
        %vm305 = vcmask 23552
        %v307 = vsel %vm305, %v289, 0
        %v310 = vsel %vm305, %v290, 0
        %v313 = vsel %vm305, %v291, 0
        %v316 = vsel %vm305, %v292, 0
        %v319 = vsel %vm305, %v293, 0
        %v322 = vsel %vm305, %v294, 0
        %v325 = vsel %vm305, %v295, 0
        %v328 = vsel %vm305, %v296, 0
        %v331 = vsel %vm305, %v297, 0
        %v334 = vsel %vm305, %v298, 0
        %v337 = vsel %vm305, %v299, 0
        %v340 = vsel %vm305, %v300, 0
        %v343 = vsel %vm305, %v301, 0
        %v346 = vsel %vm305, %v302, 0
        %v349 = vsel %vm305, %v303, 0
        %v352 = vsel %vm305, %v304, 0
        %vm354 = vcmask 1040384
        %vm355 = vcmask 1041408
        %v356 = vsel %vm354, 4294967295, 65535
        %v357 = vsel %vm355, %v356, 0
        %v359 = vand.u32 %v224, %v357
        %361 = vmatprep.subr.bf16.mxu0 0
        %362 = vmatpush1.bf16.msra.mxu0 0
        %363 = vmatprep.subr.bf16.mxu0 0
        %364 = vmatpush1.bf16.msra.mxu0 0
        %365 = vmatprep.subr.bf16.mxu0 0
        %366 = vmatpush1.bf16.msra.mxu0 0
        %367 = vmatprep.subr.bf16.mxu0 0
        %368 = vmatpush1.bf16.msra.mxu0 0
        %369 = vmatprep.subr.bf16.mxu0 0
        %370 = vmatpush1.bf16.msra.mxu0 0
        %371 = vmatprep.subr.bf16.mxu0 0
        %372 = vmatpush1.bf16.msra.mxu0 0
        %373 = vmatprep.subr.bf16.mxu0 0
        %374 = vmatpush1.bf16.msra.mxu0 0
        %375 = vmatprep.subr.bf16.mxu0 0
        %376 = vmatpush1.bf16.msra.mxu0 %v359
        %377 = vmatprep.subr.bf16.mxu0 0
        %378 = vmatpush2.bf16.msra.mxu0 0
        %379 = vmatprep.subr.bf16.mxu0 0
        %380 = vmatpush2.bf16.msra.mxu0 0
        %381 = vmatprep.subr.bf16.mxu0 0
        %382 = vmatpush2.bf16.msra.mxu0 0
        %383 = vmatprep.subr.bf16.mxu0 0
        %384 = vmatpush2.bf16.msra.mxu0 0
        %385 = vmatprep.subr.bf16.mxu0 0
        %386 = vmatpush2.bf16.msra.mxu0 0
        %387 = vmatprep.subr.bf16.mxu0 0
        %388 = vmatpush2.bf16.msra.mxu0 0
        %389 = vmatprep.subr.bf16.mxu0 0
        %390 = vmatpush2.bf16.msra.mxu0 0
        %391 = vmatprep.subr.bf16.mxu0 0
        %392 = vmatpush2.bf16.msra.mxu0 0
        %393 = vmatprep.mubr.bf16.mxu0 0
        %394 = vmatmul.mubr.bf16.gmra.mxu0 %v307
        %v395 = vpop.f32.mrf.mxu0
        %v396 = vadd.f32 0.0, %v395
        %v397 = vpop.f32.mrf.mxu0
        %v398 = vpop.f32.mrf.mxu0
        %v399 = vadd.f32 0.0, %v398
        %v400 = vpop.f32.mrf.mxu0
        %401 = vmatprep.mubr.bf16.mxu0 0
        %402 = vmatmul.mubr.bf16.gmra.mxu0 %v310
        %v403 = vpop.f32.mrf.mxu0
        %v404 = vadd.f32 0.0, %v403
        %v405 = vpop.f32.mrf.mxu0
        %v406 = vpop.f32.mrf.mxu0
        %v407 = vadd.f32 0.0, %v406
        %v408 = vpop.f32.mrf.mxu0
        %409 = vmatprep.mubr.bf16.mxu0 0
        %410 = vmatmul.mubr.bf16.gmra.mxu0 %v313
        %v411 = vpop.f32.mrf.mxu0
        %v412 = vadd.f32 0.0, %v411
        %v413 = vpop.f32.mrf.mxu0
        %v414 = vpop.f32.mrf.mxu0
        %v415 = vadd.f32 0.0, %v414
        %v416 = vpop.f32.mrf.mxu0
        %417 = vmatprep.mubr.bf16.mxu0 0
        %418 = vmatmul.mubr.bf16.gmra.mxu0 %v316
        %v419 = vpop.f32.mrf.mxu0
        %v420 = vadd.f32 0.0, %v419
        %v421 = vpop.f32.mrf.mxu0
        %v422 = vpop.f32.mrf.mxu0
        %v423 = vadd.f32 0.0, %v422
        %v424 = vpop.f32.mrf.mxu0
        %425 = vmatprep.mubr.bf16.mxu0 0
        %426 = vmatmul.mubr.bf16.gmra.mxu0 %v319
        %v427 = vpop.f32.mrf.mxu0
        %v428 = vadd.f32 0.0, %v427
        %v429 = vpop.f32.mrf.mxu0
        %v430 = vpop.f32.mrf.mxu0
        %v431 = vadd.f32 0.0, %v430
        %v432 = vpop.f32.mrf.mxu0
        %433 = vmatprep.mubr.bf16.mxu0 0
        %434 = vmatmul.mubr.bf16.gmra.mxu0 %v322
        %v435 = vpop.f32.mrf.mxu0
        %v436 = vadd.f32 0.0, %v435
        %v437 = vpop.f32.mrf.mxu0
        %v438 = vpop.f32.mrf.mxu0
        %v439 = vadd.f32 0.0, %v438
        %v440 = vpop.f32.mrf.mxu0
        %441 = vmatprep.mubr.bf16.mxu0 0
        %442 = vmatmul.mubr.bf16.gmra.mxu0 %v325
        %v443 = vpop.f32.mrf.mxu0
        %v444 = vadd.f32 0.0, %v443
        %v445 = vpop.f32.mrf.mxu0
        %v446 = vpop.f32.mrf.mxu0
        %v447 = vadd.f32 0.0, %v446
        %v448 = vpop.f32.mrf.mxu0
        %449 = vmatprep.mubr.bf16.mxu0 0
        %450 = vmatmul.mubr.bf16.gmra.mxu0 %v328
        %v451 = vpop.f32.mrf.mxu0
        %v452 = vadd.f32 0.0, %v451
        %v453 = vpop.f32.mrf.mxu0
        %v454 = vpop.f32.mrf.mxu0
        %v455 = vadd.f32 0.0, %v454
        %v456 = vpop.f32.mrf.mxu0
        %457 = vmatprep.mubr.bf16.mxu0 0
        %458 = vmatmul.mubr.bf16.gmra.mxu0 %v331
        %v459 = vpop.f32.mrf.mxu0
        %v460 = vadd.f32 0.0, %v459
        %v461 = vpop.f32.mrf.mxu0
        %v462 = vpop.f32.mrf.mxu0
        %v463 = vadd.f32 0.0, %v462
        %v464 = vpop.f32.mrf.mxu0
        %465 = vmatprep.mubr.bf16.mxu0 0
        %466 = vmatmul.mubr.bf16.gmra.mxu0 %v334
        %v467 = vpop.f32.mrf.mxu0
        %v468 = vadd.f32 0.0, %v467
        %v469 = vpop.f32.mrf.mxu0
        %v470 = vpop.f32.mrf.mxu0
        %v471 = vadd.f32 0.0, %v470
        %v472 = vpop.f32.mrf.mxu0
        %473 = vmatprep.mubr.bf16.mxu0 0
        %474 = vmatmul.mubr.bf16.gmra.mxu0 %v337
        %v475 = vpop.f32.mrf.mxu0
        %v476 = vadd.f32 0.0, %v475
        %v477 = vpop.f32.mrf.mxu0
        %v478 = vpop.f32.mrf.mxu0
        %v479 = vadd.f32 0.0, %v478
        %v480 = vpop.f32.mrf.mxu0
        %481 = vmatprep.mubr.bf16.mxu0 0
        %482 = vmatmul.mubr.bf16.gmra.mxu0 %v340
        %v483 = vpop.f32.mrf.mxu0
        %v484 = vadd.f32 0.0, %v483
        %v485 = vpop.f32.mrf.mxu0
        %v486 = vpop.f32.mrf.mxu0
        %v487 = vadd.f32 0.0, %v486
        %v488 = vpop.f32.mrf.mxu0
        %489 = vmatprep.mubr.bf16.mxu0 0
        %490 = vmatmul.mubr.bf16.gmra.mxu0 %v343
        %v491 = vpop.f32.mrf.mxu0
        %v492 = vadd.f32 0.0, %v491
        %v493 = vpop.f32.mrf.mxu0
        %v494 = vpop.f32.mrf.mxu0
        %v495 = vadd.f32 0.0, %v494
        %v496 = vpop.f32.mrf.mxu0
        %497 = vmatprep.mubr.bf16.mxu0 0
        %498 = vmatmul.mubr.bf16.gmra.mxu0 %v346
        %v499 = vpop.f32.mrf.mxu0
        %v500 = vadd.f32 0.0, %v499
        %v501 = vpop.f32.mrf.mxu0
        %v502 = vpop.f32.mrf.mxu0
        %v503 = vadd.f32 0.0, %v502
        %v504 = vpop.f32.mrf.mxu0
        %505 = vmatprep.mubr.bf16.mxu0 0
        %506 = vmatmul.mubr.bf16.gmra.mxu0 %v349
        %v507 = vpop.f32.mrf.mxu0
        %v508 = vadd.f32 0.0, %v507
        %v509 = vpop.f32.mrf.mxu0
        %v510 = vpop.f32.mrf.mxu0
        %v511 = vadd.f32 0.0, %v510
        %v512 = vpop.f32.mrf.mxu0
        %513 = vmatprep.mubr.bf16.mxu0 0
        %514 = vmatmul.mubr.bf16.gmra.mxu0 %v352
        %v515 = vpop.f32.mrf.mxu0
        %v516 = vadd.f32 0.0, %v515
        %v517 = vpop.f32.mrf.mxu0
        %v518 = vpop.f32.mrf.mxu0
        %v519 = vadd.f32 0.0, %v518
        %v520 = vpop.f32.mrf.mxu0
        %521 = vdwg.mxu0
        %vm522 = vcmask 523264
        %523 = vst.msk [vmem:[#allocation2] sm:$0xff] %vm522, %v396
        %524 = vst.msk [vmem:[#allocation2 + $0x8] sm:$0xff] %vm522, %v399
        %525 = vst.msk [vmem:[#allocation2 + $0x10] sm:$0xff] %vm522, %v404
        %526 = vst.msk [vmem:[#allocation2 + $0x18] sm:$0xff] %vm522, %v407
        %527 = vst.msk [vmem:[#allocation2 + $0x20] sm:$0xff] %vm522, %v412
        %528 = vst.msk [vmem:[#allocation2 + $0x28] sm:$0xff] %vm522, %v415
        %529 = vst.msk [vmem:[#allocation2 + $0x30] sm:$0xff] %vm522, %v420
        %530 = vst.msk [vmem:[#allocation2 + $0x38] sm:$0xff] %vm522, %v423
        %531 = vst.msk [vmem:[#allocation2 + $0x40] sm:$0xff] %vm522, %v428
        %532 = vst.msk [vmem:[#allocation2 + $0x48] sm:$0xff] %vm522, %v431
        %533 = vst.msk [vmem:[#allocation2 + $0x50] sm:$0xff] %vm522, %v436
        %534 = vst.msk [vmem:[#allocation2 + $0x58] sm:$0xff] %vm522, %v439
        %535 = vst.msk [vmem:[#allocation2 + $0x60] sm:$0xff] %vm522, %v444
        %536 = vst.msk [vmem:[#allocation2 + $0x68] sm:$0xff] %vm522, %v447
        %537 = vst.msk [vmem:[#allocation2 + $0x70] sm:$0xff] %vm522, %v452
        %538 = vst.msk [vmem:[#allocation2 + $0x78] sm:$0xff] %vm522, %v455
        %539 = vst.msk [vmem:[#allocation2 + $0x80] sm:$0xff] %vm522, %v460
        %540 = vst.msk [vmem:[#allocation2 + $0x88] sm:$0xff] %vm522, %v463
        %541 = vst.msk [vmem:[#allocation2 + $0x90] sm:$0xff] %vm522, %v468
        %542 = vst.msk [vmem:[#allocation2 + $0x98] sm:$0xff] %vm522, %v471
        %543 = vst.msk [vmem:[#allocation2 + $0xa0] sm:$0xff] %vm522, %v476
        %544 = vst.msk [vmem:[#allocation2 + $0xa8] sm:$0xff] %vm522, %v479
        %545 = vst.msk [vmem:[#allocation2 + $0xb0] sm:$0xff] %vm522, %v484
        %546 = vst.msk [vmem:[#allocation2 + $0xb8] sm:$0xff] %vm522, %v487
        %547 = vst.msk [vmem:[#allocation2 + $0xc0] sm:$0xff] %vm522, %v492
        %548 = vst.msk [vmem:[#allocation2 + $0xc8] sm:$0xff] %vm522, %v495
        %549 = vst.msk [vmem:[#allocation2 + $0xd0] sm:$0xff] %vm522, %v500
        %550 = vst.msk [vmem:[#allocation2 + $0xd8] sm:$0xff] %vm522, %v503
        %551 = vst.msk [vmem:[#allocation2 + $0xe0] sm:$0xff] %vm522, %v508
        %552 = vst.msk [vmem:[#allocation2 + $0xe8] sm:$0xff] %vm522, %v511
        %553 = vst.msk [vmem:[#allocation2 + $0xf0] sm:$0xff] %vm522, %v516
        %554 = vst.msk [vmem:[#allocation2 + $0xf8] sm:$0xff] %vm522, %v519
        %s555 = scalar_lea.vmem %s188, 12
        %v556 = vld [vmem:[%s555] sm:$0xf]
        %v557 = vld [vmem:[%s555 + $0x4] sm:$0xf]
        %v558 = vld [vmem:[%s555 + $0xc] sm:$0xf]
        %v559 = vld [vmem:[%s555 + $0x10] sm:$0xf]
        %v560 = vld [vmem:[%s555 + $0x18] sm:$0xf]
        %v561 = vld [vmem:[%s555 + $0x1c] sm:$0xf]
        %v562 = vld [vmem:[%s555 + $0x24] sm:$0xf]
        %v563 = vld [vmem:[%s555 + $0x28] sm:$0xf]
        %v564 = vld [vmem:[%s555 + $0x30] sm:$0xf]
        %v565 = vld [vmem:[%s555 + $0x34] sm:$0xf]
        %v566 = vld [vmem:[%s555 + $0x3c] sm:$0xf]
        %v567 = vld [vmem:[%s555 + $0x40] sm:$0xf]
        %v568 = vld [vmem:[%s555 + $0x48] sm:$0xf]
        %v569 = vld [vmem:[%s555 + $0x4c] sm:$0xf]
        %v570 = vld [vmem:[%s555 + $0x54] sm:$0xf]
        %v571 = vld [vmem:[%s555 + $0x58] sm:$0xf]
        %v572 = vld [vmem:[%s555 + $0x60] sm:$0xf]
        %v573 = vld [vmem:[%s555 + $0x64] sm:$0xf]
        %v574 = vld [vmem:[%s555 + $0x6c] sm:$0xf]
        %v575 = vld [vmem:[%s555 + $0x70] sm:$0xf]
        %v576 = vld [vmem:[%s555 + $0x78] sm:$0xf]
        %v577 = vld [vmem:[%s555 + $0x7c] sm:$0xf]
        %v578 = vld [vmem:[%s555 + $0x84] sm:$0xf]
        %v579 = vld [vmem:[%s555 + $0x88] sm:$0xf]
        %v580 = vld [vmem:[%s555 + $0x90] sm:$0xf]
        %v581 = vld [vmem:[%s555 + $0x94] sm:$0xf]
        %v582 = vld [vmem:[%s555 + $0x9c] sm:$0xf]
        %v583 = vld [vmem:[%s555 + $0xa0] sm:$0xf]
        %v584 = vld [vmem:[%s555 + $0xa8] sm:$0xf]
        %v585 = vld [vmem:[%s555 + $0xac] sm:$0xf]
        %v586 = vld [vmem:[%s555 + $0xb4] sm:$0xf]
        %v587 = vld [vmem:[%s555 + $0xb8] sm:$0xf]
        %s588 = scalar_lea.vmem %s1, 6
        %v589 = vld [vmem:[%s588] sm:$0x3]
        %v622 = vunpack.c.l.b16 %v556
        %v623 = vunpack.c.l.b16 %v557
        %v624 = vunpack.c.l.b16 %v558
        %v625 = vunpack.c.l.b16 %v559
        %v626 = vunpack.c.l.b16 %v560
        %v627 = vunpack.c.l.b16 %v561
        %v628 = vunpack.c.l.b16 %v562
        %v629 = vunpack.c.l.b16 %v563
        %v630 = vunpack.c.l.b16 %v564
        %v631 = vunpack.c.l.b16 %v565
        %v632 = vunpack.c.l.b16 %v566
        %v633 = vunpack.c.l.b16 %v567
        %v634 = vunpack.c.l.b16 %v568
        %v635 = vunpack.c.l.b16 %v569
        %v636 = vunpack.c.l.b16 %v570
        %v637 = vunpack.c.l.b16 %v571
        %v638 = vunpack.c.l.b16 %v572
        %v639 = vunpack.c.l.b16 %v573
        %v640 = vunpack.c.l.b16 %v574
        %v641 = vunpack.c.l.b16 %v575
        %v642 = vunpack.c.l.b16 %v576
        %v643 = vunpack.c.l.b16 %v577
        %v644 = vunpack.c.l.b16 %v578
        %v645 = vunpack.c.l.b16 %v579
        %v646 = vunpack.c.l.b16 %v580
        %v647 = vunpack.c.l.b16 %v581
        %v648 = vunpack.c.l.b16 %v582
        %v649 = vunpack.c.l.b16 %v583
        %v650 = vunpack.c.l.b16 %v584
        %v651 = vunpack.c.l.b16 %v585
        %v652 = vunpack.c.l.b16 %v586
        %v653 = vunpack.c.l.b16 %v587
        %v654 = vpack.c.b16 %v623, %v622
        %v655 = vpack.c.b16 %v625, %v624
        %v656 = vpack.c.b16 %v627, %v626
        %v657 = vpack.c.b16 %v629, %v628
        %v658 = vpack.c.b16 %v631, %v630
        %v659 = vpack.c.b16 %v633, %v632
        %v660 = vpack.c.b16 %v635, %v634
        %v661 = vpack.c.b16 %v637, %v636
        %v662 = vpack.c.b16 %v639, %v638
        %v663 = vpack.c.b16 %v641, %v640
        %v664 = vpack.c.b16 %v643, %v642
        %v665 = vpack.c.b16 %v645, %v644
        %v666 = vpack.c.b16 %v647, %v646
        %v667 = vpack.c.b16 %v649, %v648
        %v668 = vpack.c.b16 %v651, %v650
        %v669 = vpack.c.b16 %v653, %v652
        %v671 = vsel %vm305, %v654, 0
        %v674 = vsel %vm305, %v655, 0
        %v677 = vsel %vm305, %v656, 0
        %v680 = vsel %vm305, %v657, 0
        %v683 = vsel %vm305, %v658, 0
        %v686 = vsel %vm305, %v659, 0
        %v689 = vsel %vm305, %v660, 0
        %v692 = vsel %vm305, %v661, 0
        %v695 = vsel %vm305, %v662, 0
        %v698 = vsel %vm305, %v663, 0
        %v701 = vsel %vm305, %v664, 0
        %v704 = vsel %vm305, %v665, 0
        %v707 = vsel %vm305, %v666, 0
        %v710 = vsel %vm305, %v667, 0
        %v713 = vsel %vm305, %v668, 0
        %v716 = vsel %vm305, %v669, 0
        %v719 = vand.u32 %v589, %v357
        %721 = vmatprep.subr.bf16.mxu0 0
        %722 = vmatpush1.bf16.msra.mxu0 0
        %723 = vmatprep.subr.bf16.mxu0 0
        %724 = vmatpush1.bf16.msra.mxu0 0
        %725 = vmatprep.subr.bf16.mxu0 0
        %726 = vmatpush1.bf16.msra.mxu0 0
        %727 = vmatprep.subr.bf16.mxu0 0
        %728 = vmatpush1.bf16.msra.mxu0 0
        %729 = vmatprep.subr.bf16.mxu0 0
        %730 = vmatpush1.bf16.msra.mxu0 0
        %731 = vmatprep.subr.bf16.mxu0 0
        %732 = vmatpush1.bf16.msra.mxu0 0
        %733 = vmatprep.subr.bf16.mxu0 0
        %734 = vmatpush1.bf16.msra.mxu0 0
        %735 = vmatprep.subr.bf16.mxu0 0
        %736 = vmatpush1.bf16.msra.mxu0 %v719
        %737 = vmatprep.subr.bf16.mxu0 0
        %738 = vmatpush2.bf16.msra.mxu0 0
        %739 = vmatprep.subr.bf16.mxu0 0
        %740 = vmatpush2.bf16.msra.mxu0 0
        %741 = vmatprep.subr.bf16.mxu0 0
        %742 = vmatpush2.bf16.msra.mxu0 0
        %743 = vmatprep.subr.bf16.mxu0 0
        %744 = vmatpush2.bf16.msra.mxu0 0
        %745 = vmatprep.subr.bf16.mxu0 0
        %746 = vmatpush2.bf16.msra.mxu0 0
        %747 = vmatprep.subr.bf16.mxu0 0
        %748 = vmatpush2.bf16.msra.mxu0 0
        %749 = vmatprep.subr.bf16.mxu0 0
        %750 = vmatpush2.bf16.msra.mxu0 0
        %751 = vmatprep.subr.bf16.mxu0 0
        %752 = vmatpush2.bf16.msra.mxu0 0
        %753 = vmatprep.mubr.bf16.mxu0 0
        %754 = vmatmul.mubr.bf16.gmra.mxu0 %v671
        %v755 = vpop.f32.mrf.mxu0
        %v756 = vadd.f32 0.0, %v755
        %v757 = vpop.f32.mrf.mxu0
        %v758 = vpop.f32.mrf.mxu0
        %v759 = vadd.f32 0.0, %v758
        %v760 = vpop.f32.mrf.mxu0
        %761 = vmatprep.mubr.bf16.mxu0 0
        %762 = vmatmul.mubr.bf16.gmra.mxu0 %v674
        %v763 = vpop.f32.mrf.mxu0
        %v764 = vadd.f32 0.0, %v763
        %v765 = vpop.f32.mrf.mxu0
        %v766 = vpop.f32.mrf.mxu0
        %v767 = vadd.f32 0.0, %v766
        %v768 = vpop.f32.mrf.mxu0
        %769 = vmatprep.mubr.bf16.mxu0 0
        %770 = vmatmul.mubr.bf16.gmra.mxu0 %v677
        %v771 = vpop.f32.mrf.mxu0
        %v772 = vadd.f32 0.0, %v771
        %v773 = vpop.f32.mrf.mxu0
        %v774 = vpop.f32.mrf.mxu0
        %v775 = vadd.f32 0.0, %v774
        %v776 = vpop.f32.mrf.mxu0
        %777 = vmatprep.mubr.bf16.mxu0 0
        %778 = vmatmul.mubr.bf16.gmra.mxu0 %v680
        %v779 = vpop.f32.mrf.mxu0
        %v780 = vadd.f32 0.0, %v779
        %v781 = vpop.f32.mrf.mxu0
        %v782 = vpop.f32.mrf.mxu0
        %v783 = vadd.f32 0.0, %v782
        %v784 = vpop.f32.mrf.mxu0
        %785 = vmatprep.mubr.bf16.mxu0 0
        %786 = vmatmul.mubr.bf16.gmra.mxu0 %v683
        %v787 = vpop.f32.mrf.mxu0
        %v788 = vadd.f32 0.0, %v787
        %v789 = vpop.f32.mrf.mxu0
        %v790 = vpop.f32.mrf.mxu0
        %v791 = vadd.f32 0.0, %v790
        %v792 = vpop.f32.mrf.mxu0
        %793 = vmatprep.mubr.bf16.mxu0 0
        %794 = vmatmul.mubr.bf16.gmra.mxu0 %v686
        %v795 = vpop.f32.mrf.mxu0
        %v796 = vadd.f32 0.0, %v795
        %v797 = vpop.f32.mrf.mxu0
        %v798 = vpop.f32.mrf.mxu0
        %v799 = vadd.f32 0.0, %v798
        %v800 = vpop.f32.mrf.mxu0
        %801 = vmatprep.mubr.bf16.mxu0 0
        %802 = vmatmul.mubr.bf16.gmra.mxu0 %v689
        %v803 = vpop.f32.mrf.mxu0
        %v804 = vadd.f32 0.0, %v803
        %v805 = vpop.f32.mrf.mxu0
        %v806 = vpop.f32.mrf.mxu0
        %v807 = vadd.f32 0.0, %v806
        %v808 = vpop.f32.mrf.mxu0
        %809 = vmatprep.mubr.bf16.mxu0 0
        %810 = vmatmul.mubr.bf16.gmra.mxu0 %v692
        %v811 = vpop.f32.mrf.mxu0
        %v812 = vadd.f32 0.0, %v811
        %v813 = vpop.f32.mrf.mxu0
        %v814 = vpop.f32.mrf.mxu0
        %v815 = vadd.f32 0.0, %v814
        %v816 = vpop.f32.mrf.mxu0
        %817 = vmatprep.mubr.bf16.mxu0 0
        %818 = vmatmul.mubr.bf16.gmra.mxu0 %v695
        %v819 = vpop.f32.mrf.mxu0
        %v820 = vadd.f32 0.0, %v819
        %v821 = vpop.f32.mrf.mxu0
        %v822 = vpop.f32.mrf.mxu0
        %v823 = vadd.f32 0.0, %v822
        %v824 = vpop.f32.mrf.mxu0
        %825 = vmatprep.mubr.bf16.mxu0 0
        %826 = vmatmul.mubr.bf16.gmra.mxu0 %v698
        %v827 = vpop.f32.mrf.mxu0
        %v828 = vadd.f32 0.0, %v827
        %v829 = vpop.f32.mrf.mxu0
        %v830 = vpop.f32.mrf.mxu0
        %v831 = vadd.f32 0.0, %v830
        %v832 = vpop.f32.mrf.mxu0
        %833 = vmatprep.mubr.bf16.mxu0 0
        %834 = vmatmul.mubr.bf16.gmra.mxu0 %v701
        %v835 = vpop.f32.mrf.mxu0
        %v836 = vadd.f32 0.0, %v835
        %v837 = vpop.f32.mrf.mxu0
        %v838 = vpop.f32.mrf.mxu0
        %v839 = vadd.f32 0.0, %v838
        %v840 = vpop.f32.mrf.mxu0
        %841 = vmatprep.mubr.bf16.mxu0 0
        %842 = vmatmul.mubr.bf16.gmra.mxu0 %v704
        %v843 = vpop.f32.mrf.mxu0
        %v844 = vadd.f32 0.0, %v843
        %v845 = vpop.f32.mrf.mxu0
        %v846 = vpop.f32.mrf.mxu0
        %v847 = vadd.f32 0.0, %v846
        %v848 = vpop.f32.mrf.mxu0
        %849 = vmatprep.mubr.bf16.mxu0 0
        %850 = vmatmul.mubr.bf16.gmra.mxu0 %v707
        %v851 = vpop.f32.mrf.mxu0
        %v852 = vadd.f32 0.0, %v851
        %v853 = vpop.f32.mrf.mxu0
        %v854 = vpop.f32.mrf.mxu0
        %v855 = vadd.f32 0.0, %v854
        %v856 = vpop.f32.mrf.mxu0
        %857 = vmatprep.mubr.bf16.mxu0 0
        %858 = vmatmul.mubr.bf16.gmra.mxu0 %v710
        %v859 = vpop.f32.mrf.mxu0
        %v860 = vadd.f32 0.0, %v859
        %v861 = vpop.f32.mrf.mxu0
        %v862 = vpop.f32.mrf.mxu0
        %v863 = vadd.f32 0.0, %v862
        %v864 = vpop.f32.mrf.mxu0
        %865 = vmatprep.mubr.bf16.mxu0 0
        %866 = vmatmul.mubr.bf16.gmra.mxu0 %v713
        %v867 = vpop.f32.mrf.mxu0
        %v868 = vadd.f32 0.0, %v867
        %v869 = vpop.f32.mrf.mxu0
        %v870 = vpop.f32.mrf.mxu0
        %v871 = vadd.f32 0.0, %v870
        %v872 = vpop.f32.mrf.mxu0
        %873 = vmatprep.mubr.bf16.mxu0 0
        %874 = vmatmul.mubr.bf16.gmra.mxu0 %v716
        %v875 = vpop.f32.mrf.mxu0
        %v876 = vadd.f32 0.0, %v875
        %v877 = vpop.f32.mrf.mxu0
        %v878 = vpop.f32.mrf.mxu0
        %v879 = vadd.f32 0.0, %v878
        %v880 = vpop.f32.mrf.mxu0
        %881 = vdwg.mxu0
        %v882 = vld [vmem:[#allocation2] sm:$0xff]
        %v883 = vld [vmem:[#allocation2 + $0x8] sm:$0xff]
        %v884 = vld [vmem:[#allocation2 + $0x10] sm:$0xff]
        %v885 = vld [vmem:[#allocation2 + $0x18] sm:$0xff]
        %v886 = vld [vmem:[#allocation2 + $0x20] sm:$0xff]
        %v887 = vld [vmem:[#allocation2 + $0x28] sm:$0xff]
        %v888 = vld [vmem:[#allocation2 + $0x30] sm:$0xff]
        %v889 = vld [vmem:[#allocation2 + $0x38] sm:$0xff]
        %v890 = vld [vmem:[#allocation2 + $0x40] sm:$0xff]
        %v891 = vld [vmem:[#allocation2 + $0x48] sm:$0xff]
        %v892 = vld [vmem:[#allocation2 + $0x50] sm:$0xff]
        %v893 = vld [vmem:[#allocation2 + $0x58] sm:$0xff]
        %v894 = vld [vmem:[#allocation2 + $0x60] sm:$0xff]
        %v895 = vld [vmem:[#allocation2 + $0x68] sm:$0xff]
        %v896 = vld [vmem:[#allocation2 + $0x70] sm:$0xff]
        %v897 = vld [vmem:[#allocation2 + $0x78] sm:$0xff]
        %v898 = vld [vmem:[#allocation2 + $0x80] sm:$0xff]
        %v899 = vld [vmem:[#allocation2 + $0x88] sm:$0xff]
        %v900 = vld [vmem:[#allocation2 + $0x90] sm:$0xff]
        %v901 = vld [vmem:[#allocation2 + $0x98] sm:$0xff]
        %v902 = vld [vmem:[#allocation2 + $0xa0] sm:$0xff]
        %v903 = vld [vmem:[#allocation2 + $0xa8] sm:$0xff]
        %v904 = vld [vmem:[#allocation2 + $0xb0] sm:$0xff]
        %v905 = vld [vmem:[#allocation2 + $0xb8] sm:$0xff]
        %v906 = vld [vmem:[#allocation2 + $0xc0] sm:$0xff]
        %v907 = vld [vmem:[#allocation2 + $0xc8] sm:$0xff]
        %v908 = vld [vmem:[#allocation2 + $0xd0] sm:$0xff]
        %v909 = vld [vmem:[#allocation2 + $0xd8] sm:$0xff]
        %v910 = vld [vmem:[#allocation2 + $0xe0] sm:$0xff]
        %v911 = vld [vmem:[#allocation2 + $0xe8] sm:$0xff]
        %v912 = vld [vmem:[#allocation2 + $0xf0] sm:$0xff]
        %v913 = vld [vmem:[#allocation2 + $0xf8] sm:$0xff]
        %v914 = vadd.f32 %v882, %v756
        %v915 = vadd.f32 %v883, %v759
        %v916 = vadd.f32 %v884, %v764
        %v917 = vadd.f32 %v885, %v767
        %v918 = vadd.f32 %v886, %v772
        %v919 = vadd.f32 %v887, %v775
        %v920 = vadd.f32 %v888, %v780
        %v921 = vadd.f32 %v889, %v783
        %v922 = vadd.f32 %v890, %v788
        %v923 = vadd.f32 %v891, %v791
        %v924 = vadd.f32 %v892, %v796
        %v925 = vadd.f32 %v893, %v799
        %v926 = vadd.f32 %v894, %v804
        %v927 = vadd.f32 %v895, %v807
        %v928 = vadd.f32 %v896, %v812
        %v929 = vadd.f32 %v897, %v815
        %v930 = vadd.f32 %v898, %v820
        %v931 = vadd.f32 %v899, %v823
        %v932 = vadd.f32 %v900, %v828
        %v933 = vadd.f32 %v901, %v831
        %v934 = vadd.f32 %v902, %v836
        %v935 = vadd.f32 %v903, %v839
        %v936 = vadd.f32 %v904, %v844
        %v937 = vadd.f32 %v905, %v847
        %v938 = vadd.f32 %v906, %v852
        %v939 = vadd.f32 %v907, %v855
        %v940 = vadd.f32 %v908, %v860
        %v941 = vadd.f32 %v909, %v863
        %v942 = vadd.f32 %v910, %v868
        %v943 = vadd.f32 %v911, %v871
        %v944 = vadd.f32 %v912, %v876
        %v945 = vadd.f32 %v913, %v879
        %946 = vst.msk [vmem:[#allocation2] sm:$0xff] %vm522, %v914
        %947 = vst.msk [vmem:[#allocation2 + $0x8] sm:$0xff] %vm522, %v915
        %948 = vst.msk [vmem:[#allocation2 + $0x10] sm:$0xff] %vm522, %v916
        %949 = vst.msk [vmem:[#allocation2 + $0x18] sm:$0xff] %vm522, %v917
        %950 = vst.msk [vmem:[#allocation2 + $0x20] sm:$0xff] %vm522, %v918
        %951 = vst.msk [vmem:[#allocation2 + $0x28] sm:$0xff] %vm522, %v919
        %952 = vst.msk [vmem:[#allocation2 + $0x30] sm:$0xff] %vm522, %v920
        %953 = vst.msk [vmem:[#allocation2 + $0x38] sm:$0xff] %vm522, %v921
        %954 = vst.msk [vmem:[#allocation2 + $0x40] sm:$0xff] %vm522, %v922
        %955 = vst.msk [vmem:[#allocation2 + $0x48] sm:$0xff] %vm522, %v923
        %956 = vst.msk [vmem:[#allocation2 + $0x50] sm:$0xff] %vm522, %v924
        %957 = vst.msk [vmem:[#allocation2 + $0x58] sm:$0xff] %vm522, %v925
        %958 = vst.msk [vmem:[#allocation2 + $0x60] sm:$0xff] %vm522, %v926
        %959 = vst.msk [vmem:[#allocation2 + $0x68] sm:$0xff] %vm522, %v927
        %960 = vst.msk [vmem:[#allocation2 + $0x70] sm:$0xff] %vm522, %v928
        %961 = vst.msk [vmem:[#allocation2 + $0x78] sm:$0xff] %vm522, %v929
        %962 = vst.msk [vmem:[#allocation2 + $0x80] sm:$0xff] %vm522, %v930
        %963 = vst.msk [vmem:[#allocation2 + $0x88] sm:$0xff] %vm522, %v931
        %964 = vst.msk [vmem:[#allocation2 + $0x90] sm:$0xff] %vm522, %v932
        %965 = vst.msk [vmem:[#allocation2 + $0x98] sm:$0xff] %vm522, %v933
        %966 = vst.msk [vmem:[#allocation2 + $0xa0] sm:$0xff] %vm522, %v934
        %967 = vst.msk [vmem:[#allocation2 + $0xa8] sm:$0xff] %vm522, %v935
        %968 = vst.msk [vmem:[#allocation2 + $0xb0] sm:$0xff] %vm522, %v936
        %969 = vst.msk [vmem:[#allocation2 + $0xb8] sm:$0xff] %vm522, %v937
        %970 = vst.msk [vmem:[#allocation2 + $0xc0] sm:$0xff] %vm522, %v938
        %971 = vst.msk [vmem:[#allocation2 + $0xc8] sm:$0xff] %vm522, %v939
        %972 = vst.msk [vmem:[#allocation2 + $0xd0] sm:$0xff] %vm522, %v940
        %973 = vst.msk [vmem:[#allocation2 + $0xd8] sm:$0xff] %vm522, %v941
        %974 = vst.msk [vmem:[#allocation2 + $0xe0] sm:$0xff] %vm522, %v942
        %975 = vst.msk [vmem:[#allocation2 + $0xe8] sm:$0xff] %vm522, %v943
        %976 = vst.msk [vmem:[#allocation2 + $0xf0] sm:$0xff] %vm522, %v944
        %977 = vst.msk [vmem:[#allocation2 + $0xf8] sm:$0xff] %vm522, %v945
        %s978 = scalar_lea.vmem %s188, 24
        %v979 = vld [vmem:[%s978] sm:$0xf]
        %v980 = vld [vmem:[%s978 + $0x4] sm:$0xf]
        %v981 = vld [vmem:[%s978 + $0xc] sm:$0xf]
        %v982 = vld [vmem:[%s978 + $0x10] sm:$0xf]
        %v983 = vld [vmem:[%s978 + $0x18] sm:$0xf]
        %v984 = vld [vmem:[%s978 + $0x1c] sm:$0xf]
        %v985 = vld [vmem:[%s978 + $0x24] sm:$0xf]
        %v986 = vld [vmem:[%s978 + $0x28] sm:$0xf]
        %v987 = vld [vmem:[%s978 + $0x30] sm:$0xf]
        %v988 = vld [vmem:[%s978 + $0x34] sm:$0xf]
        %v989 = vld [vmem:[%s978 + $0x3c] sm:$0xf]
        %v990 = vld [vmem:[%s978 + $0x40] sm:$0xf]
        %v991 = vld [vmem:[%s978 + $0x48] sm:$0xf]
        %v992 = vld [vmem:[%s978 + $0x4c] sm:$0xf]
        %v993 = vld [vmem:[%s978 + $0x54] sm:$0xf]
        %v994 = vld [vmem:[%s978 + $0x58] sm:$0xf]
        %v995 = vld [vmem:[%s978 + $0x60] sm:$0xf]
        %v996 = vld [vmem:[%s978 + $0x64] sm:$0xf]
        %v997 = vld [vmem:[%s978 + $0x6c] sm:$0xf]
        %v998 = vld [vmem:[%s978 + $0x70] sm:$0xf]
        %v999 = vld [vmem:[%s978 + $0x78] sm:$0xf]
        %v1000 = vld [vmem:[%s978 + $0x7c] sm:$0xf]
        %v1001 = vld [vmem:[%s978 + $0x84] sm:$0xf]
        %v1002 = vld [vmem:[%s978 + $0x88] sm:$0xf]
        %v1003 = vld [vmem:[%s978 + $0x90] sm:$0xf]
        %v1004 = vld [vmem:[%s978 + $0x94] sm:$0xf]
        %v1005 = vld [vmem:[%s978 + $0x9c] sm:$0xf]
        %v1006 = vld [vmem:[%s978 + $0xa0] sm:$0xf]
        %v1007 = vld [vmem:[%s978 + $0xa8] sm:$0xf]
        %v1008 = vld [vmem:[%s978 + $0xac] sm:$0xf]
        %v1009 = vld [vmem:[%s978 + $0xb4] sm:$0xf]
        %v1010 = vld [vmem:[%s978 + $0xb8] sm:$0xf]
        %s1011 = scalar_lea.vmem %s1, 12
        %v1012 = vld [vmem:[%s1011] sm:$0x3]
        %v1045 = vunpack.c.l.b16 %v979
        %v1046 = vunpack.c.l.b16 %v980
        %v1047 = vunpack.c.l.b16 %v981
        %v1048 = vunpack.c.l.b16 %v982
        %v1049 = vunpack.c.l.b16 %v983
        %v1050 = vunpack.c.l.b16 %v984
        %v1051 = vunpack.c.l.b16 %v985
        %v1052 = vunpack.c.l.b16 %v986
        %v1053 = vunpack.c.l.b16 %v987
        %v1054 = vunpack.c.l.b16 %v988
        %v1055 = vunpack.c.l.b16 %v989
        %v1056 = vunpack.c.l.b16 %v990
        %v1057 = vunpack.c.l.b16 %v991
        %v1058 = vunpack.c.l.b16 %v992
        %v1059 = vunpack.c.l.b16 %v993
        %v1060 = vunpack.c.l.b16 %v994
        %v1061 = vunpack.c.l.b16 %v995
        %v1062 = vunpack.c.l.b16 %v996
        %v1063 = vunpack.c.l.b16 %v997
        %v1064 = vunpack.c.l.b16 %v998
        %v1065 = vunpack.c.l.b16 %v999
        %v1066 = vunpack.c.l.b16 %v1000
        %v1067 = vunpack.c.l.b16 %v1001
        %v1068 = vunpack.c.l.b16 %v1002
        %v1069 = vunpack.c.l.b16 %v1003
        %v1070 = vunpack.c.l.b16 %v1004
        %v1071 = vunpack.c.l.b16 %v1005
        %v1072 = vunpack.c.l.b16 %v1006
        %v1073 = vunpack.c.l.b16 %v1007
        %v1074 = vunpack.c.l.b16 %v1008
        %v1075 = vunpack.c.l.b16 %v1009
        %v1076 = vunpack.c.l.b16 %v1010
        %v1077 = vpack.c.b16 %v1046, %v1045
        %v1078 = vpack.c.b16 %v1048, %v1047
        %v1079 = vpack.c.b16 %v1050, %v1049
        %v1080 = vpack.c.b16 %v1052, %v1051
        %v1081 = vpack.c.b16 %v1054, %v1053
        %v1082 = vpack.c.b16 %v1056, %v1055
        %v1083 = vpack.c.b16 %v1058, %v1057
        %v1084 = vpack.c.b16 %v1060, %v1059
        %v1085 = vpack.c.b16 %v1062, %v1061
        %v1086 = vpack.c.b16 %v1064, %v1063
        %v1087 = vpack.c.b16 %v1066, %v1065
        %v1088 = vpack.c.b16 %v1068, %v1067
        %v1089 = vpack.c.b16 %v1070, %v1069
        %v1090 = vpack.c.b16 %v1072, %v1071
        %v1091 = vpack.c.b16 %v1074, %v1073
        %v1092 = vpack.c.b16 %v1076, %v1075
        %v1094 = vsel %vm305, %v1077, 0
        %v1097 = vsel %vm305, %v1078, 0
        %v1100 = vsel %vm305, %v1079, 0
        %v1103 = vsel %vm305, %v1080, 0
        %v1106 = vsel %vm305, %v1081, 0
        %v1109 = vsel %vm305, %v1082, 0
        %v1112 = vsel %vm305, %v1083, 0
        %v1115 = vsel %vm305, %v1084, 0
        %v1118 = vsel %vm305, %v1085, 0
        %v1121 = vsel %vm305, %v1086, 0
        %v1124 = vsel %vm305, %v1087, 0
        %v1127 = vsel %vm305, %v1088, 0
        %v1130 = vsel %vm305, %v1089, 0
        %v1133 = vsel %vm305, %v1090, 0
        %v1136 = vsel %vm305, %v1091, 0
        %v1139 = vsel %vm305, %v1092, 0
        %v1142 = vand.u32 %v1012, %v357
        %1144 = vmatprep.subr.bf16.mxu0 0
        %1145 = vmatpush1.bf16.msra.mxu0 0
        %1146 = vmatprep.subr.bf16.mxu0 0
        %1147 = vmatpush1.bf16.msra.mxu0 0
        %1148 = vmatprep.subr.bf16.mxu0 0
        %1149 = vmatpush1.bf16.msra.mxu0 0
        %1150 = vmatprep.subr.bf16.mxu0 0
        %1151 = vmatpush1.bf16.msra.mxu0 0
        %1152 = vmatprep.subr.bf16.mxu0 0
        %1153 = vmatpush1.bf16.msra.mxu0 0
        %1154 = vmatprep.subr.bf16.mxu0 0
        %1155 = vmatpush1.bf16.msra.mxu0 0
        %1156 = vmatprep.subr.bf16.mxu0 0
        %1157 = vmatpush1.bf16.msra.mxu0 0
        %1158 = vmatprep.subr.bf16.mxu0 0
        %1159 = vmatpush1.bf16.msra.mxu0 %v1142
        %1160 = vmatprep.subr.bf16.mxu0 0
        %1161 = vmatpush2.bf16.msra.mxu0 0
        %1162 = vmatprep.subr.bf16.mxu0 0
        %1163 = vmatpush2.bf16.msra.mxu0 0
        %1164 = vmatprep.subr.bf16.mxu0 0
        %1165 = vmatpush2.bf16.msra.mxu0 0
        %1166 = vmatprep.subr.bf16.mxu0 0
        %1167 = vmatpush2.bf16.msra.mxu0 0
        %1168 = vmatprep.subr.bf16.mxu0 0
        %1169 = vmatpush2.bf16.msra.mxu0 0
        %1170 = vmatprep.subr.bf16.mxu0 0
        %1171 = vmatpush2.bf16.msra.mxu0 0
        %1172 = vmatprep.subr.bf16.mxu0 0
        %1173 = vmatpush2.bf16.msra.mxu0 0
        %1174 = vmatprep.subr.bf16.mxu0 0
        %1175 = vmatpush2.bf16.msra.mxu0 0
        %1176 = vmatprep.mubr.bf16.mxu0 0
        %1177 = vmatmul.mubr.bf16.gmra.mxu0 %v1094
        %v1178 = vpop.f32.mrf.mxu0
        %v1179 = vadd.f32 0.0, %v1178
        %v1180 = vpop.f32.mrf.mxu0
        %v1181 = vpop.f32.mrf.mxu0
        %v1182 = vadd.f32 0.0, %v1181
        %v1183 = vpop.f32.mrf.mxu0
        %1184 = vmatprep.mubr.bf16.mxu0 0
        %1185 = vmatmul.mubr.bf16.gmra.mxu0 %v1097
        %v1186 = vpop.f32.mrf.mxu0
        %v1187 = vadd.f32 0.0, %v1186
        %v1188 = vpop.f32.mrf.mxu0
        %v1189 = vpop.f32.mrf.mxu0
        %v1190 = vadd.f32 0.0, %v1189
        %v1191 = vpop.f32.mrf.mxu0
        %1192 = vmatprep.mubr.bf16.mxu0 0
        %1193 = vmatmul.mubr.bf16.gmra.mxu0 %v1100
        %v1194 = vpop.f32.mrf.mxu0
        %v1195 = vadd.f32 0.0, %v1194
        %v1196 = vpop.f32.mrf.mxu0
        %v1197 = vpop.f32.mrf.mxu0
        %v1198 = vadd.f32 0.0, %v1197
        %v1199 = vpop.f32.mrf.mxu0
        %1200 = vmatprep.mubr.bf16.mxu0 0
        %1201 = vmatmul.mubr.bf16.gmra.mxu0 %v1103
        %v1202 = vpop.f32.mrf.mxu0
        %v1203 = vadd.f32 0.0, %v1202
        %v1204 = vpop.f32.mrf.mxu0
        %v1205 = vpop.f32.mrf.mxu0
        %v1206 = vadd.f32 0.0, %v1205
        %v1207 = vpop.f32.mrf.mxu0
        %1208 = vmatprep.mubr.bf16.mxu0 0
        %1209 = vmatmul.mubr.bf16.gmra.mxu0 %v1106
        %v1210 = vpop.f32.mrf.mxu0
        %v1211 = vadd.f32 0.0, %v1210
        %v1212 = vpop.f32.mrf.mxu0
        %v1213 = vpop.f32.mrf.mxu0
        %v1214 = vadd.f32 0.0, %v1213
        %v1215 = vpop.f32.mrf.mxu0
        %1216 = vmatprep.mubr.bf16.mxu0 0
        %1217 = vmatmul.mubr.bf16.gmra.mxu0 %v1109
        %v1218 = vpop.f32.mrf.mxu0
        %v1219 = vadd.f32 0.0, %v1218
        %v1220 = vpop.f32.mrf.mxu0
        %v1221 = vpop.f32.mrf.mxu0
        %v1222 = vadd.f32 0.0, %v1221
        %v1223 = vpop.f32.mrf.mxu0
        %1224 = vmatprep.mubr.bf16.mxu0 0
        %1225 = vmatmul.mubr.bf16.gmra.mxu0 %v1112
        %v1226 = vpop.f32.mrf.mxu0
        %v1227 = vadd.f32 0.0, %v1226
        %v1228 = vpop.f32.mrf.mxu0
        %v1229 = vpop.f32.mrf.mxu0
        %v1230 = vadd.f32 0.0, %v1229
        %v1231 = vpop.f32.mrf.mxu0
        %1232 = vmatprep.mubr.bf16.mxu0 0
        %1233 = vmatmul.mubr.bf16.gmra.mxu0 %v1115
        %v1234 = vpop.f32.mrf.mxu0
        %v1235 = vadd.f32 0.0, %v1234
        %v1236 = vpop.f32.mrf.mxu0
        %v1237 = vpop.f32.mrf.mxu0
        %v1238 = vadd.f32 0.0, %v1237
        %v1239 = vpop.f32.mrf.mxu0
        %1240 = vmatprep.mubr.bf16.mxu0 0
        %1241 = vmatmul.mubr.bf16.gmra.mxu0 %v1118
        %v1242 = vpop.f32.mrf.mxu0
        %v1243 = vadd.f32 0.0, %v1242
        %v1244 = vpop.f32.mrf.mxu0
        %v1245 = vpop.f32.mrf.mxu0
        %v1246 = vadd.f32 0.0, %v1245
        %v1247 = vpop.f32.mrf.mxu0
        %1248 = vmatprep.mubr.bf16.mxu0 0
        %1249 = vmatmul.mubr.bf16.gmra.mxu0 %v1121
        %v1250 = vpop.f32.mrf.mxu0
        %v1251 = vadd.f32 0.0, %v1250
        %v1252 = vpop.f32.mrf.mxu0
        %v1253 = vpop.f32.mrf.mxu0
        %v1254 = vadd.f32 0.0, %v1253
        %v1255 = vpop.f32.mrf.mxu0
        %1256 = vmatprep.mubr.bf16.mxu0 0
        %1257 = vmatmul.mubr.bf16.gmra.mxu0 %v1124
        %v1258 = vpop.f32.mrf.mxu0
        %v1259 = vadd.f32 0.0, %v1258
        %v1260 = vpop.f32.mrf.mxu0
        %v1261 = vpop.f32.mrf.mxu0
        %v1262 = vadd.f32 0.0, %v1261
        %v1263 = vpop.f32.mrf.mxu0
        %1264 = vmatprep.mubr.bf16.mxu0 0
        %1265 = vmatmul.mubr.bf16.gmra.mxu0 %v1127
        %v1266 = vpop.f32.mrf.mxu0
        %v1267 = vadd.f32 0.0, %v1266
        %v1268 = vpop.f32.mrf.mxu0
        %v1269 = vpop.f32.mrf.mxu0
        %v1270 = vadd.f32 0.0, %v1269
        %v1271 = vpop.f32.mrf.mxu0
        %1272 = vmatprep.mubr.bf16.mxu0 0
        %1273 = vmatmul.mubr.bf16.gmra.mxu0 %v1130
        %v1274 = vpop.f32.mrf.mxu0
        %v1275 = vadd.f32 0.0, %v1274
        %v1276 = vpop.f32.mrf.mxu0
        %v1277 = vpop.f32.mrf.mxu0
        %v1278 = vadd.f32 0.0, %v1277
        %v1279 = vpop.f32.mrf.mxu0
        %1280 = vmatprep.mubr.bf16.mxu0 0
        %1281 = vmatmul.mubr.bf16.gmra.mxu0 %v1133
        %v1282 = vpop.f32.mrf.mxu0
        %v1283 = vadd.f32 0.0, %v1282
        %v1284 = vpop.f32.mrf.mxu0
        %v1285 = vpop.f32.mrf.mxu0
        %v1286 = vadd.f32 0.0, %v1285
        %v1287 = vpop.f32.mrf.mxu0
        %1288 = vmatprep.mubr.bf16.mxu0 0
        %1289 = vmatmul.mubr.bf16.gmra.mxu0 %v1136
        %v1290 = vpop.f32.mrf.mxu0
        %v1291 = vadd.f32 0.0, %v1290
        %v1292 = vpop.f32.mrf.mxu0
        %v1293 = vpop.f32.mrf.mxu0
        %v1294 = vadd.f32 0.0, %v1293
        %v1295 = vpop.f32.mrf.mxu0
        %1296 = vmatprep.mubr.bf16.mxu0 0
        %1297 = vmatmul.mubr.bf16.gmra.mxu0 %v1139
        %v1298 = vpop.f32.mrf.mxu0
        %v1299 = vadd.f32 0.0, %v1298
        %v1300 = vpop.f32.mrf.mxu0
        %v1301 = vpop.f32.mrf.mxu0
        %v1302 = vadd.f32 0.0, %v1301
        %v1303 = vpop.f32.mrf.mxu0
        %1304 = vdwg.mxu0
        %v1305 = vld [vmem:[#allocation2] sm:$0xff]
        %v1306 = vld [vmem:[#allocation2 + $0x8] sm:$0xff]
        %v1307 = vld [vmem:[#allocation2 + $0x10] sm:$0xff]
        %v1308 = vld [vmem:[#allocation2 + $0x18] sm:$0xff]
        %v1309 = vld [vmem:[#allocation2 + $0x20] sm:$0xff]
        %v1310 = vld [vmem:[#allocation2 + $0x28] sm:$0xff]
        %v1311 = vld [vmem:[#allocation2 + $0x30] sm:$0xff]
        %v1312 = vld [vmem:[#allocation2 + $0x38] sm:$0xff]
        %v1313 = vld [vmem:[#allocation2 + $0x40] sm:$0xff]
        %v1314 = vld [vmem:[#allocation2 + $0x48] sm:$0xff]
        %v1315 = vld [vmem:[#allocation2 + $0x50] sm:$0xff]
        %v1316 = vld [vmem:[#allocation2 + $0x58] sm:$0xff]
        %v1317 = vld [vmem:[#allocation2 + $0x60] sm:$0xff]
        %v1318 = vld [vmem:[#allocation2 + $0x68] sm:$0xff]
        %v1319 = vld [vmem:[#allocation2 + $0x70] sm:$0xff]
        %v1320 = vld [vmem:[#allocation2 + $0x78] sm:$0xff]
        %v1321 = vld [vmem:[#allocation2 + $0x80] sm:$0xff]
        %v1322 = vld [vmem:[#allocation2 + $0x88] sm:$0xff]
        %v1323 = vld [vmem:[#allocation2 + $0x90] sm:$0xff]
        %v1324 = vld [vmem:[#allocation2 + $0x98] sm:$0xff]
        %v1325 = vld [vmem:[#allocation2 + $0xa0] sm:$0xff]
        %v1326 = vld [vmem:[#allocation2 + $0xa8] sm:$0xff]
        %v1327 = vld [vmem:[#allocation2 + $0xb0] sm:$0xff]
        %v1328 = vld [vmem:[#allocation2 + $0xb8] sm:$0xff]
        %v1329 = vld [vmem:[#allocation2 + $0xc0] sm:$0xff]
        %v1330 = vld [vmem:[#allocation2 + $0xc8] sm:$0xff]
        %v1331 = vld [vmem:[#allocation2 + $0xd0] sm:$0xff]
        %v1332 = vld [vmem:[#allocation2 + $0xd8] sm:$0xff]
        %v1333 = vld [vmem:[#allocation2 + $0xe0] sm:$0xff]
        %v1334 = vld [vmem:[#allocation2 + $0xe8] sm:$0xff]
        %v1335 = vld [vmem:[#allocation2 + $0xf0] sm:$0xff]
        %v1336 = vld [vmem:[#allocation2 + $0xf8] sm:$0xff]
        %v1337 = vadd.f32 %v1305, %v1179
        %v1338 = vadd.f32 %v1306, %v1182
        %v1339 = vadd.f32 %v1307, %v1187
        %v1340 = vadd.f32 %v1308, %v1190
        %v1341 = vadd.f32 %v1309, %v1195
        %v1342 = vadd.f32 %v1310, %v1198
        %v1343 = vadd.f32 %v1311, %v1203
        %v1344 = vadd.f32 %v1312, %v1206
        %v1345 = vadd.f32 %v1313, %v1211
        %v1346 = vadd.f32 %v1314, %v1214
        %v1347 = vadd.f32 %v1315, %v1219
        %v1348 = vadd.f32 %v1316, %v1222
        %v1349 = vadd.f32 %v1317, %v1227
        %v1350 = vadd.f32 %v1318, %v1230
        %v1351 = vadd.f32 %v1319, %v1235
        %v1352 = vadd.f32 %v1320, %v1238
        %v1353 = vadd.f32 %v1321, %v1243
        %v1354 = vadd.f32 %v1322, %v1246
        %v1355 = vadd.f32 %v1323, %v1251
        %v1356 = vadd.f32 %v1324, %v1254
        %v1357 = vadd.f32 %v1325, %v1259
        %v1358 = vadd.f32 %v1326, %v1262
        %v1359 = vadd.f32 %v1327, %v1267
        %v1360 = vadd.f32 %v1328, %v1270
        %v1361 = vadd.f32 %v1329, %v1275
        %v1362 = vadd.f32 %v1330, %v1278
        %v1363 = vadd.f32 %v1331, %v1283
        %v1364 = vadd.f32 %v1332, %v1286
        %v1365 = vadd.f32 %v1333, %v1291
        %v1366 = vadd.f32 %v1334, %v1294
        %v1367 = vadd.f32 %v1335, %v1299
        %v1368 = vadd.f32 %v1336, %v1302
        %1369 = vst.msk [vmem:[#allocation2] sm:$0xff] %vm522, %v1337
        %1370 = vst.msk [vmem:[#allocation2 + $0x8] sm:$0xff] %vm522, %v1338
        %1371 = vst.msk [vmem:[#allocation2 + $0x10] sm:$0xff] %vm522, %v1339
        %1372 = vst.msk [vmem:[#allocation2 + $0x18] sm:$0xff] %vm522, %v1340
        %1373 = vst.msk [vmem:[#allocation2 + $0x20] sm:$0xff] %vm522, %v1341
        %1374 = vst.msk [vmem:[#allocation2 + $0x28] sm:$0xff] %vm522, %v1342
        %1375 = vst.msk [vmem:[#allocation2 + $0x30] sm:$0xff] %vm522, %v1343
        %1376 = vst.msk [vmem:[#allocation2 + $0x38] sm:$0xff] %vm522, %v1344
        %1377 = vst.msk [vmem:[#allocation2 + $0x40] sm:$0xff] %vm522, %v1345
        %1378 = vst.msk [vmem:[#allocation2 + $0x48] sm:$0xff] %vm522, %v1346
        %1379 = vst.msk [vmem:[#allocation2 + $0x50] sm:$0xff] %vm522, %v1347
        %1380 = vst.msk [vmem:[#allocation2 + $0x58] sm:$0xff] %vm522, %v1348
        %1381 = vst.msk [vmem:[#allocation2 + $0x60] sm:$0xff] %vm522, %v1349
        %1382 = vst.msk [vmem:[#allocation2 + $0x68] sm:$0xff] %vm522, %v1350
        %1383 = vst.msk [vmem:[#allocation2 + $0x70] sm:$0xff] %vm522, %v1351
        %1384 = vst.msk [vmem:[#allocation2 + $0x78] sm:$0xff] %vm522, %v1352
        %1385 = vst.msk [vmem:[#allocation2 + $0x80] sm:$0xff] %vm522, %v1353
        %1386 = vst.msk [vmem:[#allocation2 + $0x88] sm:$0xff] %vm522, %v1354
        %1387 = vst.msk [vmem:[#allocation2 + $0x90] sm:$0xff] %vm522, %v1355
        %1388 = vst.msk [vmem:[#allocation2 + $0x98] sm:$0xff] %vm522, %v1356
        %1389 = vst.msk [vmem:[#allocation2 + $0xa0] sm:$0xff] %vm522, %v1357
        %1390 = vst.msk [vmem:[#allocation2 + $0xa8] sm:$0xff] %vm522, %v1358
        %1391 = vst.msk [vmem:[#allocation2 + $0xb0] sm:$0xff] %vm522, %v1359
        %1392 = vst.msk [vmem:[#allocation2 + $0xb8] sm:$0xff] %vm522, %v1360
        %1393 = vst.msk [vmem:[#allocation2 + $0xc0] sm:$0xff] %vm522, %v1361
        %1394 = vst.msk [vmem:[#allocation2 + $0xc8] sm:$0xff] %vm522, %v1362
        %1395 = vst.msk [vmem:[#allocation2 + $0xd0] sm:$0xff] %vm522, %v1363
        %1396 = vst.msk [vmem:[#allocation2 + $0xd8] sm:$0xff] %vm522, %v1364
        %1397 = vst.msk [vmem:[#allocation2 + $0xe0] sm:$0xff] %vm522, %v1365
        %1398 = vst.msk [vmem:[#allocation2 + $0xe8] sm:$0xff] %vm522, %v1366
        %1399 = vst.msk [vmem:[#allocation2 + $0xf0] sm:$0xff] %vm522, %v1367
        %1400 = vst.msk [vmem:[#allocation2 + $0xf8] sm:$0xff] %vm522, %v1368
        %v1401 = vld [vmem:[%s188] sm:$0xf]
        %v1402 = vld [vmem:[%s188 + $0x4] sm:$0xf]
        %v1403 = vld [vmem:[%s188 + $0x8] sm:$0x1]
        %v1404 = vld [vmem:[%s188 + $0xc] sm:$0xf]
        %v1405 = vld [vmem:[%s188 + $0x10] sm:$0xf]
        %v1406 = vld [vmem:[%s188 + $0x14] sm:$0x1]
        %v1407 = vld [vmem:[%s188 + $0x18] sm:$0xf]
        %v1408 = vld [vmem:[%s188 + $0x1c] sm:$0xf]
        %v1409 = vld [vmem:[%s188 + $0x20] sm:$0x1]
        %v1410 = vld [vmem:[%s188 + $0x24] sm:$0xf]
        %v1411 = vld [vmem:[%s188 + $0x28] sm:$0xf]
        %v1412 = vld [vmem:[%s188 + $0x2c] sm:$0x1]
        %v1413 = vld [vmem:[%s188 + $0x30] sm:$0xf]
        %v1414 = vld [vmem:[%s188 + $0x34] sm:$0xf]
        %v1415 = vld [vmem:[%s188 + $0x38] sm:$0x1]
        %v1416 = vld [vmem:[%s188 + $0x3c] sm:$0xf]
        %v1417 = vld [vmem:[%s188 + $0x40] sm:$0xf]
        %v1418 = vld [vmem:[%s188 + $0x44] sm:$0x1]
        %v1419 = vld [vmem:[%s188 + $0x48] sm:$0xf]
        %v1420 = vld [vmem:[%s188 + $0x4c] sm:$0xf]
        %v1421 = vld [vmem:[%s188 + $0x50] sm:$0x1]
        %v1422 = vld [vmem:[%s188 + $0x54] sm:$0xf]
        %v1423 = vld [vmem:[%s188 + $0x58] sm:$0xf]
        %v1424 = vld [vmem:[%s188 + $0x5c] sm:$0x1]
        %v1425 = vld [vmem:[%s188 + $0x60] sm:$0xf]
        %v1426 = vld [vmem:[%s188 + $0x64] sm:$0xf]
        %v1427 = vld [vmem:[%s188 + $0x68] sm:$0x1]
        %v1428 = vld [vmem:[%s188 + $0x6c] sm:$0xf]
        %v1429 = vld [vmem:[%s188 + $0x70] sm:$0xf]
        %v1430 = vld [vmem:[%s188 + $0x74] sm:$0x1]
        %v1431 = vld [vmem:[%s188 + $0x78] sm:$0xf]
        %v1432 = vld [vmem:[%s188 + $0x7c] sm:$0xf]
        %v1433 = vld [vmem:[%s188 + $0x80] sm:$0x1]
        %v1434 = vld [vmem:[%s188 + $0x84] sm:$0xf]
        %v1435 = vld [vmem:[%s188 + $0x88] sm:$0xf]
        %v1436 = vld [vmem:[%s188 + $0x8c] sm:$0x1]
        %v1437 = vld [vmem:[%s188 + $0x90] sm:$0xf]
        %v1438 = vld [vmem:[%s188 + $0x94] sm:$0xf]
        %v1439 = vld [vmem:[%s188 + $0x98] sm:$0x1]
        %v1440 = vld [vmem:[%s188 + $0x9c] sm:$0xf]
        %v1441 = vld [vmem:[%s188 + $0xa0] sm:$0xf]
        %v1442 = vld [vmem:[%s188 + $0xa4] sm:$0x1]
        %v1443 = vld [vmem:[%s188 + $0xa8] sm:$0xf]
        %v1444 = vld [vmem:[%s188 + $0xac] sm:$0xf]
        %v1445 = vld [vmem:[%s188 + $0xb0] sm:$0x1]
        %v1446 = vld [vmem:[%s188 + $0xb4] sm:$0xf]
        %v1447 = vld [vmem:[%s188 + $0xb8] sm:$0xf]
        %v1448 = vld [vmem:[%s188 + $0xbc] sm:$0x1]
        %vm1449 = vsmask.f32 3328
        %vm1450 = vsmask.f32 7440
        %vm1451 = vmor %vm1449, %vm1450
        %v1453 = vshrl.u32 %v1401, 16
        %v1455 = vrot.slane %v1453, 4
        %v1456 = vshll.u32 %v1401, 16
        %v1458 = vrot.slane %v1456, 5
        %v1459 = vor.u32 %v1455, %v1458
        %v1460 = vrot.slane %v1459, 4
        %v1462 = vshll.u32 %v1402, 16
        %v1464 = vrot.slane %v1462, 5
        %v1465 = vsel %vm1451, %v1460, %v1464
        %v1466 = vshrl.u32 %v1402, 16
        %v1468 = vrot.slane %v1466, 4
        %v1469 = vor.u32 %v1468, %v1464
        %v1470 = vrot.slane %v1469, 4
        %v1472 = vshll.u32 %v1403, 16
        %v1474 = vrot.slane %v1472, 5
        %v1475 = vsel %vm1451, %v1470, %v1474
        %v1477 = vshrl.u32 %v1404, 16
        %v1479 = vrot.slane %v1477, 4
        %v1480 = vshll.u32 %v1404, 16
        %v1482 = vrot.slane %v1480, 5
        %v1483 = vor.u32 %v1479, %v1482
        %v1484 = vrot.slane %v1483, 4
        %v1486 = vshll.u32 %v1405, 16
        %v1488 = vrot.slane %v1486, 5
        %v1489 = vsel %vm1451, %v1484, %v1488
        %v1490 = vshrl.u32 %v1405, 16
        %v1492 = vrot.slane %v1490, 4
        %v1493 = vor.u32 %v1492, %v1488
        %v1494 = vrot.slane %v1493, 4
        %v1496 = vshll.u32 %v1406, 16
        %v1498 = vrot.slane %v1496, 5
        %v1499 = vsel %vm1451, %v1494, %v1498
        %v1501 = vshrl.u32 %v1407, 16
        %v1503 = vrot.slane %v1501, 4
        %v1504 = vshll.u32 %v1407, 16
        %v1506 = vrot.slane %v1504, 5
        %v1507 = vor.u32 %v1503, %v1506
        %v1508 = vrot.slane %v1507, 4
        %v1510 = vshll.u32 %v1408, 16
        %v1512 = vrot.slane %v1510, 5
        %v1513 = vsel %vm1451, %v1508, %v1512
        %v1514 = vshrl.u32 %v1408, 16
        %v1516 = vrot.slane %v1514, 4
        %v1517 = vor.u32 %v1516, %v1512
        %v1518 = vrot.slane %v1517, 4
        %v1520 = vshll.u32 %v1409, 16
        %v1522 = vrot.slane %v1520, 5
        %v1523 = vsel %vm1451, %v1518, %v1522
        %v1525 = vshrl.u32 %v1410, 16
        %v1527 = vrot.slane %v1525, 4
        %v1528 = vshll.u32 %v1410, 16
        %v1530 = vrot.slane %v1528, 5
        %v1531 = vor.u32 %v1527, %v1530
        %v1532 = vrot.slane %v1531, 4
        %v1534 = vshll.u32 %v1411, 16
        %v1536 = vrot.slane %v1534, 5
        %v1537 = vsel %vm1451, %v1532, %v1536
        %v1538 = vshrl.u32 %v1411, 16
        %v1540 = vrot.slane %v1538, 4
        %v1541 = vor.u32 %v1540, %v1536
        %v1542 = vrot.slane %v1541, 4
        %v1544 = vshll.u32 %v1412, 16
        %v1546 = vrot.slane %v1544, 5
        %v1547 = vsel %vm1451, %v1542, %v1546
        %v1549 = vshrl.u32 %v1413, 16
        %v1551 = vrot.slane %v1549, 4
        %v1552 = vshll.u32 %v1413, 16
        %v1554 = vrot.slane %v1552, 5
        %v1555 = vor.u32 %v1551, %v1554
        %v1556 = vrot.slane %v1555, 4
        %v1558 = vshll.u32 %v1414, 16
        %v1560 = vrot.slane %v1558, 5
        %v1561 = vsel %vm1451, %v1556, %v1560
        %v1562 = vshrl.u32 %v1414, 16
        %v1564 = vrot.slane %v1562, 4
        %v1565 = vor.u32 %v1564, %v1560
        %v1566 = vrot.slane %v1565, 4
        %v1568 = vshll.u32 %v1415, 16
        %v1570 = vrot.slane %v1568, 5
        %v1571 = vsel %vm1451, %v1566, %v1570
        %v1573 = vshrl.u32 %v1416, 16
        %v1575 = vrot.slane %v1573, 4
        %v1576 = vshll.u32 %v1416, 16
        %v1578 = vrot.slane %v1576, 5
        %v1579 = vor.u32 %v1575, %v1578
        %v1580 = vrot.slane %v1579, 4
        %v1582 = vshll.u32 %v1417, 16
        %v1584 = vrot.slane %v1582, 5
        %v1585 = vsel %vm1451, %v1580, %v1584
        %v1586 = vshrl.u32 %v1417, 16
        %v1588 = vrot.slane %v1586, 4
        %v1589 = vor.u32 %v1588, %v1584
        %v1590 = vrot.slane %v1589, 4
        %v1592 = vshll.u32 %v1418, 16
        %v1594 = vrot.slane %v1592, 5
        %v1595 = vsel %vm1451, %v1590, %v1594
        %v1597 = vshrl.u32 %v1419, 16
        %v1599 = vrot.slane %v1597, 4
        %v1600 = vshll.u32 %v1419, 16
        %v1602 = vrot.slane %v1600, 5
        %v1603 = vor.u32 %v1599, %v1602
        %v1604 = vrot.slane %v1603, 4
        %v1606 = vshll.u32 %v1420, 16
        %v1608 = vrot.slane %v1606, 5
        %v1609 = vsel %vm1451, %v1604, %v1608
        %v1610 = vshrl.u32 %v1420, 16
        %v1612 = vrot.slane %v1610, 4
        %v1613 = vor.u32 %v1612, %v1608
        %v1614 = vrot.slane %v1613, 4
        %v1616 = vshll.u32 %v1421, 16
        %v1618 = vrot.slane %v1616, 5
        %v1619 = vsel %vm1451, %v1614, %v1618
        %v1621 = vshrl.u32 %v1422, 16
        %v1623 = vrot.slane %v1621, 4
        %v1624 = vshll.u32 %v1422, 16
        %v1626 = vrot.slane %v1624, 5
        %v1627 = vor.u32 %v1623, %v1626
        %v1628 = vrot.slane %v1627, 4
        %v1630 = vshll.u32 %v1423, 16
        %v1632 = vrot.slane %v1630, 5
        %v1633 = vsel %vm1451, %v1628, %v1632
        %v1634 = vshrl.u32 %v1423, 16
        %v1636 = vrot.slane %v1634, 4
        %v1637 = vor.u32 %v1636, %v1632
        %v1638 = vrot.slane %v1637, 4
        %v1640 = vshll.u32 %v1424, 16
        %v1642 = vrot.slane %v1640, 5
        %v1643 = vsel %vm1451, %v1638, %v1642
        %v1645 = vshrl.u32 %v1425, 16
        %v1647 = vrot.slane %v1645, 4
        %v1648 = vshll.u32 %v1425, 16
        %v1650 = vrot.slane %v1648, 5
        %v1651 = vor.u32 %v1647, %v1650
        %v1652 = vrot.slane %v1651, 4
        %v1654 = vshll.u32 %v1426, 16
        %v1656 = vrot.slane %v1654, 5
        %v1657 = vsel %vm1451, %v1652, %v1656
        %v1658 = vshrl.u32 %v1426, 16
        %v1660 = vrot.slane %v1658, 4
        %v1661 = vor.u32 %v1660, %v1656
        %v1662 = vrot.slane %v1661, 4
        %v1664 = vshll.u32 %v1427, 16
        %v1666 = vrot.slane %v1664, 5
        %v1667 = vsel %vm1451, %v1662, %v1666
        %v1669 = vshrl.u32 %v1428, 16
        %v1671 = vrot.slane %v1669, 4
        %v1672 = vshll.u32 %v1428, 16
        %v1674 = vrot.slane %v1672, 5
        %v1675 = vor.u32 %v1671, %v1674
        %v1676 = vrot.slane %v1675, 4
        %v1678 = vshll.u32 %v1429, 16
        %v1680 = vrot.slane %v1678, 5
        %v1681 = vsel %vm1451, %v1676, %v1680
        %v1682 = vshrl.u32 %v1429, 16
        %v1684 = vrot.slane %v1682, 4
        %v1685 = vor.u32 %v1684, %v1680
        %v1686 = vrot.slane %v1685, 4
        %v1688 = vshll.u32 %v1430, 16
        %v1690 = vrot.slane %v1688, 5
        %v1691 = vsel %vm1451, %v1686, %v1690
        %v1693 = vshrl.u32 %v1431, 16
        %v1695 = vrot.slane %v1693, 4
        %v1696 = vshll.u32 %v1431, 16
        %v1698 = vrot.slane %v1696, 5
        %v1699 = vor.u32 %v1695, %v1698
        %v1700 = vrot.slane %v1699, 4
        %v1702 = vshll.u32 %v1432, 16
        %v1704 = vrot.slane %v1702, 5
        %v1705 = vsel %vm1451, %v1700, %v1704
        %v1706 = vshrl.u32 %v1432, 16
        %v1708 = vrot.slane %v1706, 4
        %v1709 = vor.u32 %v1708, %v1704
        %v1710 = vrot.slane %v1709, 4
        %v1712 = vshll.u32 %v1433, 16
        %v1714 = vrot.slane %v1712, 5
        %v1715 = vsel %vm1451, %v1710, %v1714
        %v1717 = vshrl.u32 %v1434, 16
        %v1719 = vrot.slane %v1717, 4
        %v1720 = vshll.u32 %v1434, 16
        %v1722 = vrot.slane %v1720, 5
        %v1723 = vor.u32 %v1719, %v1722
        %v1724 = vrot.slane %v1723, 4
        %v1726 = vshll.u32 %v1435, 16
        %v1728 = vrot.slane %v1726, 5
        %v1729 = vsel %vm1451, %v1724, %v1728
        %v1730 = vshrl.u32 %v1435, 16
        %v1732 = vrot.slane %v1730, 4
        %v1733 = vor.u32 %v1732, %v1728
        %v1734 = vrot.slane %v1733, 4
        %v1736 = vshll.u32 %v1436, 16
        %v1738 = vrot.slane %v1736, 5
        %v1739 = vsel %vm1451, %v1734, %v1738
        %v1741 = vshrl.u32 %v1437, 16
        %v1743 = vrot.slane %v1741, 4
        %v1744 = vshll.u32 %v1437, 16
        %v1746 = vrot.slane %v1744, 5
        %v1747 = vor.u32 %v1743, %v1746
        %v1748 = vrot.slane %v1747, 4
        %v1750 = vshll.u32 %v1438, 16
        %v1752 = vrot.slane %v1750, 5
        %v1753 = vsel %vm1451, %v1748, %v1752
        %v1754 = vshrl.u32 %v1438, 16
        %v1756 = vrot.slane %v1754, 4
        %v1757 = vor.u32 %v1756, %v1752
        %v1758 = vrot.slane %v1757, 4
        %v1760 = vshll.u32 %v1439, 16
        %v1762 = vrot.slane %v1760, 5
        %v1763 = vsel %vm1451, %v1758, %v1762
        %v1765 = vshrl.u32 %v1440, 16
        %v1767 = vrot.slane %v1765, 4
        %v1768 = vshll.u32 %v1440, 16
        %v1770 = vrot.slane %v1768, 5
        %v1771 = vor.u32 %v1767, %v1770
        %v1772 = vrot.slane %v1771, 4
        %v1774 = vshll.u32 %v1441, 16
        %v1776 = vrot.slane %v1774, 5
        %v1777 = vsel %vm1451, %v1772, %v1776
        %v1778 = vshrl.u32 %v1441, 16
        %v1780 = vrot.slane %v1778, 4
        %v1781 = vor.u32 %v1780, %v1776
        %v1782 = vrot.slane %v1781, 4
        %v1784 = vshll.u32 %v1442, 16
        %v1786 = vrot.slane %v1784, 5
        %v1787 = vsel %vm1451, %v1782, %v1786
        %v1789 = vshrl.u32 %v1443, 16
        %v1791 = vrot.slane %v1789, 4
        %v1792 = vshll.u32 %v1443, 16
        %v1794 = vrot.slane %v1792, 5
        %v1795 = vor.u32 %v1791, %v1794
        %v1796 = vrot.slane %v1795, 4
        %v1798 = vshll.u32 %v1444, 16
        %v1800 = vrot.slane %v1798, 5
        %v1801 = vsel %vm1451, %v1796, %v1800
        %v1802 = vshrl.u32 %v1444, 16
        %v1804 = vrot.slane %v1802, 4
        %v1805 = vor.u32 %v1804, %v1800
        %v1806 = vrot.slane %v1805, 4
        %v1808 = vshll.u32 %v1445, 16
        %v1810 = vrot.slane %v1808, 5
        %v1811 = vsel %vm1451, %v1806, %v1810
        %v1813 = vshrl.u32 %v1446, 16
        %v1815 = vrot.slane %v1813, 4
        %v1816 = vshll.u32 %v1446, 16
        %v1818 = vrot.slane %v1816, 5
        %v1819 = vor.u32 %v1815, %v1818
        %v1820 = vrot.slane %v1819, 4
        %v1822 = vshll.u32 %v1447, 16
        %v1824 = vrot.slane %v1822, 5
        %v1825 = vsel %vm1451, %v1820, %v1824
        %v1826 = vshrl.u32 %v1447, 16
        %v1828 = vrot.slane %v1826, 4
        %v1829 = vor.u32 %v1828, %v1824
        %v1830 = vrot.slane %v1829, 4
        %v1832 = vshll.u32 %v1448, 16
        %v1834 = vrot.slane %v1832, 5
        %v1835 = vsel %vm1451, %v1830, %v1834
        %s1836 = scalar_lea.vmem %s1, 2
        %v1837 = vld [vmem:[%s1836] sm:$0x3]
        %v1838 = vunpack.c.l.b16 %v1465
        %v1839 = vunpack.c.l.b16 %v1475
        %v1840 = vunpack.c.l.b16 %v1489
        %v1841 = vunpack.c.l.b16 %v1499
        %v1842 = vunpack.c.l.b16 %v1513
        %v1843 = vunpack.c.l.b16 %v1523
        %v1844 = vunpack.c.l.b16 %v1537
        %v1845 = vunpack.c.l.b16 %v1547
        %v1846 = vunpack.c.l.b16 %v1561
        %v1847 = vunpack.c.l.b16 %v1571
        %v1848 = vunpack.c.l.b16 %v1585
        %v1849 = vunpack.c.l.b16 %v1595
        %v1850 = vunpack.c.l.b16 %v1609
        %v1851 = vunpack.c.l.b16 %v1619
        %v1852 = vunpack.c.l.b16 %v1633
        %v1853 = vunpack.c.l.b16 %v1643
        %v1854 = vunpack.c.l.b16 %v1657
        %v1855 = vunpack.c.l.b16 %v1667
        %v1856 = vunpack.c.l.b16 %v1681
        %v1857 = vunpack.c.l.b16 %v1691
        %v1858 = vunpack.c.l.b16 %v1705
        %v1859 = vunpack.c.l.b16 %v1715
        %v1860 = vunpack.c.l.b16 %v1729
        %v1861 = vunpack.c.l.b16 %v1739
        %v1862 = vunpack.c.l.b16 %v1753
        %v1863 = vunpack.c.l.b16 %v1763
        %v1864 = vunpack.c.l.b16 %v1777
        %v1865 = vunpack.c.l.b16 %v1787
        %v1866 = vunpack.c.l.b16 %v1801
        %v1867 = vunpack.c.l.b16 %v1811
        %v1868 = vunpack.c.l.b16 %v1825
        %v1869 = vunpack.c.l.b16 %v1835
        %v1870 = vpack.c.b16 %v1839, %v1838
        %v1871 = vpack.c.b16 %v1841, %v1840
        %v1872 = vpack.c.b16 %v1843, %v1842
        %v1873 = vpack.c.b16 %v1845, %v1844
        %v1874 = vpack.c.b16 %v1847, %v1846
        %v1875 = vpack.c.b16 %v1849, %v1848
        %v1876 = vpack.c.b16 %v1851, %v1850
        %v1877 = vpack.c.b16 %v1853, %v1852
        %v1878 = vpack.c.b16 %v1855, %v1854
        %v1879 = vpack.c.b16 %v1857, %v1856
        %v1880 = vpack.c.b16 %v1859, %v1858
        %v1881 = vpack.c.b16 %v1861, %v1860
        %v1882 = vpack.c.b16 %v1863, %v1862
        %v1883 = vpack.c.b16 %v1865, %v1864
        %v1884 = vpack.c.b16 %v1867, %v1866
        %v1885 = vpack.c.b16 %v1869, %v1868
        %v1887 = vsel %vm305, %v1870, 0
        %v1890 = vsel %vm305, %v1871, 0
        %v1893 = vsel %vm305, %v1872, 0
        %v1896 = vsel %vm305, %v1873, 0
        %v1899 = vsel %vm305, %v1874, 0
        %v1902 = vsel %vm305, %v1875, 0
        %v1905 = vsel %vm305, %v1876, 0
        %v1908 = vsel %vm305, %v1877, 0
        %v1911 = vsel %vm305, %v1878, 0
        %v1914 = vsel %vm305, %v1879, 0
        %v1917 = vsel %vm305, %v1880, 0
        %v1920 = vsel %vm305, %v1881, 0
        %v1923 = vsel %vm305, %v1882, 0
        %v1926 = vsel %vm305, %v1883, 0
        %v1929 = vsel %vm305, %v1884, 0
        %v1932 = vsel %vm305, %v1885, 0
        %v1935 = vand.u32 %v1837, %v357
        %1937 = vmatprep.subr.bf16.mxu0 0
        %1938 = vmatpush1.bf16.msra.mxu0 0
        %1939 = vmatprep.subr.bf16.mxu0 0
        %1940 = vmatpush1.bf16.msra.mxu0 0
        %1941 = vmatprep.subr.bf16.mxu0 0
        %1942 = vmatpush1.bf16.msra.mxu0 0
        %1943 = vmatprep.subr.bf16.mxu0 0
        %1944 = vmatpush1.bf16.msra.mxu0 0
        %1945 = vmatprep.subr.bf16.mxu0 0
        %1946 = vmatpush1.bf16.msra.mxu0 0
        %1947 = vmatprep.subr.bf16.mxu0 0
        %1948 = vmatpush1.bf16.msra.mxu0 0
        %1949 = vmatprep.subr.bf16.mxu0 0
        %1950 = vmatpush1.bf16.msra.mxu0 0
        %1951 = vmatprep.subr.bf16.mxu0 0
        %1952 = vmatpush1.bf16.msra.mxu0 %v1935
        %1953 = vmatprep.subr.bf16.mxu0 0
        %1954 = vmatpush2.bf16.msra.mxu0 0
        %1955 = vmatprep.subr.bf16.mxu0 0
        %1956 = vmatpush2.bf16.msra.mxu0 0
        %1957 = vmatprep.subr.bf16.mxu0 0
        %1958 = vmatpush2.bf16.msra.mxu0 0
        %1959 = vmatprep.subr.bf16.mxu0 0
        %1960 = vmatpush2.bf16.msra.mxu0 0
        %1961 = vmatprep.subr.bf16.mxu0 0
        %1962 = vmatpush2.bf16.msra.mxu0 0
        %1963 = vmatprep.subr.bf16.mxu0 0
        %1964 = vmatpush2.bf16.msra.mxu0 0
        %1965 = vmatprep.subr.bf16.mxu0 0
        %1966 = vmatpush2.bf16.msra.mxu0 0
        %1967 = vmatprep.subr.bf16.mxu0 0
        %1968 = vmatpush2.bf16.msra.mxu0 0
        %1969 = vmatprep.mubr.bf16.mxu0 0
        %1970 = vmatmul.mubr.bf16.gmra.mxu0 %v1887
        %v1971 = vpop.f32.mrf.mxu0
        %v1972 = vadd.f32 0.0, %v1971
        %v1973 = vpop.f32.mrf.mxu0
        %v1974 = vpop.f32.mrf.mxu0
        %v1975 = vadd.f32 0.0, %v1974
        %v1976 = vpop.f32.mrf.mxu0
        %1977 = vmatprep.mubr.bf16.mxu0 0
        %1978 = vmatmul.mubr.bf16.gmra.mxu0 %v1890
        %v1979 = vpop.f32.mrf.mxu0
        %v1980 = vadd.f32 0.0, %v1979
        %v1981 = vpop.f32.mrf.mxu0
        %v1982 = vpop.f32.mrf.mxu0
        %v1983 = vadd.f32 0.0, %v1982
        %v1984 = vpop.f32.mrf.mxu0
        %1985 = vmatprep.mubr.bf16.mxu0 0
        %1986 = vmatmul.mubr.bf16.gmra.mxu0 %v1893
        %v1987 = vpop.f32.mrf.mxu0
        %v1988 = vadd.f32 0.0, %v1987
        %v1989 = vpop.f32.mrf.mxu0
        %v1990 = vpop.f32.mrf.mxu0
        %v1991 = vadd.f32 0.0, %v1990
        %v1992 = vpop.f32.mrf.mxu0
        %1993 = vmatprep.mubr.bf16.mxu0 0
        %1994 = vmatmul.mubr.bf16.gmra.mxu0 %v1896
        %v1995 = vpop.f32.mrf.mxu0
        %v1996 = vadd.f32 0.0, %v1995
        %v1997 = vpop.f32.mrf.mxu0
        %v1998 = vpop.f32.mrf.mxu0
        %v1999 = vadd.f32 0.0, %v1998
        %v2000 = vpop.f32.mrf.mxu0
        %2001 = vmatprep.mubr.bf16.mxu0 0
        %2002 = vmatmul.mubr.bf16.gmra.mxu0 %v1899
        %v2003 = vpop.f32.mrf.mxu0
        %v2004 = vadd.f32 0.0, %v2003
        %v2005 = vpop.f32.mrf.mxu0
        %v2006 = vpop.f32.mrf.mxu0
        %v2007 = vadd.f32 0.0, %v2006
        %v2008 = vpop.f32.mrf.mxu0
        %2009 = vmatprep.mubr.bf16.mxu0 0
        %2010 = vmatmul.mubr.bf16.gmra.mxu0 %v1902
        %v2011 = vpop.f32.mrf.mxu0
        %v2012 = vadd.f32 0.0, %v2011
        %v2013 = vpop.f32.mrf.mxu0
        %v2014 = vpop.f32.mrf.mxu0
        %v2015 = vadd.f32 0.0, %v2014
        %v2016 = vpop.f32.mrf.mxu0
        %2017 = vmatprep.mubr.bf16.mxu0 0
        %2018 = vmatmul.mubr.bf16.gmra.mxu0 %v1905
        %v2019 = vpop.f32.mrf.mxu0
        %v2020 = vadd.f32 0.0, %v2019
        %v2021 = vpop.f32.mrf.mxu0
        %v2022 = vpop.f32.mrf.mxu0
        %v2023 = vadd.f32 0.0, %v2022
        %v2024 = vpop.f32.mrf.mxu0
        %2025 = vmatprep.mubr.bf16.mxu0 0
        %2026 = vmatmul.mubr.bf16.gmra.mxu0 %v1908
        %v2027 = vpop.f32.mrf.mxu0
        %v2028 = vadd.f32 0.0, %v2027
        %v2029 = vpop.f32.mrf.mxu0
        %v2030 = vpop.f32.mrf.mxu0
        %v2031 = vadd.f32 0.0, %v2030
        %v2032 = vpop.f32.mrf.mxu0
        %2033 = vmatprep.mubr.bf16.mxu0 0
        %2034 = vmatmul.mubr.bf16.gmra.mxu0 %v1911
        %v2035 = vpop.f32.mrf.mxu0
        %v2036 = vadd.f32 0.0, %v2035
        %v2037 = vpop.f32.mrf.mxu0
        %v2038 = vpop.f32.mrf.mxu0
        %v2039 = vadd.f32 0.0, %v2038
        %v2040 = vpop.f32.mrf.mxu0
        %2041 = vmatprep.mubr.bf16.mxu0 0
        %2042 = vmatmul.mubr.bf16.gmra.mxu0 %v1914
        %v2043 = vpop.f32.mrf.mxu0
        %v2044 = vadd.f32 0.0, %v2043
        %v2045 = vpop.f32.mrf.mxu0
        %v2046 = vpop.f32.mrf.mxu0
        %v2047 = vadd.f32 0.0, %v2046
        %v2048 = vpop.f32.mrf.mxu0
        %2049 = vmatprep.mubr.bf16.mxu0 0
        %2050 = vmatmul.mubr.bf16.gmra.mxu0 %v1917
        %v2051 = vpop.f32.mrf.mxu0
        %v2052 = vadd.f32 0.0, %v2051
        %v2053 = vpop.f32.mrf.mxu0
        %v2054 = vpop.f32.mrf.mxu0
        %v2055 = vadd.f32 0.0, %v2054
        %v2056 = vpop.f32.mrf.mxu0
        %2057 = vmatprep.mubr.bf16.mxu0 0
        %2058 = vmatmul.mubr.bf16.gmra.mxu0 %v1920
        %v2059 = vpop.f32.mrf.mxu0
        %v2060 = vadd.f32 0.0, %v2059
        %v2061 = vpop.f32.mrf.mxu0
        %v2062 = vpop.f32.mrf.mxu0
        %v2063 = vadd.f32 0.0, %v2062
        %v2064 = vpop.f32.mrf.mxu0
        %2065 = vmatprep.mubr.bf16.mxu0 0
        %2066 = vmatmul.mubr.bf16.gmra.mxu0 %v1923
        %v2067 = vpop.f32.mrf.mxu0
        %v2068 = vadd.f32 0.0, %v2067
        %v2069 = vpop.f32.mrf.mxu0
        %v2070 = vpop.f32.mrf.mxu0
        %v2071 = vadd.f32 0.0, %v2070
        %v2072 = vpop.f32.mrf.mxu0
        %2073 = vmatprep.mubr.bf16.mxu0 0
        %2074 = vmatmul.mubr.bf16.gmra.mxu0 %v1926
        %v2075 = vpop.f32.mrf.mxu0
        %v2076 = vadd.f32 0.0, %v2075
        %v2077 = vpop.f32.mrf.mxu0
        %v2078 = vpop.f32.mrf.mxu0
        %v2079 = vadd.f32 0.0, %v2078
        %v2080 = vpop.f32.mrf.mxu0
        %2081 = vmatprep.mubr.bf16.mxu0 0
        %2082 = vmatmul.mubr.bf16.gmra.mxu0 %v1929
        %v2083 = vpop.f32.mrf.mxu0
        %v2084 = vadd.f32 0.0, %v2083
        %v2085 = vpop.f32.mrf.mxu0
        %v2086 = vpop.f32.mrf.mxu0
        %v2087 = vadd.f32 0.0, %v2086
        %v2088 = vpop.f32.mrf.mxu0
        %2089 = vmatprep.mubr.bf16.mxu0 0
        %2090 = vmatmul.mubr.bf16.gmra.mxu0 %v1932
        %v2091 = vpop.f32.mrf.mxu0
        %v2092 = vadd.f32 0.0, %v2091
        %v2093 = vpop.f32.mrf.mxu0
        %v2094 = vpop.f32.mrf.mxu0
        %v2095 = vadd.f32 0.0, %v2094
        %v2096 = vpop.f32.mrf.mxu0
        %2097 = vdwg.mxu0
        %v2098 = vld [vmem:[#allocation2] sm:$0xff]
        %v2099 = vld [vmem:[#allocation2 + $0x8] sm:$0xff]
        %v2100 = vld [vmem:[#allocation2 + $0x10] sm:$0xff]
        %v2101 = vld [vmem:[#allocation2 + $0x18] sm:$0xff]
        %v2102 = vld [vmem:[#allocation2 + $0x20] sm:$0xff]
        %v2103 = vld [vmem:[#allocation2 + $0x28] sm:$0xff]
        %v2104 = vld [vmem:[#allocation2 + $0x30] sm:$0xff]
        %v2105 = vld [vmem:[#allocation2 + $0x38] sm:$0xff]
        %v2106 = vld [vmem:[#allocation2 + $0x40] sm:$0xff]
        %v2107 = vld [vmem:[#allocation2 + $0x48] sm:$0xff]
        %v2108 = vld [vmem:[#allocation2 + $0x50] sm:$0xff]
        %v2109 = vld [vmem:[#allocation2 + $0x58] sm:$0xff]
        %v2110 = vld [vmem:[#allocation2 + $0x60] sm:$0xff]
        %v2111 = vld [vmem:[#allocation2 + $0x68] sm:$0xff]
        %v2112 = vld [vmem:[#allocation2 + $0x70] sm:$0xff]
        %v2113 = vld [vmem:[#allocation2 + $0x78] sm:$0xff]
        %v2114 = vld [vmem:[#allocation2 + $0x80] sm:$0xff]
        %v2115 = vld [vmem:[#allocation2 + $0x88] sm:$0xff]
        %v2116 = vld [vmem:[#allocation2 + $0x90] sm:$0xff]
        %v2117 = vld [vmem:[#allocation2 + $0x98] sm:$0xff]
        %v2118 = vld [vmem:[#allocation2 + $0xa0] sm:$0xff]
        %v2119 = vld [vmem:[#allocation2 + $0xa8] sm:$0xff]
        %v2120 = vld [vmem:[#allocation2 + $0xb0] sm:$0xff]
        %v2121 = vld [vmem:[#allocation2 + $0xb8] sm:$0xff]
        %v2122 = vld [vmem:[#allocation2 + $0xc0] sm:$0xff]
        %v2123 = vld [vmem:[#allocation2 + $0xc8] sm:$0xff]
        %v2124 = vld [vmem:[#allocation2 + $0xd0] sm:$0xff]
        %v2125 = vld [vmem:[#allocation2 + $0xd8] sm:$0xff]
        %v2126 = vld [vmem:[#allocation2 + $0xe0] sm:$0xff]
        %v2127 = vld [vmem:[#allocation2 + $0xe8] sm:$0xff]
        %v2128 = vld [vmem:[#allocation2 + $0xf0] sm:$0xff]
        %v2129 = vld [vmem:[#allocation2 + $0xf8] sm:$0xff]
        %v2130 = vadd.f32 %v2098, %v1972
        %v2131 = vadd.f32 %v2099, %v1975
        %v2132 = vadd.f32 %v2100, %v1980
        %v2133 = vadd.f32 %v2101, %v1983
        %v2134 = vadd.f32 %v2102, %v1988
        %v2135 = vadd.f32 %v2103, %v1991
        %v2136 = vadd.f32 %v2104, %v1996
        %v2137 = vadd.f32 %v2105, %v1999
        %v2138 = vadd.f32 %v2106, %v2004
        %v2139 = vadd.f32 %v2107, %v2007
        %v2140 = vadd.f32 %v2108, %v2012
        %v2141 = vadd.f32 %v2109, %v2015
        %v2142 = vadd.f32 %v2110, %v2020
        %v2143 = vadd.f32 %v2111, %v2023
        %v2144 = vadd.f32 %v2112, %v2028
        %v2145 = vadd.f32 %v2113, %v2031
        %v2146 = vadd.f32 %v2114, %v2036
        %v2147 = vadd.f32 %v2115, %v2039
        %v2148 = vadd.f32 %v2116, %v2044
        %v2149 = vadd.f32 %v2117, %v2047
        %v2150 = vadd.f32 %v2118, %v2052
        %v2151 = vadd.f32 %v2119, %v2055
        %v2152 = vadd.f32 %v2120, %v2060
        %v2153 = vadd.f32 %v2121, %v2063
        %v2154 = vadd.f32 %v2122, %v2068
        %v2155 = vadd.f32 %v2123, %v2071
        %v2156 = vadd.f32 %v2124, %v2076
        %v2157 = vadd.f32 %v2125, %v2079
        %v2158 = vadd.f32 %v2126, %v2084
        %v2159 = vadd.f32 %v2127, %v2087
        %v2160 = vadd.f32 %v2128, %v2092
        %v2161 = vadd.f32 %v2129, %v2095
        %2162 = vst.msk [vmem:[#allocation2] sm:$0xff] %vm522, %v2130
        %2163 = vst.msk [vmem:[#allocation2 + $0x8] sm:$0xff] %vm522, %v2131
        %2164 = vst.msk [vmem:[#allocation2 + $0x10] sm:$0xff] %vm522, %v2132
        %2165 = vst.msk [vmem:[#allocation2 + $0x18] sm:$0xff] %vm522, %v2133
        %2166 = vst.msk [vmem:[#allocation2 + $0x20] sm:$0xff] %vm522, %v2134
        %2167 = vst.msk [vmem:[#allocation2 + $0x28] sm:$0xff] %vm522, %v2135
        %2168 = vst.msk [vmem:[#allocation2 + $0x30] sm:$0xff] %vm522, %v2136
        %2169 = vst.msk [vmem:[#allocation2 + $0x38] sm:$0xff] %vm522, %v2137
        %2170 = vst.msk [vmem:[#allocation2 + $0x40] sm:$0xff] %vm522, %v2138
        %2171 = vst.msk [vmem:[#allocation2 + $0x48] sm:$0xff] %vm522, %v2139
        %2172 = vst.msk [vmem:[#allocation2 + $0x50] sm:$0xff] %vm522, %v2140
        %2173 = vst.msk [vmem:[#allocation2 + $0x58] sm:$0xff] %vm522, %v2141
        %2174 = vst.msk [vmem:[#allocation2 + $0x60] sm:$0xff] %vm522, %v2142
        %2175 = vst.msk [vmem:[#allocation2 + $0x68] sm:$0xff] %vm522, %v2143
        %2176 = vst.msk [vmem:[#allocation2 + $0x70] sm:$0xff] %vm522, %v2144
        %2177 = vst.msk [vmem:[#allocation2 + $0x78] sm:$0xff] %vm522, %v2145
        %2178 = vst.msk [vmem:[#allocation2 + $0x80] sm:$0xff] %vm522, %v2146
        %2179 = vst.msk [vmem:[#allocation2 + $0x88] sm:$0xff] %vm522, %v2147
        %2180 = vst.msk [vmem:[#allocation2 + $0x90] sm:$0xff] %vm522, %v2148
        %2181 = vst.msk [vmem:[#allocation2 + $0x98] sm:$0xff] %vm522, %v2149
        %2182 = vst.msk [vmem:[#allocation2 + $0xa0] sm:$0xff] %vm522, %v2150
        %2183 = vst.msk [vmem:[#allocation2 + $0xa8] sm:$0xff] %vm522, %v2151
        %2184 = vst.msk [vmem:[#allocation2 + $0xb0] sm:$0xff] %vm522, %v2152
        %2185 = vst.msk [vmem:[#allocation2 + $0xb8] sm:$0xff] %vm522, %v2153
        %2186 = vst.msk [vmem:[#allocation2 + $0xc0] sm:$0xff] %vm522, %v2154
        %2187 = vst.msk [vmem:[#allocation2 + $0xc8] sm:$0xff] %vm522, %v2155
        %2188 = vst.msk [vmem:[#allocation2 + $0xd0] sm:$0xff] %vm522, %v2156
        %2189 = vst.msk [vmem:[#allocation2 + $0xd8] sm:$0xff] %vm522, %v2157
        %2190 = vst.msk [vmem:[#allocation2 + $0xe0] sm:$0xff] %vm522, %v2158
        %2191 = vst.msk [vmem:[#allocation2 + $0xe8] sm:$0xff] %vm522, %v2159
        %2192 = vst.msk [vmem:[#allocation2 + $0xf0] sm:$0xff] %vm522, %v2160
        %2193 = vst.msk [vmem:[#allocation2 + $0xf8] sm:$0xff] %vm522, %v2161
        %v2194 = vld [vmem:[%s555] sm:$0xf]
        %v2195 = vld [vmem:[%s555 + $0x4] sm:$0xf]
        %v2196 = vld [vmem:[%s555 + $0x8] sm:$0x1]
        %v2197 = vld [vmem:[%s555 + $0xc] sm:$0xf]
        %v2198 = vld [vmem:[%s555 + $0x10] sm:$0xf]
        %v2199 = vld [vmem:[%s555 + $0x14] sm:$0x1]
        %v2200 = vld [vmem:[%s555 + $0x18] sm:$0xf]
        %v2201 = vld [vmem:[%s555 + $0x1c] sm:$0xf]
        %v2202 = vld [vmem:[%s555 + $0x20] sm:$0x1]
        %v2203 = vld [vmem:[%s555 + $0x24] sm:$0xf]
        %v2204 = vld [vmem:[%s555 + $0x28] sm:$0xf]
        %v2205 = vld [vmem:[%s555 + $0x2c] sm:$0x1]
        %v2206 = vld [vmem:[%s555 + $0x30] sm:$0xf]
        %v2207 = vld [vmem:[%s555 + $0x34] sm:$0xf]
        %v2208 = vld [vmem:[%s555 + $0x38] sm:$0x1]
        %v2209 = vld [vmem:[%s555 + $0x3c] sm:$0xf]
        %v2210 = vld [vmem:[%s555 + $0x40] sm:$0xf]
        %v2211 = vld [vmem:[%s555 + $0x44] sm:$0x1]
        %v2212 = vld [vmem:[%s555 + $0x48] sm:$0xf]
        %v2213 = vld [vmem:[%s555 + $0x4c] sm:$0xf]
        %v2214 = vld [vmem:[%s555 + $0x50] sm:$0x1]
        %v2215 = vld [vmem:[%s555 + $0x54] sm:$0xf]
        %v2216 = vld [vmem:[%s555 + $0x58] sm:$0xf]
        %v2217 = vld [vmem:[%s555 + $0x5c] sm:$0x1]
        %v2218 = vld [vmem:[%s555 + $0x60] sm:$0xf]
        %v2219 = vld [vmem:[%s555 + $0x64] sm:$0xf]
        %v2220 = vld [vmem:[%s555 + $0x68] sm:$0x1]
        %v2221 = vld [vmem:[%s555 + $0x6c] sm:$0xf]
        %v2222 = vld [vmem:[%s555 + $0x70] sm:$0xf]
        %v2223 = vld [vmem:[%s555 + $0x74] sm:$0x1]
        %v2224 = vld [vmem:[%s555 + $0x78] sm:$0xf]
        %v2225 = vld [vmem:[%s555 + $0x7c] sm:$0xf]
        %v2226 = vld [vmem:[%s555 + $0x80] sm:$0x1]
        %v2227 = vld [vmem:[%s555 + $0x84] sm:$0xf]
        %v2228 = vld [vmem:[%s555 + $0x88] sm:$0xf]
        %v2229 = vld [vmem:[%s555 + $0x8c] sm:$0x1]
        %v2230 = vld [vmem:[%s555 + $0x90] sm:$0xf]
        %v2231 = vld [vmem:[%s555 + $0x94] sm:$0xf]
        %v2232 = vld [vmem:[%s555 + $0x98] sm:$0x1]
        %v2233 = vld [vmem:[%s555 + $0x9c] sm:$0xf]
        %v2234 = vld [vmem:[%s555 + $0xa0] sm:$0xf]
        %v2235 = vld [vmem:[%s555 + $0xa4] sm:$0x1]
        %v2236 = vld [vmem:[%s555 + $0xa8] sm:$0xf]
        %v2237 = vld [vmem:[%s555 + $0xac] sm:$0xf]
        %v2238 = vld [vmem:[%s555 + $0xb0] sm:$0x1]
        %v2239 = vld [vmem:[%s555 + $0xb4] sm:$0xf]
        %v2240 = vld [vmem:[%s555 + $0xb8] sm:$0xf]
        %v2241 = vld [vmem:[%s555 + $0xbc] sm:$0x1]
        %v2243 = vshrl.u32 %v2194, 16
        %v2245 = vrot.slane %v2243, 4
        %v2246 = vshll.u32 %v2194, 16
        %v2248 = vrot.slane %v2246, 5
        %v2249 = vor.u32 %v2245, %v2248
        %v2250 = vrot.slane %v2249, 4
        %v2252 = vshll.u32 %v2195, 16
        %v2254 = vrot.slane %v2252, 5
        %v2255 = vsel %vm1451, %v2250, %v2254
        %v2256 = vshrl.u32 %v2195, 16
        %v2258 = vrot.slane %v2256, 4
        %v2259 = vor.u32 %v2258, %v2254
        %v2260 = vrot.slane %v2259, 4
        %v2262 = vshll.u32 %v2196, 16
        %v2264 = vrot.slane %v2262, 5
        %v2265 = vsel %vm1451, %v2260, %v2264
        %v2267 = vshrl.u32 %v2197, 16
        %v2269 = vrot.slane %v2267, 4
        %v2270 = vshll.u32 %v2197, 16
        %v2272 = vrot.slane %v2270, 5
        %v2273 = vor.u32 %v2269, %v2272
        %v2274 = vrot.slane %v2273, 4
        %v2276 = vshll.u32 %v2198, 16
        %v2278 = vrot.slane %v2276, 5
        %v2279 = vsel %vm1451, %v2274, %v2278
        %v2280 = vshrl.u32 %v2198, 16
        %v2282 = vrot.slane %v2280, 4
        %v2283 = vor.u32 %v2282, %v2278
        %v2284 = vrot.slane %v2283, 4
        %v2286 = vshll.u32 %v2199, 16
        %v2288 = vrot.slane %v2286, 5
        %v2289 = vsel %vm1451, %v2284, %v2288
        %v2291 = vshrl.u32 %v2200, 16
        %v2293 = vrot.slane %v2291, 4
        %v2294 = vshll.u32 %v2200, 16
        %v2296 = vrot.slane %v2294, 5
        %v2297 = vor.u32 %v2293, %v2296
        %v2298 = vrot.slane %v2297, 4
        %v2300 = vshll.u32 %v2201, 16
        %v2302 = vrot.slane %v2300, 5
        %v2303 = vsel %vm1451, %v2298, %v2302
        %v2304 = vshrl.u32 %v2201, 16
        %v2306 = vrot.slane %v2304, 4
        %v2307 = vor.u32 %v2306, %v2302
        %v2308 = vrot.slane %v2307, 4
        %v2310 = vshll.u32 %v2202, 16
        %v2312 = vrot.slane %v2310, 5
        %v2313 = vsel %vm1451, %v2308, %v2312
        %v2315 = vshrl.u32 %v2203, 16
        %v2317 = vrot.slane %v2315, 4
        %v2318 = vshll.u32 %v2203, 16
        %v2320 = vrot.slane %v2318, 5
        %v2321 = vor.u32 %v2317, %v2320
        %v2322 = vrot.slane %v2321, 4
        %v2324 = vshll.u32 %v2204, 16
        %v2326 = vrot.slane %v2324, 5
        %v2327 = vsel %vm1451, %v2322, %v2326
        %v2328 = vshrl.u32 %v2204, 16
        %v2330 = vrot.slane %v2328, 4
        %v2331 = vor.u32 %v2330, %v2326
        %v2332 = vrot.slane %v2331, 4
        %v2334 = vshll.u32 %v2205, 16
        %v2336 = vrot.slane %v2334, 5
        %v2337 = vsel %vm1451, %v2332, %v2336
        %v2339 = vshrl.u32 %v2206, 16
        %v2341 = vrot.slane %v2339, 4
        %v2342 = vshll.u32 %v2206, 16
        %v2344 = vrot.slane %v2342, 5
        %v2345 = vor.u32 %v2341, %v2344
        %v2346 = vrot.slane %v2345, 4
        %v2348 = vshll.u32 %v2207, 16
        %v2350 = vrot.slane %v2348, 5
        %v2351 = vsel %vm1451, %v2346, %v2350
        %v2352 = vshrl.u32 %v2207, 16
        %v2354 = vrot.slane %v2352, 4
        %v2355 = vor.u32 %v2354, %v2350
        %v2356 = vrot.slane %v2355, 4
        %v2358 = vshll.u32 %v2208, 16
        %v2360 = vrot.slane %v2358, 5
        %v2361 = vsel %vm1451, %v2356, %v2360
        %v2363 = vshrl.u32 %v2209, 16
        %v2365 = vrot.slane %v2363, 4
        %v2366 = vshll.u32 %v2209, 16
        %v2368 = vrot.slane %v2366, 5
        %v2369 = vor.u32 %v2365, %v2368
        %v2370 = vrot.slane %v2369, 4
        %v2372 = vshll.u32 %v2210, 16
        %v2374 = vrot.slane %v2372, 5
        %v2375 = vsel %vm1451, %v2370, %v2374
        %v2376 = vshrl.u32 %v2210, 16
        %v2378 = vrot.slane %v2376, 4
        %v2379 = vor.u32 %v2378, %v2374
        %v2380 = vrot.slane %v2379, 4
        %v2382 = vshll.u32 %v2211, 16
        %v2384 = vrot.slane %v2382, 5
        %v2385 = vsel %vm1451, %v2380, %v2384
        %v2387 = vshrl.u32 %v2212, 16
        %v2389 = vrot.slane %v2387, 4
        %v2390 = vshll.u32 %v2212, 16
        %v2392 = vrot.slane %v2390, 5
        %v2393 = vor.u32 %v2389, %v2392
        %v2394 = vrot.slane %v2393, 4
        %v2396 = vshll.u32 %v2213, 16
        %v2398 = vrot.slane %v2396, 5
        %v2399 = vsel %vm1451, %v2394, %v2398
        %v2400 = vshrl.u32 %v2213, 16
        %v2402 = vrot.slane %v2400, 4
        %v2403 = vor.u32 %v2402, %v2398
        %v2404 = vrot.slane %v2403, 4
        %v2406 = vshll.u32 %v2214, 16
        %v2408 = vrot.slane %v2406, 5
        %v2409 = vsel %vm1451, %v2404, %v2408
        %v2411 = vshrl.u32 %v2215, 16
        %v2413 = vrot.slane %v2411, 4
        %v2414 = vshll.u32 %v2215, 16
        %v2416 = vrot.slane %v2414, 5
        %v2417 = vor.u32 %v2413, %v2416
        %v2418 = vrot.slane %v2417, 4
        %v2420 = vshll.u32 %v2216, 16
        %v2422 = vrot.slane %v2420, 5
        %v2423 = vsel %vm1451, %v2418, %v2422
        %v2424 = vshrl.u32 %v2216, 16
        %v2426 = vrot.slane %v2424, 4
        %v2427 = vor.u32 %v2426, %v2422
        %v2428 = vrot.slane %v2427, 4
        %v2430 = vshll.u32 %v2217, 16
        %v2432 = vrot.slane %v2430, 5
        %v2433 = vsel %vm1451, %v2428, %v2432
        %v2435 = vshrl.u32 %v2218, 16
        %v2437 = vrot.slane %v2435, 4
        %v2438 = vshll.u32 %v2218, 16
        %v2440 = vrot.slane %v2438, 5
        %v2441 = vor.u32 %v2437, %v2440
        %v2442 = vrot.slane %v2441, 4
        %v2444 = vshll.u32 %v2219, 16
        %v2446 = vrot.slane %v2444, 5
        %v2447 = vsel %vm1451, %v2442, %v2446
        %v2448 = vshrl.u32 %v2219, 16
        %v2450 = vrot.slane %v2448, 4
        %v2451 = vor.u32 %v2450, %v2446
        %v2452 = vrot.slane %v2451, 4
        %v2454 = vshll.u32 %v2220, 16
        %v2456 = vrot.slane %v2454, 5
        %v2457 = vsel %vm1451, %v2452, %v2456
        %v2459 = vshrl.u32 %v2221, 16
        %v2461 = vrot.slane %v2459, 4
        %v2462 = vshll.u32 %v2221, 16
        %v2464 = vrot.slane %v2462, 5
        %v2465 = vor.u32 %v2461, %v2464
        %v2466 = vrot.slane %v2465, 4
        %v2468 = vshll.u32 %v2222, 16
        %v2470 = vrot.slane %v2468, 5
        %v2471 = vsel %vm1451, %v2466, %v2470
        %v2472 = vshrl.u32 %v2222, 16
        %v2474 = vrot.slane %v2472, 4
        %v2475 = vor.u32 %v2474, %v2470
        %v2476 = vrot.slane %v2475, 4
        %v2478 = vshll.u32 %v2223, 16
        %v2480 = vrot.slane %v2478, 5
        %v2481 = vsel %vm1451, %v2476, %v2480
        %v2483 = vshrl.u32 %v2224, 16
        %v2485 = vrot.slane %v2483, 4
        %v2486 = vshll.u32 %v2224, 16
        %v2488 = vrot.slane %v2486, 5
        %v2489 = vor.u32 %v2485, %v2488
        %v2490 = vrot.slane %v2489, 4
        %v2492 = vshll.u32 %v2225, 16
        %v2494 = vrot.slane %v2492, 5
        %v2495 = vsel %vm1451, %v2490, %v2494
        %v2496 = vshrl.u32 %v2225, 16
        %v2498 = vrot.slane %v2496, 4
        %v2499 = vor.u32 %v2498, %v2494
        %v2500 = vrot.slane %v2499, 4
        %v2502 = vshll.u32 %v2226, 16
        %v2504 = vrot.slane %v2502, 5
        %v2505 = vsel %vm1451, %v2500, %v2504
        %v2507 = vshrl.u32 %v2227, 16
        %v2509 = vrot.slane %v2507, 4
        %v2510 = vshll.u32 %v2227, 16
        %v2512 = vrot.slane %v2510, 5
        %v2513 = vor.u32 %v2509, %v2512
        %v2514 = vrot.slane %v2513, 4
        %v2516 = vshll.u32 %v2228, 16
        %v2518 = vrot.slane %v2516, 5
        %v2519 = vsel %vm1451, %v2514, %v2518
        %v2520 = vshrl.u32 %v2228, 16
        %v2522 = vrot.slane %v2520, 4
        %v2523 = vor.u32 %v2522, %v2518
        %v2524 = vrot.slane %v2523, 4
        %v2526 = vshll.u32 %v2229, 16
        %v2528 = vrot.slane %v2526, 5
        %v2529 = vsel %vm1451, %v2524, %v2528
        %v2531 = vshrl.u32 %v2230, 16
        %v2533 = vrot.slane %v2531, 4
        %v2534 = vshll.u32 %v2230, 16
        %v2536 = vrot.slane %v2534, 5
        %v2537 = vor.u32 %v2533, %v2536
        %v2538 = vrot.slane %v2537, 4
        %v2540 = vshll.u32 %v2231, 16
        %v2542 = vrot.slane %v2540, 5
        %v2543 = vsel %vm1451, %v2538, %v2542
        %v2544 = vshrl.u32 %v2231, 16
        %v2546 = vrot.slane %v2544, 4
        %v2547 = vor.u32 %v2546, %v2542
        %v2548 = vrot.slane %v2547, 4
        %v2550 = vshll.u32 %v2232, 16
        %v2552 = vrot.slane %v2550, 5
        %v2553 = vsel %vm1451, %v2548, %v2552
        %v2555 = vshrl.u32 %v2233, 16
        %v2557 = vrot.slane %v2555, 4
        %v2558 = vshll.u32 %v2233, 16
        %v2560 = vrot.slane %v2558, 5
        %v2561 = vor.u32 %v2557, %v2560
        %v2562 = vrot.slane %v2561, 4
        %v2564 = vshll.u32 %v2234, 16
        %v2566 = vrot.slane %v2564, 5
        %v2567 = vsel %vm1451, %v2562, %v2566
        %v2568 = vshrl.u32 %v2234, 16
        %v2570 = vrot.slane %v2568, 4
        %v2571 = vor.u32 %v2570, %v2566
        %v2572 = vrot.slane %v2571, 4
        %v2574 = vshll.u32 %v2235, 16
        %v2576 = vrot.slane %v2574, 5
        %v2577 = vsel %vm1451, %v2572, %v2576
        %v2579 = vshrl.u32 %v2236, 16
        %v2581 = vrot.slane %v2579, 4
        %v2582 = vshll.u32 %v2236, 16
        %v2584 = vrot.slane %v2582, 5
        %v2585 = vor.u32 %v2581, %v2584
        %v2586 = vrot.slane %v2585, 4
        %v2588 = vshll.u32 %v2237, 16
        %v2590 = vrot.slane %v2588, 5
        %v2591 = vsel %vm1451, %v2586, %v2590
        %v2592 = vshrl.u32 %v2237, 16
        %v2594 = vrot.slane %v2592, 4
        %v2595 = vor.u32 %v2594, %v2590
        %v2596 = vrot.slane %v2595, 4
        %v2598 = vshll.u32 %v2238, 16
        %v2600 = vrot.slane %v2598, 5
        %v2601 = vsel %vm1451, %v2596, %v2600
        %v2603 = vshrl.u32 %v2239, 16
        %v2605 = vrot.slane %v2603, 4
        %v2606 = vshll.u32 %v2239, 16
        %v2608 = vrot.slane %v2606, 5
        %v2609 = vor.u32 %v2605, %v2608
        %v2610 = vrot.slane %v2609, 4
        %v2612 = vshll.u32 %v2240, 16
        %v2614 = vrot.slane %v2612, 5
        %v2615 = vsel %vm1451, %v2610, %v2614
        %v2616 = vshrl.u32 %v2240, 16
        %v2618 = vrot.slane %v2616, 4
        %v2619 = vor.u32 %v2618, %v2614
        %v2620 = vrot.slane %v2619, 4
        %v2622 = vshll.u32 %v2241, 16
        %v2624 = vrot.slane %v2622, 5
        %v2625 = vsel %vm1451, %v2620, %v2624
        %s2626 = scalar_lea.vmem %s1, 8
        %v2627 = vld [vmem:[%s2626] sm:$0x3]
        %v2628 = vunpack.c.l.b16 %v2255
        %v2629 = vunpack.c.l.b16 %v2265
        %v2630 = vunpack.c.l.b16 %v2279
        %v2631 = vunpack.c.l.b16 %v2289
        %v2632 = vunpack.c.l.b16 %v2303
        %v2633 = vunpack.c.l.b16 %v2313
        %v2634 = vunpack.c.l.b16 %v2327
        %v2635 = vunpack.c.l.b16 %v2337
        %v2636 = vunpack.c.l.b16 %v2351
        %v2637 = vunpack.c.l.b16 %v2361
        %v2638 = vunpack.c.l.b16 %v2375
        %v2639 = vunpack.c.l.b16 %v2385
        %v2640 = vunpack.c.l.b16 %v2399
        %v2641 = vunpack.c.l.b16 %v2409
        %v2642 = vunpack.c.l.b16 %v2423
        %v2643 = vunpack.c.l.b16 %v2433
        %v2644 = vunpack.c.l.b16 %v2447
        %v2645 = vunpack.c.l.b16 %v2457
        %v2646 = vunpack.c.l.b16 %v2471
        %v2647 = vunpack.c.l.b16 %v2481
        %v2648 = vunpack.c.l.b16 %v2495
        %v2649 = vunpack.c.l.b16 %v2505
        %v2650 = vunpack.c.l.b16 %v2519
        %v2651 = vunpack.c.l.b16 %v2529
        %v2652 = vunpack.c.l.b16 %v2543
        %v2653 = vunpack.c.l.b16 %v2553
        %v2654 = vunpack.c.l.b16 %v2567
        %v2655 = vunpack.c.l.b16 %v2577
        %v2656 = vunpack.c.l.b16 %v2591
        %v2657 = vunpack.c.l.b16 %v2601
        %v2658 = vunpack.c.l.b16 %v2615
        %v2659 = vunpack.c.l.b16 %v2625
        %v2660 = vpack.c.b16 %v2629, %v2628
        %v2661 = vpack.c.b16 %v2631, %v2630
        %v2662 = vpack.c.b16 %v2633, %v2632
        %v2663 = vpack.c.b16 %v2635, %v2634
        %v2664 = vpack.c.b16 %v2637, %v2636
        %v2665 = vpack.c.b16 %v2639, %v2638
        %v2666 = vpack.c.b16 %v2641, %v2640
        %v2667 = vpack.c.b16 %v2643, %v2642
        %v2668 = vpack.c.b16 %v2645, %v2644
        %v2669 = vpack.c.b16 %v2647, %v2646
        %v2670 = vpack.c.b16 %v2649, %v2648
        %v2671 = vpack.c.b16 %v2651, %v2650
        %v2672 = vpack.c.b16 %v2653, %v2652
        %v2673 = vpack.c.b16 %v2655, %v2654
        %v2674 = vpack.c.b16 %v2657, %v2656
        %v2675 = vpack.c.b16 %v2659, %v2658
        %v2677 = vsel %vm305, %v2660, 0
        %v2680 = vsel %vm305, %v2661, 0
        %v2683 = vsel %vm305, %v2662, 0
        %v2686 = vsel %vm305, %v2663, 0
        %v2689 = vsel %vm305, %v2664, 0
        %v2692 = vsel %vm305, %v2665, 0
        %v2695 = vsel %vm305, %v2666, 0
        %v2698 = vsel %vm305, %v2667, 0
        %v2701 = vsel %vm305, %v2668, 0
        %v2704 = vsel %vm305, %v2669, 0
        %v2707 = vsel %vm305, %v2670, 0
        %v2710 = vsel %vm305, %v2671, 0
        %v2713 = vsel %vm305, %v2672, 0
        %v2716 = vsel %vm305, %v2673, 0
        %v2719 = vsel %vm305, %v2674, 0
        %v2722 = vsel %vm305, %v2675, 0
        %v2725 = vand.u32 %v2627, %v357
        %2727 = vmatprep.subr.bf16.mxu0 0
        %2728 = vmatpush1.bf16.msra.mxu0 0
        %2729 = vmatprep.subr.bf16.mxu0 0
        %2730 = vmatpush1.bf16.msra.mxu0 0
        %2731 = vmatprep.subr.bf16.mxu0 0
        %2732 = vmatpush1.bf16.msra.mxu0 0
        %2733 = vmatprep.subr.bf16.mxu0 0
        %2734 = vmatpush1.bf16.msra.mxu0 0
        %2735 = vmatprep.subr.bf16.mxu0 0
        %2736 = vmatpush1.bf16.msra.mxu0 0
        %2737 = vmatprep.subr.bf16.mxu0 0
        %2738 = vmatpush1.bf16.msra.mxu0 0
        %2739 = vmatprep.subr.bf16.mxu0 0
        %2740 = vmatpush1.bf16.msra.mxu0 0
        %2741 = vmatprep.subr.bf16.mxu0 0
        %2742 = vmatpush1.bf16.msra.mxu0 %v2725
        %2743 = vmatprep.subr.bf16.mxu0 0
        %2744 = vmatpush2.bf16.msra.mxu0 0
        %2745 = vmatprep.subr.bf16.mxu0 0
        %2746 = vmatpush2.bf16.msra.mxu0 0
        %2747 = vmatprep.subr.bf16.mxu0 0
        %2748 = vmatpush2.bf16.msra.mxu0 0
        %2749 = vmatprep.subr.bf16.mxu0 0
        %2750 = vmatpush2.bf16.msra.mxu0 0
        %2751 = vmatprep.subr.bf16.mxu0 0
        %2752 = vmatpush2.bf16.msra.mxu0 0
        %2753 = vmatprep.subr.bf16.mxu0 0
        %2754 = vmatpush2.bf16.msra.mxu0 0
        %2755 = vmatprep.subr.bf16.mxu0 0
        %2756 = vmatpush2.bf16.msra.mxu0 0
        %2757 = vmatprep.subr.bf16.mxu0 0
        %2758 = vmatpush2.bf16.msra.mxu0 0
        %2759 = vmatprep.mubr.bf16.mxu0 0
        %2760 = vmatmul.mubr.bf16.gmra.mxu0 %v2677
        %v2761 = vpop.f32.mrf.mxu0
        %v2762 = vadd.f32 0.0, %v2761
        %v2763 = vpop.f32.mrf.mxu0
        %v2764 = vpop.f32.mrf.mxu0
        %v2765 = vadd.f32 0.0, %v2764
        %v2766 = vpop.f32.mrf.mxu0
        %2767 = vmatprep.mubr.bf16.mxu0 0
        %2768 = vmatmul.mubr.bf16.gmra.mxu0 %v2680
        %v2769 = vpop.f32.mrf.mxu0
        %v2770 = vadd.f32 0.0, %v2769
        %v2771 = vpop.f32.mrf.mxu0
        %v2772 = vpop.f32.mrf.mxu0
        %v2773 = vadd.f32 0.0, %v2772
        %v2774 = vpop.f32.mrf.mxu0
        %2775 = vmatprep.mubr.bf16.mxu0 0
        %2776 = vmatmul.mubr.bf16.gmra.mxu0 %v2683
        %v2777 = vpop.f32.mrf.mxu0
        %v2778 = vadd.f32 0.0, %v2777
        %v2779 = vpop.f32.mrf.mxu0
        %v2780 = vpop.f32.mrf.mxu0
        %v2781 = vadd.f32 0.0, %v2780
        %v2782 = vpop.f32.mrf.mxu0
        %2783 = vmatprep.mubr.bf16.mxu0 0
        %2784 = vmatmul.mubr.bf16.gmra.mxu0 %v2686
        %v2785 = vpop.f32.mrf.mxu0
        %v2786 = vadd.f32 0.0, %v2785
        %v2787 = vpop.f32.mrf.mxu0
        %v2788 = vpop.f32.mrf.mxu0
        %v2789 = vadd.f32 0.0, %v2788
        %v2790 = vpop.f32.mrf.mxu0
        %2791 = vmatprep.mubr.bf16.mxu0 0
        %2792 = vmatmul.mubr.bf16.gmra.mxu0 %v2689
        %v2793 = vpop.f32.mrf.mxu0
        %v2794 = vadd.f32 0.0, %v2793
        %v2795 = vpop.f32.mrf.mxu0
        %v2796 = vpop.f32.mrf.mxu0
        %v2797 = vadd.f32 0.0, %v2796
        %v2798 = vpop.f32.mrf.mxu0
        %2799 = vmatprep.mubr.bf16.mxu0 0
        %2800 = vmatmul.mubr.bf16.gmra.mxu0 %v2692
        %v2801 = vpop.f32.mrf.mxu0
        %v2802 = vadd.f32 0.0, %v2801
        %v2803 = vpop.f32.mrf.mxu0
        %v2804 = vpop.f32.mrf.mxu0
        %v2805 = vadd.f32 0.0, %v2804
        %v2806 = vpop.f32.mrf.mxu0
        %2807 = vmatprep.mubr.bf16.mxu0 0
        %2808 = vmatmul.mubr.bf16.gmra.mxu0 %v2695
        %v2809 = vpop.f32.mrf.mxu0
        %v2810 = vadd.f32 0.0, %v2809
        %v2811 = vpop.f32.mrf.mxu0
        %v2812 = vpop.f32.mrf.mxu0
        %v2813 = vadd.f32 0.0, %v2812
        %v2814 = vpop.f32.mrf.mxu0
        %2815 = vmatprep.mubr.bf16.mxu0 0
        %2816 = vmatmul.mubr.bf16.gmra.mxu0 %v2698
        %v2817 = vpop.f32.mrf.mxu0
        %v2818 = vadd.f32 0.0, %v2817
        %v2819 = vpop.f32.mrf.mxu0
        %v2820 = vpop.f32.mrf.mxu0
        %v2821 = vadd.f32 0.0, %v2820
        %v2822 = vpop.f32.mrf.mxu0
        %2823 = vmatprep.mubr.bf16.mxu0 0
        %2824 = vmatmul.mubr.bf16.gmra.mxu0 %v2701
        %v2825 = vpop.f32.mrf.mxu0
        %v2826 = vadd.f32 0.0, %v2825
        %v2827 = vpop.f32.mrf.mxu0
        %v2828 = vpop.f32.mrf.mxu0
        %v2829 = vadd.f32 0.0, %v2828
        %v2830 = vpop.f32.mrf.mxu0
        %2831 = vmatprep.mubr.bf16.mxu0 0
        %2832 = vmatmul.mubr.bf16.gmra.mxu0 %v2704
        %v2833 = vpop.f32.mrf.mxu0
        %v2834 = vadd.f32 0.0, %v2833
        %v2835 = vpop.f32.mrf.mxu0
        %v2836 = vpop.f32.mrf.mxu0
        %v2837 = vadd.f32 0.0, %v2836
        %v2838 = vpop.f32.mrf.mxu0
        %2839 = vmatprep.mubr.bf16.mxu0 0
        %2840 = vmatmul.mubr.bf16.gmra.mxu0 %v2707
        %v2841 = vpop.f32.mrf.mxu0
        %v2842 = vadd.f32 0.0, %v2841
        %v2843 = vpop.f32.mrf.mxu0
        %v2844 = vpop.f32.mrf.mxu0
        %v2845 = vadd.f32 0.0, %v2844
        %v2846 = vpop.f32.mrf.mxu0
        %2847 = vmatprep.mubr.bf16.mxu0 0
        %2848 = vmatmul.mubr.bf16.gmra.mxu0 %v2710
        %v2849 = vpop.f32.mrf.mxu0
        %v2850 = vadd.f32 0.0, %v2849
        %v2851 = vpop.f32.mrf.mxu0
        %v2852 = vpop.f32.mrf.mxu0
        %v2853 = vadd.f32 0.0, %v2852
        %v2854 = vpop.f32.mrf.mxu0
        %2855 = vmatprep.mubr.bf16.mxu0 0
        %2856 = vmatmul.mubr.bf16.gmra.mxu0 %v2713
        %v2857 = vpop.f32.mrf.mxu0
        %v2858 = vadd.f32 0.0, %v2857
        %v2859 = vpop.f32.mrf.mxu0
        %v2860 = vpop.f32.mrf.mxu0
        %v2861 = vadd.f32 0.0, %v2860
        %v2862 = vpop.f32.mrf.mxu0
        %2863 = vmatprep.mubr.bf16.mxu0 0
        %2864 = vmatmul.mubr.bf16.gmra.mxu0 %v2716
        %v2865 = vpop.f32.mrf.mxu0
        %v2866 = vadd.f32 0.0, %v2865
        %v2867 = vpop.f32.mrf.mxu0
        %v2868 = vpop.f32.mrf.mxu0
        %v2869 = vadd.f32 0.0, %v2868
        %v2870 = vpop.f32.mrf.mxu0
        %2871 = vmatprep.mubr.bf16.mxu0 0
        %2872 = vmatmul.mubr.bf16.gmra.mxu0 %v2719
        %v2873 = vpop.f32.mrf.mxu0
        %v2874 = vadd.f32 0.0, %v2873
        %v2875 = vpop.f32.mrf.mxu0
        %v2876 = vpop.f32.mrf.mxu0
        %v2877 = vadd.f32 0.0, %v2876
        %v2878 = vpop.f32.mrf.mxu0
        %2879 = vmatprep.mubr.bf16.mxu0 0
        %2880 = vmatmul.mubr.bf16.gmra.mxu0 %v2722
        %v2881 = vpop.f32.mrf.mxu0
        %v2882 = vadd.f32 0.0, %v2881
        %v2883 = vpop.f32.mrf.mxu0
        %v2884 = vpop.f32.mrf.mxu0
        %v2885 = vadd.f32 0.0, %v2884
        %v2886 = vpop.f32.mrf.mxu0
        %2887 = vdwg.mxu0
        %v2888 = vld [vmem:[#allocation2] sm:$0xff]
        %v2889 = vld [vmem:[#allocation2 + $0x8] sm:$0xff]
        %v2890 = vld [vmem:[#allocation2 + $0x10] sm:$0xff]
        %v2891 = vld [vmem:[#allocation2 + $0x18] sm:$0xff]
        %v2892 = vld [vmem:[#allocation2 + $0x20] sm:$0xff]
        %v2893 = vld [vmem:[#allocation2 + $0x28] sm:$0xff]
        %v2894 = vld [vmem:[#allocation2 + $0x30] sm:$0xff]
        %v2895 = vld [vmem:[#allocation2 + $0x38] sm:$0xff]
        %v2896 = vld [vmem:[#allocation2 + $0x40] sm:$0xff]
        %v2897 = vld [vmem:[#allocation2 + $0x48] sm:$0xff]
        %v2898 = vld [vmem:[#allocation2 + $0x50] sm:$0xff]
        %v2899 = vld [vmem:[#allocation2 + $0x58] sm:$0xff]
        %v2900 = vld [vmem:[#allocation2 + $0x60] sm:$0xff]
        %v2901 = vld [vmem:[#allocation2 + $0x68] sm:$0xff]
        %v2902 = vld [vmem:[#allocation2 + $0x70] sm:$0xff]
        %v2903 = vld [vmem:[#allocation2 + $0x78] sm:$0xff]
        %v2904 = vld [vmem:[#allocation2 + $0x80] sm:$0xff]
        %v2905 = vld [vmem:[#allocation2 + $0x88] sm:$0xff]
        %v2906 = vld [vmem:[#allocation2 + $0x90] sm:$0xff]
        %v2907 = vld [vmem:[#allocation2 + $0x98] sm:$0xff]
        %v2908 = vld [vmem:[#allocation2 + $0xa0] sm:$0xff]
        %v2909 = vld [vmem:[#allocation2 + $0xa8] sm:$0xff]
        %v2910 = vld [vmem:[#allocation2 + $0xb0] sm:$0xff]
        %v2911 = vld [vmem:[#allocation2 + $0xb8] sm:$0xff]
        %v2912 = vld [vmem:[#allocation2 + $0xc0] sm:$0xff]
        %v2913 = vld [vmem:[#allocation2 + $0xc8] sm:$0xff]
        %v2914 = vld [vmem:[#allocation2 + $0xd0] sm:$0xff]
        %v2915 = vld [vmem:[#allocation2 + $0xd8] sm:$0xff]
        %v2916 = vld [vmem:[#allocation2 + $0xe0] sm:$0xff]
        %v2917 = vld [vmem:[#allocation2 + $0xe8] sm:$0xff]
        %v2918 = vld [vmem:[#allocation2 + $0xf0] sm:$0xff]
        %v2919 = vld [vmem:[#allocation2 + $0xf8] sm:$0xff]
        %v2920 = vadd.f32 %v2888, %v2762
        %v2921 = vadd.f32 %v2889, %v2765
        %v2922 = vadd.f32 %v2890, %v2770
        %v2923 = vadd.f32 %v2891, %v2773
        %v2924 = vadd.f32 %v2892, %v2778
        %v2925 = vadd.f32 %v2893, %v2781
        %v2926 = vadd.f32 %v2894, %v2786
        %v2927 = vadd.f32 %v2895, %v2789
        %v2928 = vadd.f32 %v2896, %v2794
        %v2929 = vadd.f32 %v2897, %v2797
        %v2930 = vadd.f32 %v2898, %v2802
        %v2931 = vadd.f32 %v2899, %v2805
        %v2932 = vadd.f32 %v2900, %v2810
        %v2933 = vadd.f32 %v2901, %v2813
        %v2934 = vadd.f32 %v2902, %v2818
        %v2935 = vadd.f32 %v2903, %v2821
        %v2936 = vadd.f32 %v2904, %v2826
        %v2937 = vadd.f32 %v2905, %v2829
        %v2938 = vadd.f32 %v2906, %v2834
        %v2939 = vadd.f32 %v2907, %v2837
        %v2940 = vadd.f32 %v2908, %v2842
        %v2941 = vadd.f32 %v2909, %v2845
        %v2942 = vadd.f32 %v2910, %v2850
        %v2943 = vadd.f32 %v2911, %v2853
        %v2944 = vadd.f32 %v2912, %v2858
        %v2945 = vadd.f32 %v2913, %v2861
        %v2946 = vadd.f32 %v2914, %v2866
        %v2947 = vadd.f32 %v2915, %v2869
        %v2948 = vadd.f32 %v2916, %v2874
        %v2949 = vadd.f32 %v2917, %v2877
        %v2950 = vadd.f32 %v2918, %v2882
        %v2951 = vadd.f32 %v2919, %v2885
        %2952 = vst.msk [vmem:[#allocation2] sm:$0xff] %vm522, %v2920
        %2953 = vst.msk [vmem:[#allocation2 + $0x8] sm:$0xff] %vm522, %v2921
        %2954 = vst.msk [vmem:[#allocation2 + $0x10] sm:$0xff] %vm522, %v2922
        %2955 = vst.msk [vmem:[#allocation2 + $0x18] sm:$0xff] %vm522, %v2923
        %2956 = vst.msk [vmem:[#allocation2 + $0x20] sm:$0xff] %vm522, %v2924
        %2957 = vst.msk [vmem:[#allocation2 + $0x28] sm:$0xff] %vm522, %v2925
        %2958 = vst.msk [vmem:[#allocation2 + $0x30] sm:$0xff] %vm522, %v2926
        %2959 = vst.msk [vmem:[#allocation2 + $0x38] sm:$0xff] %vm522, %v2927
        %2960 = vst.msk [vmem:[#allocation2 + $0x40] sm:$0xff] %vm522, %v2928
        %2961 = vst.msk [vmem:[#allocation2 + $0x48] sm:$0xff] %vm522, %v2929
        %2962 = vst.msk [vmem:[#allocation2 + $0x50] sm:$0xff] %vm522, %v2930
        %2963 = vst.msk [vmem:[#allocation2 + $0x58] sm:$0xff] %vm522, %v2931
        %2964 = vst.msk [vmem:[#allocation2 + $0x60] sm:$0xff] %vm522, %v2932
        %2965 = vst.msk [vmem:[#allocation2 + $0x68] sm:$0xff] %vm522, %v2933
        %2966 = vst.msk [vmem:[#allocation2 + $0x70] sm:$0xff] %vm522, %v2934
        %2967 = vst.msk [vmem:[#allocation2 + $0x78] sm:$0xff] %vm522, %v2935
        %2968 = vst.msk [vmem:[#allocation2 + $0x80] sm:$0xff] %vm522, %v2936
        %2969 = vst.msk [vmem:[#allocation2 + $0x88] sm:$0xff] %vm522, %v2937
        %2970 = vst.msk [vmem:[#allocation2 + $0x90] sm:$0xff] %vm522, %v2938
        %2971 = vst.msk [vmem:[#allocation2 + $0x98] sm:$0xff] %vm522, %v2939
        %2972 = vst.msk [vmem:[#allocation2 + $0xa0] sm:$0xff] %vm522, %v2940
        %2973 = vst.msk [vmem:[#allocation2 + $0xa8] sm:$0xff] %vm522, %v2941
        %2974 = vst.msk [vmem:[#allocation2 + $0xb0] sm:$0xff] %vm522, %v2942
        %2975 = vst.msk [vmem:[#allocation2 + $0xb8] sm:$0xff] %vm522, %v2943
        %2976 = vst.msk [vmem:[#allocation2 + $0xc0] sm:$0xff] %vm522, %v2944
        %2977 = vst.msk [vmem:[#allocation2 + $0xc8] sm:$0xff] %vm522, %v2945
        %2978 = vst.msk [vmem:[#allocation2 + $0xd0] sm:$0xff] %vm522, %v2946
        %2979 = vst.msk [vmem:[#allocation2 + $0xd8] sm:$0xff] %vm522, %v2947
        %2980 = vst.msk [vmem:[#allocation2 + $0xe0] sm:$0xff] %vm522, %v2948
        %2981 = vst.msk [vmem:[#allocation2 + $0xe8] sm:$0xff] %vm522, %v2949
        %2982 = vst.msk [vmem:[#allocation2 + $0xf0] sm:$0xff] %vm522, %v2950
        %2983 = vst.msk [vmem:[#allocation2 + $0xf8] sm:$0xff] %vm522, %v2951
        %v2984 = vld [vmem:[%s978] sm:$0xf]
        %v2985 = vld [vmem:[%s978 + $0x4] sm:$0xf]
        %v2986 = vld [vmem:[%s978 + $0x8] sm:$0x1]
        %v2987 = vld [vmem:[%s978 + $0xc] sm:$0xf]
        %v2988 = vld [vmem:[%s978 + $0x10] sm:$0xf]
        %v2989 = vld [vmem:[%s978 + $0x14] sm:$0x1]
        %v2990 = vld [vmem:[%s978 + $0x18] sm:$0xf]
        %v2991 = vld [vmem:[%s978 + $0x1c] sm:$0xf]
        %v2992 = vld [vmem:[%s978 + $0x20] sm:$0x1]
        %v2993 = vld [vmem:[%s978 + $0x24] sm:$0xf]
        %v2994 = vld [vmem:[%s978 + $0x28] sm:$0xf]
        %v2995 = vld [vmem:[%s978 + $0x2c] sm:$0x1]
        %v2996 = vld [vmem:[%s978 + $0x30] sm:$0xf]
        %v2997 = vld [vmem:[%s978 + $0x34] sm:$0xf]
        %v2998 = vld [vmem:[%s978 + $0x38] sm:$0x1]
        %v2999 = vld [vmem:[%s978 + $0x3c] sm:$0xf]
        %v3000 = vld [vmem:[%s978 + $0x40] sm:$0xf]
        %v3001 = vld [vmem:[%s978 + $0x44] sm:$0x1]
        %v3002 = vld [vmem:[%s978 + $0x48] sm:$0xf]
        %v3003 = vld [vmem:[%s978 + $0x4c] sm:$0xf]
        %v3004 = vld [vmem:[%s978 + $0x50] sm:$0x1]
        %v3005 = vld [vmem:[%s978 + $0x54] sm:$0xf]
        %v3006 = vld [vmem:[%s978 + $0x58] sm:$0xf]
        %v3007 = vld [vmem:[%s978 + $0x5c] sm:$0x1]
        %v3008 = vld [vmem:[%s978 + $0x60] sm:$0xf]
        %v3009 = vld [vmem:[%s978 + $0x64] sm:$0xf]
        %v3010 = vld [vmem:[%s978 + $0x68] sm:$0x1]
        %v3011 = vld [vmem:[%s978 + $0x6c] sm:$0xf]
        %v3012 = vld [vmem:[%s978 + $0x70] sm:$0xf]
        %v3013 = vld [vmem:[%s978 + $0x74] sm:$0x1]
        %v3014 = vld [vmem:[%s978 + $0x78] sm:$0xf]
        %v3015 = vld [vmem:[%s978 + $0x7c] sm:$0xf]
        %v3016 = vld [vmem:[%s978 + $0x80] sm:$0x1]
        %v3017 = vld [vmem:[%s978 + $0x84] sm:$0xf]
        %v3018 = vld [vmem:[%s978 + $0x88] sm:$0xf]
        %v3019 = vld [vmem:[%s978 + $0x8c] sm:$0x1]
        %v3020 = vld [vmem:[%s978 + $0x90] sm:$0xf]
        %v3021 = vld [vmem:[%s978 + $0x94] sm:$0xf]
        %v3022 = vld [vmem:[%s978 + $0x98] sm:$0x1]
        %v3023 = vld [vmem:[%s978 + $0x9c] sm:$0xf]
        %v3024 = vld [vmem:[%s978 + $0xa0] sm:$0xf]
        %v3025 = vld [vmem:[%s978 + $0xa4] sm:$0x1]
        %v3026 = vld [vmem:[%s978 + $0xa8] sm:$0xf]
        %v3027 = vld [vmem:[%s978 + $0xac] sm:$0xf]
        %v3028 = vld [vmem:[%s978 + $0xb0] sm:$0x1]
        %v3029 = vld [vmem:[%s978 + $0xb4] sm:$0xf]
        %v3030 = vld [vmem:[%s978 + $0xb8] sm:$0xf]
        %v3031 = vld [vmem:[%s978 + $0xbc] sm:$0x1]
        %v3033 = vshrl.u32 %v2984, 16
        %v3035 = vrot.slane %v3033, 4
        %v3036 = vshll.u32 %v2984, 16
        %v3038 = vrot.slane %v3036, 5
        %v3039 = vor.u32 %v3035, %v3038
        %v3040 = vrot.slane %v3039, 4
        %v3042 = vshll.u32 %v2985, 16
        %v3044 = vrot.slane %v3042, 5
        %v3045 = vsel %vm1451, %v3040, %v3044
        %v3046 = vshrl.u32 %v2985, 16
        %v3048 = vrot.slane %v3046, 4
        %v3049 = vor.u32 %v3048, %v3044
        %v3050 = vrot.slane %v3049, 4
        %v3052 = vshll.u32 %v2986, 16
        %v3054 = vrot.slane %v3052, 5
        %v3055 = vsel %vm1451, %v3050, %v3054
        %v3057 = vshrl.u32 %v2987, 16
        %v3059 = vrot.slane %v3057, 4
        %v3060 = vshll.u32 %v2987, 16
        %v3062 = vrot.slane %v3060, 5
        %v3063 = vor.u32 %v3059, %v3062
        %v3064 = vrot.slane %v3063, 4
        %v3066 = vshll.u32 %v2988, 16
        %v3068 = vrot.slane %v3066, 5
        %v3069 = vsel %vm1451, %v3064, %v3068
        %v3070 = vshrl.u32 %v2988, 16
        %v3072 = vrot.slane %v3070, 4
        %v3073 = vor.u32 %v3072, %v3068
        %v3074 = vrot.slane %v3073, 4
        %v3076 = vshll.u32 %v2989, 16
        %v3078 = vrot.slane %v3076, 5
        %v3079 = vsel %vm1451, %v3074, %v3078
        %v3081 = vshrl.u32 %v2990, 16
        %v3083 = vrot.slane %v3081, 4
        %v3084 = vshll.u32 %v2990, 16
        %v3086 = vrot.slane %v3084, 5
        %v3087 = vor.u32 %v3083, %v3086
        %v3088 = vrot.slane %v3087, 4
        %v3090 = vshll.u32 %v2991, 16
        %v3092 = vrot.slane %v3090, 5
        %v3093 = vsel %vm1451, %v3088, %v3092
        %v3094 = vshrl.u32 %v2991, 16
        %v3096 = vrot.slane %v3094, 4
        %v3097 = vor.u32 %v3096, %v3092
        %v3098 = vrot.slane %v3097, 4
        %v3100 = vshll.u32 %v2992, 16
        %v3102 = vrot.slane %v3100, 5
        %v3103 = vsel %vm1451, %v3098, %v3102
        %v3105 = vshrl.u32 %v2993, 16
        %v3107 = vrot.slane %v3105, 4
        %v3108 = vshll.u32 %v2993, 16
        %v3110 = vrot.slane %v3108, 5
        %v3111 = vor.u32 %v3107, %v3110
        %v3112 = vrot.slane %v3111, 4
        %v3114 = vshll.u32 %v2994, 16
        %v3116 = vrot.slane %v3114, 5
        %v3117 = vsel %vm1451, %v3112, %v3116
        %v3118 = vshrl.u32 %v2994, 16
        %v3120 = vrot.slane %v3118, 4
        %v3121 = vor.u32 %v3120, %v3116
        %v3122 = vrot.slane %v3121, 4
        %v3124 = vshll.u32 %v2995, 16
        %v3126 = vrot.slane %v3124, 5
        %v3127 = vsel %vm1451, %v3122, %v3126
        %v3129 = vshrl.u32 %v2996, 16
        %v3131 = vrot.slane %v3129, 4
        %v3132 = vshll.u32 %v2996, 16
        %v3134 = vrot.slane %v3132, 5
        %v3135 = vor.u32 %v3131, %v3134
        %v3136 = vrot.slane %v3135, 4
        %v3138 = vshll.u32 %v2997, 16
        %v3140 = vrot.slane %v3138, 5
        %v3141 = vsel %vm1451, %v3136, %v3140
        %v3142 = vshrl.u32 %v2997, 16
        %v3144 = vrot.slane %v3142, 4
        %v3145 = vor.u32 %v3144, %v3140
        %v3146 = vrot.slane %v3145, 4
        %v3148 = vshll.u32 %v2998, 16
        %v3150 = vrot.slane %v3148, 5
        %v3151 = vsel %vm1451, %v3146, %v3150
        %v3153 = vshrl.u32 %v2999, 16
        %v3155 = vrot.slane %v3153, 4
        %v3156 = vshll.u32 %v2999, 16
        %v3158 = vrot.slane %v3156, 5
        %v3159 = vor.u32 %v3155, %v3158
        %v3160 = vrot.slane %v3159, 4
        %v3162 = vshll.u32 %v3000, 16
        %v3164 = vrot.slane %v3162, 5
        %v3165 = vsel %vm1451, %v3160, %v3164
        %v3166 = vshrl.u32 %v3000, 16
        %v3168 = vrot.slane %v3166, 4
        %v3169 = vor.u32 %v3168, %v3164
        %v3170 = vrot.slane %v3169, 4
        %v3172 = vshll.u32 %v3001, 16
        %v3174 = vrot.slane %v3172, 5
        %v3175 = vsel %vm1451, %v3170, %v3174
        %v3177 = vshrl.u32 %v3002, 16
        %v3179 = vrot.slane %v3177, 4
        %v3180 = vshll.u32 %v3002, 16
        %v3182 = vrot.slane %v3180, 5
        %v3183 = vor.u32 %v3179, %v3182
        %v3184 = vrot.slane %v3183, 4
        %v3186 = vshll.u32 %v3003, 16
        %v3188 = vrot.slane %v3186, 5
        %v3189 = vsel %vm1451, %v3184, %v3188
        %v3190 = vshrl.u32 %v3003, 16
        %v3192 = vrot.slane %v3190, 4
        %v3193 = vor.u32 %v3192, %v3188
        %v3194 = vrot.slane %v3193, 4
        %v3196 = vshll.u32 %v3004, 16
        %v3198 = vrot.slane %v3196, 5
        %v3199 = vsel %vm1451, %v3194, %v3198
        %v3201 = vshrl.u32 %v3005, 16
        %v3203 = vrot.slane %v3201, 4
        %v3204 = vshll.u32 %v3005, 16
        %v3206 = vrot.slane %v3204, 5
        %v3207 = vor.u32 %v3203, %v3206
        %v3208 = vrot.slane %v3207, 4
        %v3210 = vshll.u32 %v3006, 16
        %v3212 = vrot.slane %v3210, 5
        %v3213 = vsel %vm1451, %v3208, %v3212
        %v3214 = vshrl.u32 %v3006, 16
        %v3216 = vrot.slane %v3214, 4
        %v3217 = vor.u32 %v3216, %v3212
        %v3218 = vrot.slane %v3217, 4
        %v3220 = vshll.u32 %v3007, 16
        %v3222 = vrot.slane %v3220, 5
        %v3223 = vsel %vm1451, %v3218, %v3222
        %v3225 = vshrl.u32 %v3008, 16
        %v3227 = vrot.slane %v3225, 4
        %v3228 = vshll.u32 %v3008, 16
        %v3230 = vrot.slane %v3228, 5
        %v3231 = vor.u32 %v3227, %v3230
        %v3232 = vrot.slane %v3231, 4
        %v3234 = vshll.u32 %v3009, 16
        %v3236 = vrot.slane %v3234, 5
        %v3237 = vsel %vm1451, %v3232, %v3236
        %v3238 = vshrl.u32 %v3009, 16
        %v3240 = vrot.slane %v3238, 4
        %v3241 = vor.u32 %v3240, %v3236
        %v3242 = vrot.slane %v3241, 4
        %v3244 = vshll.u32 %v3010, 16
        %v3246 = vrot.slane %v3244, 5
        %v3247 = vsel %vm1451, %v3242, %v3246
        %v3249 = vshrl.u32 %v3011, 16
        %v3251 = vrot.slane %v3249, 4
        %v3252 = vshll.u32 %v3011, 16
        %v3254 = vrot.slane %v3252, 5
        %v3255 = vor.u32 %v3251, %v3254
        %v3256 = vrot.slane %v3255, 4
        %v3258 = vshll.u32 %v3012, 16
        %v3260 = vrot.slane %v3258, 5
        %v3261 = vsel %vm1451, %v3256, %v3260
        %v3262 = vshrl.u32 %v3012, 16
        %v3264 = vrot.slane %v3262, 4
        %v3265 = vor.u32 %v3264, %v3260
        %v3266 = vrot.slane %v3265, 4
        %v3268 = vshll.u32 %v3013, 16
        %v3270 = vrot.slane %v3268, 5
        %v3271 = vsel %vm1451, %v3266, %v3270
        %v3273 = vshrl.u32 %v3014, 16
        %v3275 = vrot.slane %v3273, 4
        %v3276 = vshll.u32 %v3014, 16
        %v3278 = vrot.slane %v3276, 5
        %v3279 = vor.u32 %v3275, %v3278
        %v3280 = vrot.slane %v3279, 4
        %v3282 = vshll.u32 %v3015, 16
        %v3284 = vrot.slane %v3282, 5
        %v3285 = vsel %vm1451, %v3280, %v3284
        %v3286 = vshrl.u32 %v3015, 16
        %v3288 = vrot.slane %v3286, 4
        %v3289 = vor.u32 %v3288, %v3284
        %v3290 = vrot.slane %v3289, 4
        %v3292 = vshll.u32 %v3016, 16
        %v3294 = vrot.slane %v3292, 5
        %v3295 = vsel %vm1451, %v3290, %v3294
        %v3297 = vshrl.u32 %v3017, 16
        %v3299 = vrot.slane %v3297, 4
        %v3300 = vshll.u32 %v3017, 16
        %v3302 = vrot.slane %v3300, 5
        %v3303 = vor.u32 %v3299, %v3302
        %v3304 = vrot.slane %v3303, 4
        %v3306 = vshll.u32 %v3018, 16
        %v3308 = vrot.slane %v3306, 5
        %v3309 = vsel %vm1451, %v3304, %v3308
        %v3310 = vshrl.u32 %v3018, 16
        %v3312 = vrot.slane %v3310, 4
        %v3313 = vor.u32 %v3312, %v3308
        %v3314 = vrot.slane %v3313, 4
        %v3316 = vshll.u32 %v3019, 16
        %v3318 = vrot.slane %v3316, 5
        %v3319 = vsel %vm1451, %v3314, %v3318
        %v3321 = vshrl.u32 %v3020, 16
        %v3323 = vrot.slane %v3321, 4
        %v3324 = vshll.u32 %v3020, 16
        %v3326 = vrot.slane %v3324, 5
        %v3327 = vor.u32 %v3323, %v3326
        %v3328 = vrot.slane %v3327, 4
        %v3330 = vshll.u32 %v3021, 16
        %v3332 = vrot.slane %v3330, 5
        %v3333 = vsel %vm1451, %v3328, %v3332
        %v3334 = vshrl.u32 %v3021, 16
        %v3336 = vrot.slane %v3334, 4
        %v3337 = vor.u32 %v3336, %v3332
        %v3338 = vrot.slane %v3337, 4
        %v3340 = vshll.u32 %v3022, 16
        %v3342 = vrot.slane %v3340, 5
        %v3343 = vsel %vm1451, %v3338, %v3342
        %v3345 = vshrl.u32 %v3023, 16
        %v3347 = vrot.slane %v3345, 4
        %v3348 = vshll.u32 %v3023, 16
        %v3350 = vrot.slane %v3348, 5
        %v3351 = vor.u32 %v3347, %v3350
        %v3352 = vrot.slane %v3351, 4
        %v3354 = vshll.u32 %v3024, 16
        %v3356 = vrot.slane %v3354, 5
        %v3357 = vsel %vm1451, %v3352, %v3356
        %v3358 = vshrl.u32 %v3024, 16
        %v3360 = vrot.slane %v3358, 4
        %v3361 = vor.u32 %v3360, %v3356
        %v3362 = vrot.slane %v3361, 4
        %v3364 = vshll.u32 %v3025, 16
        %v3366 = vrot.slane %v3364, 5
        %v3367 = vsel %vm1451, %v3362, %v3366
        %v3369 = vshrl.u32 %v3026, 16
        %v3371 = vrot.slane %v3369, 4
        %v3372 = vshll.u32 %v3026, 16
        %v3374 = vrot.slane %v3372, 5
        %v3375 = vor.u32 %v3371, %v3374
        %v3376 = vrot.slane %v3375, 4
        %v3378 = vshll.u32 %v3027, 16
        %v3380 = vrot.slane %v3378, 5
        %v3381 = vsel %vm1451, %v3376, %v3380
        %v3382 = vshrl.u32 %v3027, 16
        %v3384 = vrot.slane %v3382, 4
        %v3385 = vor.u32 %v3384, %v3380
        %v3386 = vrot.slane %v3385, 4
        %v3388 = vshll.u32 %v3028, 16
        %v3390 = vrot.slane %v3388, 5
        %v3391 = vsel %vm1451, %v3386, %v3390
        %v3393 = vshrl.u32 %v3029, 16
        %v3395 = vrot.slane %v3393, 4
        %v3396 = vshll.u32 %v3029, 16
        %v3398 = vrot.slane %v3396, 5
        %v3399 = vor.u32 %v3395, %v3398
        %v3400 = vrot.slane %v3399, 4
        %v3402 = vshll.u32 %v3030, 16
        %v3404 = vrot.slane %v3402, 5
        %v3405 = vsel %vm1451, %v3400, %v3404
        %v3406 = vshrl.u32 %v3030, 16
        %v3408 = vrot.slane %v3406, 4
        %v3409 = vor.u32 %v3408, %v3404
        %v3410 = vrot.slane %v3409, 4
        %v3412 = vshll.u32 %v3031, 16
        %v3414 = vrot.slane %v3412, 5
        %v3415 = vsel %vm1451, %v3410, %v3414
        %s3416 = scalar_lea.vmem %s1, 14
        %v3417 = vld [vmem:[%s3416] sm:$0x3]
        %v3418 = vunpack.c.l.b16 %v3045
        %v3419 = vunpack.c.l.b16 %v3055
        %v3420 = vunpack.c.l.b16 %v3069
        %v3421 = vunpack.c.l.b16 %v3079
        %v3422 = vunpack.c.l.b16 %v3093
        %v3423 = vunpack.c.l.b16 %v3103
        %v3424 = vunpack.c.l.b16 %v3117
        %v3425 = vunpack.c.l.b16 %v3127
        %v3426 = vunpack.c.l.b16 %v3141
        %v3427 = vunpack.c.l.b16 %v3151
        %v3428 = vunpack.c.l.b16 %v3165
        %v3429 = vunpack.c.l.b16 %v3175
        %v3430 = vunpack.c.l.b16 %v3189
        %v3431 = vunpack.c.l.b16 %v3199
        %v3432 = vunpack.c.l.b16 %v3213
        %v3433 = vunpack.c.l.b16 %v3223
        %v3434 = vunpack.c.l.b16 %v3237
        %v3435 = vunpack.c.l.b16 %v3247
        %v3436 = vunpack.c.l.b16 %v3261
        %v3437 = vunpack.c.l.b16 %v3271
        %v3438 = vunpack.c.l.b16 %v3285
        %v3439 = vunpack.c.l.b16 %v3295
        %v3440 = vunpack.c.l.b16 %v3309
        %v3441 = vunpack.c.l.b16 %v3319
        %v3442 = vunpack.c.l.b16 %v3333
        %v3443 = vunpack.c.l.b16 %v3343
        %v3444 = vunpack.c.l.b16 %v3357
        %v3445 = vunpack.c.l.b16 %v3367
        %v3446 = vunpack.c.l.b16 %v3381
        %v3447 = vunpack.c.l.b16 %v3391
        %v3448 = vunpack.c.l.b16 %v3405
        %v3449 = vunpack.c.l.b16 %v3415
        %v3450 = vpack.c.b16 %v3419, %v3418
        %v3451 = vpack.c.b16 %v3421, %v3420
        %v3452 = vpack.c.b16 %v3423, %v3422
        %v3453 = vpack.c.b16 %v3425, %v3424
        %v3454 = vpack.c.b16 %v3427, %v3426
        %v3455 = vpack.c.b16 %v3429, %v3428
        %v3456 = vpack.c.b16 %v3431, %v3430
        %v3457 = vpack.c.b16 %v3433, %v3432
        %v3458 = vpack.c.b16 %v3435, %v3434
        %v3459 = vpack.c.b16 %v3437, %v3436
        %v3460 = vpack.c.b16 %v3439, %v3438
        %v3461 = vpack.c.b16 %v3441, %v3440
        %v3462 = vpack.c.b16 %v3443, %v3442
        %v3463 = vpack.c.b16 %v3445, %v3444
        %v3464 = vpack.c.b16 %v3447, %v3446
        %v3465 = vpack.c.b16 %v3449, %v3448
        %v3467 = vsel %vm305, %v3450, 0
        %v3470 = vsel %vm305, %v3451, 0
        %v3473 = vsel %vm305, %v3452, 0
        %v3476 = vsel %vm305, %v3453, 0
        %v3479 = vsel %vm305, %v3454, 0
        %v3482 = vsel %vm305, %v3455, 0
        %v3485 = vsel %vm305, %v3456, 0
        %v3488 = vsel %vm305, %v3457, 0
        %v3491 = vsel %vm305, %v3458, 0
        %v3494 = vsel %vm305, %v3459, 0
        %v3497 = vsel %vm305, %v3460, 0
        %v3500 = vsel %vm305, %v3461, 0
        %v3503 = vsel %vm305, %v3462, 0
        %v3506 = vsel %vm305, %v3463, 0
        %v3509 = vsel %vm305, %v3464, 0
        %v3512 = vsel %vm305, %v3465, 0
        %v3515 = vand.u32 %v3417, %v357
        %3517 = vmatprep.subr.bf16.mxu0 0
        %3518 = vmatpush1.bf16.msra.mxu0 0
        %3519 = vmatprep.subr.bf16.mxu0 0
        %3520 = vmatpush1.bf16.msra.mxu0 0
        %3521 = vmatprep.subr.bf16.mxu0 0
        %3522 = vmatpush1.bf16.msra.mxu0 0
        %3523 = vmatprep.subr.bf16.mxu0 0
        %3524 = vmatpush1.bf16.msra.mxu0 0
        %3525 = vmatprep.subr.bf16.mxu0 0
        %3526 = vmatpush1.bf16.msra.mxu0 0
        %3527 = vmatprep.subr.bf16.mxu0 0
        %3528 = vmatpush1.bf16.msra.mxu0 0
        %3529 = vmatprep.subr.bf16.mxu0 0
        %3530 = vmatpush1.bf16.msra.mxu0 0
        %3531 = vmatprep.subr.bf16.mxu0 0
        %3532 = vmatpush1.bf16.msra.mxu0 %v3515
        %3533 = vmatprep.subr.bf16.mxu0 0
        %3534 = vmatpush2.bf16.msra.mxu0 0
        %3535 = vmatprep.subr.bf16.mxu0 0
        %3536 = vmatpush2.bf16.msra.mxu0 0
        %3537 = vmatprep.subr.bf16.mxu0 0
        %3538 = vmatpush2.bf16.msra.mxu0 0
        %3539 = vmatprep.subr.bf16.mxu0 0
        %3540 = vmatpush2.bf16.msra.mxu0 0
        %3541 = vmatprep.subr.bf16.mxu0 0
        %3542 = vmatpush2.bf16.msra.mxu0 0
        %3543 = vmatprep.subr.bf16.mxu0 0
        %3544 = vmatpush2.bf16.msra.mxu0 0
        %3545 = vmatprep.subr.bf16.mxu0 0
        %3546 = vmatpush2.bf16.msra.mxu0 0
        %3547 = vmatprep.subr.bf16.mxu0 0
        %3548 = vmatpush2.bf16.msra.mxu0 0
        %3549 = vmatprep.mubr.bf16.mxu0 0
        %3550 = vmatmul.mubr.bf16.gmra.mxu0 %v3467
        %v3551 = vpop.f32.mrf.mxu0
        %v3552 = vadd.f32 0.0, %v3551
        %v3553 = vpop.f32.mrf.mxu0
        %v3554 = vpop.f32.mrf.mxu0
        %v3555 = vadd.f32 0.0, %v3554
        %v3556 = vpop.f32.mrf.mxu0
        %3557 = vmatprep.mubr.bf16.mxu0 0
        %3558 = vmatmul.mubr.bf16.gmra.mxu0 %v3470
        %v3559 = vpop.f32.mrf.mxu0
        %v3560 = vadd.f32 0.0, %v3559
        %v3561 = vpop.f32.mrf.mxu0
        %v3562 = vpop.f32.mrf.mxu0
        %v3563 = vadd.f32 0.0, %v3562
        %v3564 = vpop.f32.mrf.mxu0
        %3565 = vmatprep.mubr.bf16.mxu0 0
        %3566 = vmatmul.mubr.bf16.gmra.mxu0 %v3473
        %v3567 = vpop.f32.mrf.mxu0
        %v3568 = vadd.f32 0.0, %v3567
        %v3569 = vpop.f32.mrf.mxu0
        %v3570 = vpop.f32.mrf.mxu0
        %v3571 = vadd.f32 0.0, %v3570
        %v3572 = vpop.f32.mrf.mxu0
        %3573 = vmatprep.mubr.bf16.mxu0 0
        %3574 = vmatmul.mubr.bf16.gmra.mxu0 %v3476
        %v3575 = vpop.f32.mrf.mxu0
        %v3576 = vadd.f32 0.0, %v3575
        %v3577 = vpop.f32.mrf.mxu0
        %v3578 = vpop.f32.mrf.mxu0
        %v3579 = vadd.f32 0.0, %v3578
        %v3580 = vpop.f32.mrf.mxu0
        %3581 = vmatprep.mubr.bf16.mxu0 0
        %3582 = vmatmul.mubr.bf16.gmra.mxu0 %v3479
        %v3583 = vpop.f32.mrf.mxu0
        %v3584 = vadd.f32 0.0, %v3583
        %v3585 = vpop.f32.mrf.mxu0
        %v3586 = vpop.f32.mrf.mxu0
        %v3587 = vadd.f32 0.0, %v3586
        %v3588 = vpop.f32.mrf.mxu0
        %3589 = vmatprep.mubr.bf16.mxu0 0
        %3590 = vmatmul.mubr.bf16.gmra.mxu0 %v3482
        %v3591 = vpop.f32.mrf.mxu0
        %v3592 = vadd.f32 0.0, %v3591
        %v3593 = vpop.f32.mrf.mxu0
        %v3594 = vpop.f32.mrf.mxu0
        %v3595 = vadd.f32 0.0, %v3594
        %v3596 = vpop.f32.mrf.mxu0
        %3597 = vmatprep.mubr.bf16.mxu0 0
        %3598 = vmatmul.mubr.bf16.gmra.mxu0 %v3485
        %v3599 = vpop.f32.mrf.mxu0
        %v3600 = vadd.f32 0.0, %v3599
        %v3601 = vpop.f32.mrf.mxu0
        %v3602 = vpop.f32.mrf.mxu0
        %v3603 = vadd.f32 0.0, %v3602
        %v3604 = vpop.f32.mrf.mxu0
        %3605 = vmatprep.mubr.bf16.mxu0 0
        %3606 = vmatmul.mubr.bf16.gmra.mxu0 %v3488
        %v3607 = vpop.f32.mrf.mxu0
        %v3608 = vadd.f32 0.0, %v3607
        %v3609 = vpop.f32.mrf.mxu0
        %v3610 = vpop.f32.mrf.mxu0
        %v3611 = vadd.f32 0.0, %v3610
        %v3612 = vpop.f32.mrf.mxu0
        %3613 = vmatprep.mubr.bf16.mxu0 0
        %3614 = vmatmul.mubr.bf16.gmra.mxu0 %v3491
        %v3615 = vpop.f32.mrf.mxu0
        %v3616 = vadd.f32 0.0, %v3615
        %v3617 = vpop.f32.mrf.mxu0
        %v3618 = vpop.f32.mrf.mxu0
        %v3619 = vadd.f32 0.0, %v3618
        %v3620 = vpop.f32.mrf.mxu0
        %3621 = vmatprep.mubr.bf16.mxu0 0
        %3622 = vmatmul.mubr.bf16.gmra.mxu0 %v3494
        %v3623 = vpop.f32.mrf.mxu0
        %v3624 = vadd.f32 0.0, %v3623
        %v3625 = vpop.f32.mrf.mxu0
        %v3626 = vpop.f32.mrf.mxu0
        %v3627 = vadd.f32 0.0, %v3626
        %v3628 = vpop.f32.mrf.mxu0
        %3629 = vmatprep.mubr.bf16.mxu0 0
        %3630 = vmatmul.mubr.bf16.gmra.mxu0 %v3497
        %v3631 = vpop.f32.mrf.mxu0
        %v3632 = vadd.f32 0.0, %v3631
        %v3633 = vpop.f32.mrf.mxu0
        %v3634 = vpop.f32.mrf.mxu0
        %v3635 = vadd.f32 0.0, %v3634
        %v3636 = vpop.f32.mrf.mxu0
        %3637 = vmatprep.mubr.bf16.mxu0 0
        %3638 = vmatmul.mubr.bf16.gmra.mxu0 %v3500
        %v3639 = vpop.f32.mrf.mxu0
        %v3640 = vadd.f32 0.0, %v3639
        %v3641 = vpop.f32.mrf.mxu0
        %v3642 = vpop.f32.mrf.mxu0
        %v3643 = vadd.f32 0.0, %v3642
        %v3644 = vpop.f32.mrf.mxu0
        %3645 = vmatprep.mubr.bf16.mxu0 0
        %3646 = vmatmul.mubr.bf16.gmra.mxu0 %v3503
        %v3647 = vpop.f32.mrf.mxu0
        %v3648 = vadd.f32 0.0, %v3647
        %v3649 = vpop.f32.mrf.mxu0
        %v3650 = vpop.f32.mrf.mxu0
        %v3651 = vadd.f32 0.0, %v3650
        %v3652 = vpop.f32.mrf.mxu0
        %3653 = vmatprep.mubr.bf16.mxu0 0
        %3654 = vmatmul.mubr.bf16.gmra.mxu0 %v3506
        %v3655 = vpop.f32.mrf.mxu0
        %v3656 = vadd.f32 0.0, %v3655
        %v3657 = vpop.f32.mrf.mxu0
        %v3658 = vpop.f32.mrf.mxu0
        %v3659 = vadd.f32 0.0, %v3658
        %v3660 = vpop.f32.mrf.mxu0
        %3661 = vmatprep.mubr.bf16.mxu0 0
        %3662 = vmatmul.mubr.bf16.gmra.mxu0 %v3509
        %v3663 = vpop.f32.mrf.mxu0
        %v3664 = vadd.f32 0.0, %v3663
        %v3665 = vpop.f32.mrf.mxu0
        %v3666 = vpop.f32.mrf.mxu0
        %v3667 = vadd.f32 0.0, %v3666
        %v3668 = vpop.f32.mrf.mxu0
        %3669 = vmatprep.mubr.bf16.mxu0 0
        %3670 = vmatmul.mubr.bf16.gmra.mxu0 %v3512
        %v3671 = vpop.f32.mrf.mxu0
        %v3672 = vadd.f32 0.0, %v3671
        %v3673 = vpop.f32.mrf.mxu0
        %v3674 = vpop.f32.mrf.mxu0
        %v3675 = vadd.f32 0.0, %v3674
        %v3676 = vpop.f32.mrf.mxu0
        %3677 = vdwg.mxu0
        %v3678 = vld [vmem:[#allocation2] sm:$0xff]
        %v3679 = vld [vmem:[#allocation2 + $0x8] sm:$0xff]
        %v3680 = vld [vmem:[#allocation2 + $0x10] sm:$0xff]
        %v3681 = vld [vmem:[#allocation2 + $0x18] sm:$0xff]
        %v3682 = vld [vmem:[#allocation2 + $0x20] sm:$0xff]
        %v3683 = vld [vmem:[#allocation2 + $0x28] sm:$0xff]
        %v3684 = vld [vmem:[#allocation2 + $0x30] sm:$0xff]
        %v3685 = vld [vmem:[#allocation2 + $0x38] sm:$0xff]
        %v3686 = vld [vmem:[#allocation2 + $0x40] sm:$0xff]
        %v3687 = vld [vmem:[#allocation2 + $0x48] sm:$0xff]
        %v3688 = vld [vmem:[#allocation2 + $0x50] sm:$0xff]
        %v3689 = vld [vmem:[#allocation2 + $0x58] sm:$0xff]
        %v3690 = vld [vmem:[#allocation2 + $0x60] sm:$0xff]
        %v3691 = vld [vmem:[#allocation2 + $0x68] sm:$0xff]
        %v3692 = vld [vmem:[#allocation2 + $0x70] sm:$0xff]
        %v3693 = vld [vmem:[#allocation2 + $0x78] sm:$0xff]
        %v3694 = vld [vmem:[#allocation2 + $0x80] sm:$0xff]
        %v3695 = vld [vmem:[#allocation2 + $0x88] sm:$0xff]
        %v3696 = vld [vmem:[#allocation2 + $0x90] sm:$0xff]
        %v3697 = vld [vmem:[#allocation2 + $0x98] sm:$0xff]
        %v3698 = vld [vmem:[#allocation2 + $0xa0] sm:$0xff]
        %v3699 = vld [vmem:[#allocation2 + $0xa8] sm:$0xff]
        %v3700 = vld [vmem:[#allocation2 + $0xb0] sm:$0xff]
        %v3701 = vld [vmem:[#allocation2 + $0xb8] sm:$0xff]
        %v3702 = vld [vmem:[#allocation2 + $0xc0] sm:$0xff]
        %v3703 = vld [vmem:[#allocation2 + $0xc8] sm:$0xff]
        %v3704 = vld [vmem:[#allocation2 + $0xd0] sm:$0xff]
        %v3705 = vld [vmem:[#allocation2 + $0xd8] sm:$0xff]
        %v3706 = vld [vmem:[#allocation2 + $0xe0] sm:$0xff]
        %v3707 = vld [vmem:[#allocation2 + $0xe8] sm:$0xff]
        %v3708 = vld [vmem:[#allocation2 + $0xf0] sm:$0xff]
        %v3709 = vld [vmem:[#allocation2 + $0xf8] sm:$0xff]
        %v3710 = vadd.f32 %v3678, %v3552
        %v3711 = vadd.f32 %v3679, %v3555
        %v3712 = vadd.f32 %v3680, %v3560
        %v3713 = vadd.f32 %v3681, %v3563
        %v3714 = vadd.f32 %v3682, %v3568
        %v3715 = vadd.f32 %v3683, %v3571
        %v3716 = vadd.f32 %v3684, %v3576
        %v3717 = vadd.f32 %v3685, %v3579
        %v3718 = vadd.f32 %v3686, %v3584
        %v3719 = vadd.f32 %v3687, %v3587
        %v3720 = vadd.f32 %v3688, %v3592
        %v3721 = vadd.f32 %v3689, %v3595
        %v3722 = vadd.f32 %v3690, %v3600
        %v3723 = vadd.f32 %v3691, %v3603
        %v3724 = vadd.f32 %v3692, %v3608
        %v3725 = vadd.f32 %v3693, %v3611
        %v3726 = vadd.f32 %v3694, %v3616
        %v3727 = vadd.f32 %v3695, %v3619
        %v3728 = vadd.f32 %v3696, %v3624
        %v3729 = vadd.f32 %v3697, %v3627
        %v3730 = vadd.f32 %v3698, %v3632
        %v3731 = vadd.f32 %v3699, %v3635
        %v3732 = vadd.f32 %v3700, %v3640
        %v3733 = vadd.f32 %v3701, %v3643
        %v3734 = vadd.f32 %v3702, %v3648
        %v3735 = vadd.f32 %v3703, %v3651
        %v3736 = vadd.f32 %v3704, %v3656
        %v3737 = vadd.f32 %v3705, %v3659
        %v3738 = vadd.f32 %v3706, %v3664
        %v3739 = vadd.f32 %v3707, %v3667
        %v3740 = vadd.f32 %v3708, %v3672
        %v3741 = vadd.f32 %v3709, %v3675
        %3742 = vst.msk [vmem:[#allocation2] sm:$0xff] %vm522, %v3710
        %3743 = vst.msk [vmem:[#allocation2 + $0x8] sm:$0xff] %vm522, %v3711
        %3744 = vst.msk [vmem:[#allocation2 + $0x10] sm:$0xff] %vm522, %v3712
        %3745 = vst.msk [vmem:[#allocation2 + $0x18] sm:$0xff] %vm522, %v3713
        %3746 = vst.msk [vmem:[#allocation2 + $0x20] sm:$0xff] %vm522, %v3714
        %3747 = vst.msk [vmem:[#allocation2 + $0x28] sm:$0xff] %vm522, %v3715
        %3748 = vst.msk [vmem:[#allocation2 + $0x30] sm:$0xff] %vm522, %v3716
        %3749 = vst.msk [vmem:[#allocation2 + $0x38] sm:$0xff] %vm522, %v3717
        %3750 = vst.msk [vmem:[#allocation2 + $0x40] sm:$0xff] %vm522, %v3718
        %3751 = vst.msk [vmem:[#allocation2 + $0x48] sm:$0xff] %vm522, %v3719
        %3752 = vst.msk [vmem:[#allocation2 + $0x50] sm:$0xff] %vm522, %v3720
        %3753 = vst.msk [vmem:[#allocation2 + $0x58] sm:$0xff] %vm522, %v3721
        %3754 = vst.msk [vmem:[#allocation2 + $0x60] sm:$0xff] %vm522, %v3722
        %3755 = vst.msk [vmem:[#allocation2 + $0x68] sm:$0xff] %vm522, %v3723
        %3756 = vst.msk [vmem:[#allocation2 + $0x70] sm:$0xff] %vm522, %v3724
        %3757 = vst.msk [vmem:[#allocation2 + $0x78] sm:$0xff] %vm522, %v3725
        %3758 = vst.msk [vmem:[#allocation2 + $0x80] sm:$0xff] %vm522, %v3726
        %3759 = vst.msk [vmem:[#allocation2 + $0x88] sm:$0xff] %vm522, %v3727
        %3760 = vst.msk [vmem:[#allocation2 + $0x90] sm:$0xff] %vm522, %v3728
        %3761 = vst.msk [vmem:[#allocation2 + $0x98] sm:$0xff] %vm522, %v3729
        %3762 = vst.msk [vmem:[#allocation2 + $0xa0] sm:$0xff] %vm522, %v3730
        %3763 = vst.msk [vmem:[#allocation2 + $0xa8] sm:$0xff] %vm522, %v3731
        %3764 = vst.msk [vmem:[#allocation2 + $0xb0] sm:$0xff] %vm522, %v3732
        %3765 = vst.msk [vmem:[#allocation2 + $0xb8] sm:$0xff] %vm522, %v3733
        %3766 = vst.msk [vmem:[#allocation2 + $0xc0] sm:$0xff] %vm522, %v3734
        %3767 = vst.msk [vmem:[#allocation2 + $0xc8] sm:$0xff] %vm522, %v3735
        %3768 = vst.msk [vmem:[#allocation2 + $0xd0] sm:$0xff] %vm522, %v3736
        %3769 = vst.msk [vmem:[#allocation2 + $0xd8] sm:$0xff] %vm522, %v3737
        %3770 = vst.msk [vmem:[#allocation2 + $0xe0] sm:$0xff] %vm522, %v3738
        %3771 = vst.msk [vmem:[#allocation2 + $0xe8] sm:$0xff] %vm522, %v3739
        %3772 = vst.msk [vmem:[#allocation2 + $0xf0] sm:$0xff] %vm522, %v3740
        %3773 = vst.msk [vmem:[#allocation2 + $0xf8] sm:$0xff] %vm522, %v3741
        %v3774 = vld [vmem:[%s188] sm:$0xe]
        %v3775 = vld [vmem:[%s188 + $0x4] sm:$0xf]
        %v3776 = vld [vmem:[%s188 + $0x8] sm:$0x1]
        %v3777 = vld [vmem:[%s188 + $0xc] sm:$0xe]
        %v3778 = vld [vmem:[%s188 + $0x10] sm:$0xf]
        %v3779 = vld [vmem:[%s188 + $0x14] sm:$0x1]
        %v3780 = vld [vmem:[%s188 + $0x18] sm:$0xe]
        %v3781 = vld [vmem:[%s188 + $0x1c] sm:$0xf]
        %v3782 = vld [vmem:[%s188 + $0x20] sm:$0x1]
        %v3783 = vld [vmem:[%s188 + $0x24] sm:$0xe]
        %v3784 = vld [vmem:[%s188 + $0x28] sm:$0xf]
        %v3785 = vld [vmem:[%s188 + $0x2c] sm:$0x1]
        %v3786 = vld [vmem:[%s188 + $0x30] sm:$0xe]
        %v3787 = vld [vmem:[%s188 + $0x34] sm:$0xf]
        %v3788 = vld [vmem:[%s188 + $0x38] sm:$0x1]
        %v3789 = vld [vmem:[%s188 + $0x3c] sm:$0xe]
        %v3790 = vld [vmem:[%s188 + $0x40] sm:$0xf]
        %v3791 = vld [vmem:[%s188 + $0x44] sm:$0x1]
        %v3792 = vld [vmem:[%s188 + $0x48] sm:$0xe]
        %v3793 = vld [vmem:[%s188 + $0x4c] sm:$0xf]
        %v3794 = vld [vmem:[%s188 + $0x50] sm:$0x1]
        %v3795 = vld [vmem:[%s188 + $0x54] sm:$0xe]
        %v3796 = vld [vmem:[%s188 + $0x58] sm:$0xf]
        %v3797 = vld [vmem:[%s188 + $0x5c] sm:$0x1]
        %v3798 = vld [vmem:[%s188 + $0x60] sm:$0xe]
        %v3799 = vld [vmem:[%s188 + $0x64] sm:$0xf]
        %v3800 = vld [vmem:[%s188 + $0x68] sm:$0x1]
        %v3801 = vld [vmem:[%s188 + $0x6c] sm:$0xe]
        %v3802 = vld [vmem:[%s188 + $0x70] sm:$0xf]
        %v3803 = vld [vmem:[%s188 + $0x74] sm:$0x1]
        %v3804 = vld [vmem:[%s188 + $0x78] sm:$0xe]
        %v3805 = vld [vmem:[%s188 + $0x7c] sm:$0xf]
        %v3806 = vld [vmem:[%s188 + $0x80] sm:$0x1]
        %v3807 = vld [vmem:[%s188 + $0x84] sm:$0xe]
        %v3808 = vld [vmem:[%s188 + $0x88] sm:$0xf]
        %v3809 = vld [vmem:[%s188 + $0x8c] sm:$0x1]
        %v3810 = vld [vmem:[%s188 + $0x90] sm:$0xe]
        %v3811 = vld [vmem:[%s188 + $0x94] sm:$0xf]
        %v3812 = vld [vmem:[%s188 + $0x98] sm:$0x1]
        %v3813 = vld [vmem:[%s188 + $0x9c] sm:$0xe]
        %v3814 = vld [vmem:[%s188 + $0xa0] sm:$0xf]
        %v3815 = vld [vmem:[%s188 + $0xa4] sm:$0x1]
        %v3816 = vld [vmem:[%s188 + $0xa8] sm:$0xe]
        %v3817 = vld [vmem:[%s188 + $0xac] sm:$0xf]
        %v3818 = vld [vmem:[%s188 + $0xb0] sm:$0x1]
        %v3819 = vld [vmem:[%s188 + $0xb4] sm:$0xe]
        %v3820 = vld [vmem:[%s188 + $0xb8] sm:$0xf]
        %v3821 = vld [vmem:[%s188 + $0xbc] sm:$0x1]
        %vm3870 = vcmask 1042432
        %vm3871 = vcmask 1046532
        %vm3872 = vmor %vm3870, %vm3871
        %v3873 = vrot.slane %v3774, 5
        %v3874 = vrot.slane %v3873, 4
        %v3875 = vrot.slane %v3775, 5
        %v3876 = vsel %vm3872, %v3874, %v3875
        %v3877 = vrot.slane %v3875, 4
        %v3878 = vrot.slane %v3776, 5
        %v3879 = vsel %vm3872, %v3877, %v3878
        %v3880 = vrot.slane %v3777, 5
        %v3881 = vrot.slane %v3880, 4
        %v3882 = vrot.slane %v3778, 5
        %v3883 = vsel %vm3872, %v3881, %v3882
        %v3884 = vrot.slane %v3882, 4
        %v3885 = vrot.slane %v3779, 5
        %v3886 = vsel %vm3872, %v3884, %v3885
        %v3887 = vrot.slane %v3780, 5
        %v3888 = vrot.slane %v3887, 4
        %v3889 = vrot.slane %v3781, 5
        %v3890 = vsel %vm3872, %v3888, %v3889
        %v3891 = vrot.slane %v3889, 4
        %v3892 = vrot.slane %v3782, 5
        %v3893 = vsel %vm3872, %v3891, %v3892
        %v3894 = vrot.slane %v3783, 5
        %v3895 = vrot.slane %v3894, 4
        %v3896 = vrot.slane %v3784, 5
        %v3897 = vsel %vm3872, %v3895, %v3896
        %v3898 = vrot.slane %v3896, 4
        %v3899 = vrot.slane %v3785, 5
        %v3900 = vsel %vm3872, %v3898, %v3899
        %v3901 = vrot.slane %v3786, 5
        %v3902 = vrot.slane %v3901, 4
        %v3903 = vrot.slane %v3787, 5
        %v3904 = vsel %vm3872, %v3902, %v3903
        %v3905 = vrot.slane %v3903, 4
        %v3906 = vrot.slane %v3788, 5
        %v3907 = vsel %vm3872, %v3905, %v3906
        %v3908 = vrot.slane %v3789, 5
        %v3909 = vrot.slane %v3908, 4
        %v3910 = vrot.slane %v3790, 5
        %v3911 = vsel %vm3872, %v3909, %v3910
        %v3912 = vrot.slane %v3910, 4
        %v3913 = vrot.slane %v3791, 5
        %v3914 = vsel %vm3872, %v3912, %v3913
        %v3915 = vrot.slane %v3792, 5
        %v3916 = vrot.slane %v3915, 4
        %v3917 = vrot.slane %v3793, 5
        %v3918 = vsel %vm3872, %v3916, %v3917
        %v3919 = vrot.slane %v3917, 4
        %v3920 = vrot.slane %v3794, 5
        %v3921 = vsel %vm3872, %v3919, %v3920
        %v3922 = vrot.slane %v3795, 5
        %v3923 = vrot.slane %v3922, 4
        %v3924 = vrot.slane %v3796, 5
        %v3925 = vsel %vm3872, %v3923, %v3924
        %v3926 = vrot.slane %v3924, 4
        %v3927 = vrot.slane %v3797, 5
        %v3928 = vsel %vm3872, %v3926, %v3927
        %v3929 = vrot.slane %v3798, 5
        %v3930 = vrot.slane %v3929, 4
        %v3931 = vrot.slane %v3799, 5
        %v3932 = vsel %vm3872, %v3930, %v3931
        %v3933 = vrot.slane %v3931, 4
        %v3934 = vrot.slane %v3800, 5
        %v3935 = vsel %vm3872, %v3933, %v3934
        %v3936 = vrot.slane %v3801, 5
        %v3937 = vrot.slane %v3936, 4
        %v3938 = vrot.slane %v3802, 5
        %v3939 = vsel %vm3872, %v3937, %v3938
        %v3940 = vrot.slane %v3938, 4
        %v3941 = vrot.slane %v3803, 5
        %v3942 = vsel %vm3872, %v3940, %v3941
        %v3943 = vrot.slane %v3804, 5
        %v3944 = vrot.slane %v3943, 4
        %v3945 = vrot.slane %v3805, 5
        %v3946 = vsel %vm3872, %v3944, %v3945
        %v3947 = vrot.slane %v3945, 4
        %v3948 = vrot.slane %v3806, 5
        %v3949 = vsel %vm3872, %v3947, %v3948
        %v3950 = vrot.slane %v3807, 5
        %v3951 = vrot.slane %v3950, 4
        %v3952 = vrot.slane %v3808, 5
        %v3953 = vsel %vm3872, %v3951, %v3952
        %v3954 = vrot.slane %v3952, 4
        %v3955 = vrot.slane %v3809, 5
        %v3956 = vsel %vm3872, %v3954, %v3955
        %v3957 = vrot.slane %v3810, 5
        %v3958 = vrot.slane %v3957, 4
        %v3959 = vrot.slane %v3811, 5
        %v3960 = vsel %vm3872, %v3958, %v3959
        %v3961 = vrot.slane %v3959, 4
        %v3962 = vrot.slane %v3812, 5
        %v3963 = vsel %vm3872, %v3961, %v3962
        %v3964 = vrot.slane %v3813, 5
        %v3965 = vrot.slane %v3964, 4
        %v3966 = vrot.slane %v3814, 5
        %v3967 = vsel %vm3872, %v3965, %v3966
        %v3968 = vrot.slane %v3966, 4
        %v3969 = vrot.slane %v3815, 5
        %v3970 = vsel %vm3872, %v3968, %v3969
        %v3971 = vrot.slane %v3816, 5
        %v3972 = vrot.slane %v3971, 4
        %v3973 = vrot.slane %v3817, 5
        %v3974 = vsel %vm3872, %v3972, %v3973
        %v3975 = vrot.slane %v3973, 4
        %v3976 = vrot.slane %v3818, 5
        %v3977 = vsel %vm3872, %v3975, %v3976
        %v3978 = vrot.slane %v3819, 5
        %v3979 = vrot.slane %v3978, 4
        %v3980 = vrot.slane %v3820, 5
        %v3981 = vsel %vm3872, %v3979, %v3980
        %v3982 = vrot.slane %v3980, 4
        %v3983 = vrot.slane %v3821, 5
        %v3984 = vsel %vm3872, %v3982, %v3983
        %s3985 = scalar_lea.vmem %s1, 4
        %v3986 = vld [vmem:[%s3985] sm:$0x3]
        %v3987 = vunpack.c.l.b16 %v3876
        %v3988 = vunpack.c.l.b16 %v3879
        %v3989 = vunpack.c.l.b16 %v3883
        %v3990 = vunpack.c.l.b16 %v3886
        %v3991 = vunpack.c.l.b16 %v3890
        %v3992 = vunpack.c.l.b16 %v3893
        %v3993 = vunpack.c.l.b16 %v3897
        %v3994 = vunpack.c.l.b16 %v3900
        %v3995 = vunpack.c.l.b16 %v3904
        %v3996 = vunpack.c.l.b16 %v3907
        %v3997 = vunpack.c.l.b16 %v3911
        %v3998 = vunpack.c.l.b16 %v3914
        %v3999 = vunpack.c.l.b16 %v3918
        %v4000 = vunpack.c.l.b16 %v3921
        %v4001 = vunpack.c.l.b16 %v3925
        %v4002 = vunpack.c.l.b16 %v3928
        %v4003 = vunpack.c.l.b16 %v3932
        %v4004 = vunpack.c.l.b16 %v3935
        %v4005 = vunpack.c.l.b16 %v3939
        %v4006 = vunpack.c.l.b16 %v3942
        %v4007 = vunpack.c.l.b16 %v3946
        %v4008 = vunpack.c.l.b16 %v3949
        %v4009 = vunpack.c.l.b16 %v3953
        %v4010 = vunpack.c.l.b16 %v3956
        %v4011 = vunpack.c.l.b16 %v3960
        %v4012 = vunpack.c.l.b16 %v3963
        %v4013 = vunpack.c.l.b16 %v3967
        %v4014 = vunpack.c.l.b16 %v3970
        %v4015 = vunpack.c.l.b16 %v3974
        %v4016 = vunpack.c.l.b16 %v3977
        %v4017 = vunpack.c.l.b16 %v3981
        %v4018 = vunpack.c.l.b16 %v3984
        %v4019 = vpack.c.b16 %v3988, %v3987
        %v4020 = vpack.c.b16 %v3990, %v3989
        %v4021 = vpack.c.b16 %v3992, %v3991
        %v4022 = vpack.c.b16 %v3994, %v3993
        %v4023 = vpack.c.b16 %v3996, %v3995
        %v4024 = vpack.c.b16 %v3998, %v3997
        %v4025 = vpack.c.b16 %v4000, %v3999
        %v4026 = vpack.c.b16 %v4002, %v4001
        %v4027 = vpack.c.b16 %v4004, %v4003
        %v4028 = vpack.c.b16 %v4006, %v4005
        %v4029 = vpack.c.b16 %v4008, %v4007
        %v4030 = vpack.c.b16 %v4010, %v4009
        %v4031 = vpack.c.b16 %v4012, %v4011
        %v4032 = vpack.c.b16 %v4014, %v4013
        %v4033 = vpack.c.b16 %v4016, %v4015
        %v4034 = vpack.c.b16 %v4018, %v4017
        %v4036 = vsel %vm305, %v4019, 0
        %v4039 = vsel %vm305, %v4020, 0
        %v4042 = vsel %vm305, %v4021, 0
        %v4045 = vsel %vm305, %v4022, 0
        %v4048 = vsel %vm305, %v4023, 0
        %v4051 = vsel %vm305, %v4024, 0
        %v4054 = vsel %vm305, %v4025, 0
        %v4057 = vsel %vm305, %v4026, 0
        %v4060 = vsel %vm305, %v4027, 0
        %v4063 = vsel %vm305, %v4028, 0
        %v4066 = vsel %vm305, %v4029, 0
        %v4069 = vsel %vm305, %v4030, 0
        %v4072 = vsel %vm305, %v4031, 0
        %v4075 = vsel %vm305, %v4032, 0
        %v4078 = vsel %vm305, %v4033, 0
        %v4081 = vsel %vm305, %v4034, 0
        %v4084 = vand.u32 %v3986, %v357
        %4086 = vmatprep.subr.bf16.mxu0 0
        %4087 = vmatpush1.bf16.msra.mxu0 0
        %4088 = vmatprep.subr.bf16.mxu0 0
        %4089 = vmatpush1.bf16.msra.mxu0 0
        %4090 = vmatprep.subr.bf16.mxu0 0
        %4091 = vmatpush1.bf16.msra.mxu0 0
        %4092 = vmatprep.subr.bf16.mxu0 0
        %4093 = vmatpush1.bf16.msra.mxu0 0
        %4094 = vmatprep.subr.bf16.mxu0 0
        %4095 = vmatpush1.bf16.msra.mxu0 0
        %4096 = vmatprep.subr.bf16.mxu0 0
        %4097 = vmatpush1.bf16.msra.mxu0 0
        %4098 = vmatprep.subr.bf16.mxu0 0
        %4099 = vmatpush1.bf16.msra.mxu0 0
        %4100 = vmatprep.subr.bf16.mxu0 0
        %4101 = vmatpush1.bf16.msra.mxu0 %v4084
        %4102 = vmatprep.subr.bf16.mxu0 0
        %4103 = vmatpush2.bf16.msra.mxu0 0
        %4104 = vmatprep.subr.bf16.mxu0 0
        %4105 = vmatpush2.bf16.msra.mxu0 0
        %4106 = vmatprep.subr.bf16.mxu0 0
        %4107 = vmatpush2.bf16.msra.mxu0 0
        %4108 = vmatprep.subr.bf16.mxu0 0
        %4109 = vmatpush2.bf16.msra.mxu0 0
        %4110 = vmatprep.subr.bf16.mxu0 0
        %4111 = vmatpush2.bf16.msra.mxu0 0
        %4112 = vmatprep.subr.bf16.mxu0 0
        %4113 = vmatpush2.bf16.msra.mxu0 0
        %4114 = vmatprep.subr.bf16.mxu0 0
        %4115 = vmatpush2.bf16.msra.mxu0 0
        %4116 = vmatprep.subr.bf16.mxu0 0
        %4117 = vmatpush2.bf16.msra.mxu0 0
        %4118 = vmatprep.mubr.bf16.mxu0 0
        %4119 = vmatmul.mubr.bf16.gmra.mxu0 %v4036
        %v4120 = vpop.f32.mrf.mxu0
        %v4121 = vadd.f32 0.0, %v4120
        %v4122 = vpop.f32.mrf.mxu0
        %v4123 = vpop.f32.mrf.mxu0
        %v4124 = vadd.f32 0.0, %v4123
        %v4125 = vpop.f32.mrf.mxu0
        %4126 = vmatprep.mubr.bf16.mxu0 0
        %4127 = vmatmul.mubr.bf16.gmra.mxu0 %v4039
        %v4128 = vpop.f32.mrf.mxu0
        %v4129 = vadd.f32 0.0, %v4128
        %v4130 = vpop.f32.mrf.mxu0
        %v4131 = vpop.f32.mrf.mxu0
        %v4132 = vadd.f32 0.0, %v4131
        %v4133 = vpop.f32.mrf.mxu0
        %4134 = vmatprep.mubr.bf16.mxu0 0
        %4135 = vmatmul.mubr.bf16.gmra.mxu0 %v4042
        %v4136 = vpop.f32.mrf.mxu0
        %v4137 = vadd.f32 0.0, %v4136
        %v4138 = vpop.f32.mrf.mxu0
        %v4139 = vpop.f32.mrf.mxu0
        %v4140 = vadd.f32 0.0, %v4139
        %v4141 = vpop.f32.mrf.mxu0
        %4142 = vmatprep.mubr.bf16.mxu0 0
        %4143 = vmatmul.mubr.bf16.gmra.mxu0 %v4045
        %v4144 = vpop.f32.mrf.mxu0
        %v4145 = vadd.f32 0.0, %v4144
        %v4146 = vpop.f32.mrf.mxu0
        %v4147 = vpop.f32.mrf.mxu0
        %v4148 = vadd.f32 0.0, %v4147
        %v4149 = vpop.f32.mrf.mxu0
        %4150 = vmatprep.mubr.bf16.mxu0 0
        %4151 = vmatmul.mubr.bf16.gmra.mxu0 %v4048
        %v4152 = vpop.f32.mrf.mxu0
        %v4153 = vadd.f32 0.0, %v4152
        %v4154 = vpop.f32.mrf.mxu0
        %v4155 = vpop.f32.mrf.mxu0
        %v4156 = vadd.f32 0.0, %v4155
        %v4157 = vpop.f32.mrf.mxu0
        %4158 = vmatprep.mubr.bf16.mxu0 0
        %4159 = vmatmul.mubr.bf16.gmra.mxu0 %v4051
        %v4160 = vpop.f32.mrf.mxu0
        %v4161 = vadd.f32 0.0, %v4160
        %v4162 = vpop.f32.mrf.mxu0
        %v4163 = vpop.f32.mrf.mxu0
        %v4164 = vadd.f32 0.0, %v4163
        %v4165 = vpop.f32.mrf.mxu0
        %4166 = vmatprep.mubr.bf16.mxu0 0
        %4167 = vmatmul.mubr.bf16.gmra.mxu0 %v4054
        %v4168 = vpop.f32.mrf.mxu0
        %v4169 = vadd.f32 0.0, %v4168
        %v4170 = vpop.f32.mrf.mxu0
        %v4171 = vpop.f32.mrf.mxu0
        %v4172 = vadd.f32 0.0, %v4171
        %v4173 = vpop.f32.mrf.mxu0
        %4174 = vmatprep.mubr.bf16.mxu0 0
        %4175 = vmatmul.mubr.bf16.gmra.mxu0 %v4057
        %v4176 = vpop.f32.mrf.mxu0
        %v4177 = vadd.f32 0.0, %v4176
        %v4178 = vpop.f32.mrf.mxu0
        %v4179 = vpop.f32.mrf.mxu0
        %v4180 = vadd.f32 0.0, %v4179
        %v4181 = vpop.f32.mrf.mxu0
        %4182 = vmatprep.mubr.bf16.mxu0 0
        %4183 = vmatmul.mubr.bf16.gmra.mxu0 %v4060
        %v4184 = vpop.f32.mrf.mxu0
        %v4185 = vadd.f32 0.0, %v4184
        %v4186 = vpop.f32.mrf.mxu0
        %v4187 = vpop.f32.mrf.mxu0
        %v4188 = vadd.f32 0.0, %v4187
        %v4189 = vpop.f32.mrf.mxu0
        %4190 = vmatprep.mubr.bf16.mxu0 0
        %4191 = vmatmul.mubr.bf16.gmra.mxu0 %v4063
        %v4192 = vpop.f32.mrf.mxu0
        %v4193 = vadd.f32 0.0, %v4192
        %v4194 = vpop.f32.mrf.mxu0
        %v4195 = vpop.f32.mrf.mxu0
        %v4196 = vadd.f32 0.0, %v4195
        %v4197 = vpop.f32.mrf.mxu0
        %4198 = vmatprep.mubr.bf16.mxu0 0
        %4199 = vmatmul.mubr.bf16.gmra.mxu0 %v4066
        %v4200 = vpop.f32.mrf.mxu0
        %v4201 = vadd.f32 0.0, %v4200
        %v4202 = vpop.f32.mrf.mxu0
        %v4203 = vpop.f32.mrf.mxu0
        %v4204 = vadd.f32 0.0, %v4203
        %v4205 = vpop.f32.mrf.mxu0
        %4206 = vmatprep.mubr.bf16.mxu0 0
        %4207 = vmatmul.mubr.bf16.gmra.mxu0 %v4069
        %v4208 = vpop.f32.mrf.mxu0
        %v4209 = vadd.f32 0.0, %v4208
        %v4210 = vpop.f32.mrf.mxu0
        %v4211 = vpop.f32.mrf.mxu0
        %v4212 = vadd.f32 0.0, %v4211
        %v4213 = vpop.f32.mrf.mxu0
        %4214 = vmatprep.mubr.bf16.mxu0 0
        %4215 = vmatmul.mubr.bf16.gmra.mxu0 %v4072
        %v4216 = vpop.f32.mrf.mxu0
        %v4217 = vadd.f32 0.0, %v4216
        %v4218 = vpop.f32.mrf.mxu0
        %v4219 = vpop.f32.mrf.mxu0
        %v4220 = vadd.f32 0.0, %v4219
        %v4221 = vpop.f32.mrf.mxu0
        %4222 = vmatprep.mubr.bf16.mxu0 0
        %4223 = vmatmul.mubr.bf16.gmra.mxu0 %v4075
        %v4224 = vpop.f32.mrf.mxu0
        %v4225 = vadd.f32 0.0, %v4224
        %v4226 = vpop.f32.mrf.mxu0
        %v4227 = vpop.f32.mrf.mxu0
        %v4228 = vadd.f32 0.0, %v4227
        %v4229 = vpop.f32.mrf.mxu0
        %4230 = vmatprep.mubr.bf16.mxu0 0
        %4231 = vmatmul.mubr.bf16.gmra.mxu0 %v4078
        %v4232 = vpop.f32.mrf.mxu0
        %v4233 = vadd.f32 0.0, %v4232
        %v4234 = vpop.f32.mrf.mxu0
        %v4235 = vpop.f32.mrf.mxu0
        %v4236 = vadd.f32 0.0, %v4235
        %v4237 = vpop.f32.mrf.mxu0
        %4238 = vmatprep.mubr.bf16.mxu0 0
        %4239 = vmatmul.mubr.bf16.gmra.mxu0 %v4081
        %v4240 = vpop.f32.mrf.mxu0
        %v4241 = vadd.f32 0.0, %v4240
        %v4242 = vpop.f32.mrf.mxu0
        %v4243 = vpop.f32.mrf.mxu0
        %v4244 = vadd.f32 0.0, %v4243
        %v4245 = vpop.f32.mrf.mxu0
        %4246 = vdwg.mxu0
        %v4247 = vld [vmem:[#allocation2] sm:$0xff]
        %v4248 = vld [vmem:[#allocation2 + $0x8] sm:$0xff]
        %v4249 = vld [vmem:[#allocation2 + $0x10] sm:$0xff]
        %v4250 = vld [vmem:[#allocation2 + $0x18] sm:$0xff]
        %v4251 = vld [vmem:[#allocation2 + $0x20] sm:$0xff]
        %v4252 = vld [vmem:[#allocation2 + $0x28] sm:$0xff]
        %v4253 = vld [vmem:[#allocation2 + $0x30] sm:$0xff]
        %v4254 = vld [vmem:[#allocation2 + $0x38] sm:$0xff]
        %v4255 = vld [vmem:[#allocation2 + $0x40] sm:$0xff]
        %v4256 = vld [vmem:[#allocation2 + $0x48] sm:$0xff]
        %v4257 = vld [vmem:[#allocation2 + $0x50] sm:$0xff]
        %v4258 = vld [vmem:[#allocation2 + $0x58] sm:$0xff]
        %v4259 = vld [vmem:[#allocation2 + $0x60] sm:$0xff]
        %v4260 = vld [vmem:[#allocation2 + $0x68] sm:$0xff]
        %v4261 = vld [vmem:[#allocation2 + $0x70] sm:$0xff]
        %v4262 = vld [vmem:[#allocation2 + $0x78] sm:$0xff]
        %v4263 = vld [vmem:[#allocation2 + $0x80] sm:$0xff]
        %v4264 = vld [vmem:[#allocation2 + $0x88] sm:$0xff]
        %v4265 = vld [vmem:[#allocation2 + $0x90] sm:$0xff]
        %v4266 = vld [vmem:[#allocation2 + $0x98] sm:$0xff]
        %v4267 = vld [vmem:[#allocation2 + $0xa0] sm:$0xff]
        %v4268 = vld [vmem:[#allocation2 + $0xa8] sm:$0xff]
        %v4269 = vld [vmem:[#allocation2 + $0xb0] sm:$0xff]
        %v4270 = vld [vmem:[#allocation2 + $0xb8] sm:$0xff]
        %v4271 = vld [vmem:[#allocation2 + $0xc0] sm:$0xff]
        %v4272 = vld [vmem:[#allocation2 + $0xc8] sm:$0xff]
        %v4273 = vld [vmem:[#allocation2 + $0xd0] sm:$0xff]
        %v4274 = vld [vmem:[#allocation2 + $0xd8] sm:$0xff]
        %v4275 = vld [vmem:[#allocation2 + $0xe0] sm:$0xff]
        %v4276 = vld [vmem:[#allocation2 + $0xe8] sm:$0xff]
        %v4277 = vld [vmem:[#allocation2 + $0xf0] sm:$0xff]
        %v4278 = vld [vmem:[#allocation2 + $0xf8] sm:$0xff]
        %v4279 = vadd.f32 %v4247, %v4121
        %v4280 = vadd.f32 %v4248, %v4124
        %v4281 = vadd.f32 %v4249, %v4129
        %v4282 = vadd.f32 %v4250, %v4132
        %v4283 = vadd.f32 %v4251, %v4137
        %v4284 = vadd.f32 %v4252, %v4140
        %v4285 = vadd.f32 %v4253, %v4145
        %v4286 = vadd.f32 %v4254, %v4148
        %v4287 = vadd.f32 %v4255, %v4153
        %v4288 = vadd.f32 %v4256, %v4156
        %v4289 = vadd.f32 %v4257, %v4161
        %v4290 = vadd.f32 %v4258, %v4164
        %v4291 = vadd.f32 %v4259, %v4169
        %v4292 = vadd.f32 %v4260, %v4172
        %v4293 = vadd.f32 %v4261, %v4177
        %v4294 = vadd.f32 %v4262, %v4180
        %v4295 = vadd.f32 %v4263, %v4185
        %v4296 = vadd.f32 %v4264, %v4188
        %v4297 = vadd.f32 %v4265, %v4193
        %v4298 = vadd.f32 %v4266, %v4196
        %v4299 = vadd.f32 %v4267, %v4201
        %v4300 = vadd.f32 %v4268, %v4204
        %v4301 = vadd.f32 %v4269, %v4209
        %v4302 = vadd.f32 %v4270, %v4212
        %v4303 = vadd.f32 %v4271, %v4217
        %v4304 = vadd.f32 %v4272, %v4220
        %v4305 = vadd.f32 %v4273, %v4225
        %v4306 = vadd.f32 %v4274, %v4228
        %v4307 = vadd.f32 %v4275, %v4233
        %v4308 = vadd.f32 %v4276, %v4236
        %v4309 = vadd.f32 %v4277, %v4241
        %v4310 = vadd.f32 %v4278, %v4244
        %4311 = vst.msk [vmem:[#allocation2] sm:$0xff] %vm522, %v4279
        %4312 = vst.msk [vmem:[#allocation2 + $0x8] sm:$0xff] %vm522, %v4280
        %4313 = vst.msk [vmem:[#allocation2 + $0x10] sm:$0xff] %vm522, %v4281
        %4314 = vst.msk [vmem:[#allocation2 + $0x18] sm:$0xff] %vm522, %v4282
        %4315 = vst.msk [vmem:[#allocation2 + $0x20] sm:$0xff] %vm522, %v4283
        %4316 = vst.msk [vmem:[#allocation2 + $0x28] sm:$0xff] %vm522, %v4284
        %4317 = vst.msk [vmem:[#allocation2 + $0x30] sm:$0xff] %vm522, %v4285
        %4318 = vst.msk [vmem:[#allocation2 + $0x38] sm:$0xff] %vm522, %v4286
        %4319 = vst.msk [vmem:[#allocation2 + $0x40] sm:$0xff] %vm522, %v4287
        %4320 = vst.msk [vmem:[#allocation2 + $0x48] sm:$0xff] %vm522, %v4288
        %4321 = vst.msk [vmem:[#allocation2 + $0x50] sm:$0xff] %vm522, %v4289
        %4322 = vst.msk [vmem:[#allocation2 + $0x58] sm:$0xff] %vm522, %v4290
        %4323 = vst.msk [vmem:[#allocation2 + $0x60] sm:$0xff] %vm522, %v4291
        %4324 = vst.msk [vmem:[#allocation2 + $0x68] sm:$0xff] %vm522, %v4292
        %4325 = vst.msk [vmem:[#allocation2 + $0x70] sm:$0xff] %vm522, %v4293
        %4326 = vst.msk [vmem:[#allocation2 + $0x78] sm:$0xff] %vm522, %v4294
        %4327 = vst.msk [vmem:[#allocation2 + $0x80] sm:$0xff] %vm522, %v4295
        %4328 = vst.msk [vmem:[#allocation2 + $0x88] sm:$0xff] %vm522, %v4296
        %4329 = vst.msk [vmem:[#allocation2 + $0x90] sm:$0xff] %vm522, %v4297
        %4330 = vst.msk [vmem:[#allocation2 + $0x98] sm:$0xff] %vm522, %v4298
        %4331 = vst.msk [vmem:[#allocation2 + $0xa0] sm:$0xff] %vm522, %v4299
        %4332 = vst.msk [vmem:[#allocation2 + $0xa8] sm:$0xff] %vm522, %v4300
        %4333 = vst.msk [vmem:[#allocation2 + $0xb0] sm:$0xff] %vm522, %v4301
        %4334 = vst.msk [vmem:[#allocation2 + $0xb8] sm:$0xff] %vm522, %v4302
        %4335 = vst.msk [vmem:[#allocation2 + $0xc0] sm:$0xff] %vm522, %v4303
        %4336 = vst.msk [vmem:[#allocation2 + $0xc8] sm:$0xff] %vm522, %v4304
        %4337 = vst.msk [vmem:[#allocation2 + $0xd0] sm:$0xff] %vm522, %v4305
        %4338 = vst.msk [vmem:[#allocation2 + $0xd8] sm:$0xff] %vm522, %v4306
        %4339 = vst.msk [vmem:[#allocation2 + $0xe0] sm:$0xff] %vm522, %v4307
        %4340 = vst.msk [vmem:[#allocation2 + $0xe8] sm:$0xff] %vm522, %v4308
        %4341 = vst.msk [vmem:[#allocation2 + $0xf0] sm:$0xff] %vm522, %v4309
        %4342 = vst.msk [vmem:[#allocation2 + $0xf8] sm:$0xff] %vm522, %v4310
        %v4343 = vld [vmem:[%s555] sm:$0xe]
        %v4344 = vld [vmem:[%s555 + $0x4] sm:$0xf]
        %v4345 = vld [vmem:[%s555 + $0x8] sm:$0x1]
        %v4346 = vld [vmem:[%s555 + $0xc] sm:$0xe]
        %v4347 = vld [vmem:[%s555 + $0x10] sm:$0xf]
        %v4348 = vld [vmem:[%s555 + $0x14] sm:$0x1]
        %v4349 = vld [vmem:[%s555 + $0x18] sm:$0xe]
        %v4350 = vld [vmem:[%s555 + $0x1c] sm:$0xf]
        %v4351 = vld [vmem:[%s555 + $0x20] sm:$0x1]
        %v4352 = vld [vmem:[%s555 + $0x24] sm:$0xe]
        %v4353 = vld [vmem:[%s555 + $0x28] sm:$0xf]
        %v4354 = vld [vmem:[%s555 + $0x2c] sm:$0x1]
        %v4355 = vld [vmem:[%s555 + $0x30] sm:$0xe]
        %v4356 = vld [vmem:[%s555 + $0x34] sm:$0xf]
        %v4357 = vld [vmem:[%s555 + $0x38] sm:$0x1]
        %v4358 = vld [vmem:[%s555 + $0x3c] sm:$0xe]
        %v4359 = vld [vmem:[%s555 + $0x40] sm:$0xf]
        %v4360 = vld [vmem:[%s555 + $0x44] sm:$0x1]
        %v4361 = vld [vmem:[%s555 + $0x48] sm:$0xe]
        %v4362 = vld [vmem:[%s555 + $0x4c] sm:$0xf]
        %v4363 = vld [vmem:[%s555 + $0x50] sm:$0x1]
        %v4364 = vld [vmem:[%s555 + $0x54] sm:$0xe]
        %v4365 = vld [vmem:[%s555 + $0x58] sm:$0xf]
        %v4366 = vld [vmem:[%s555 + $0x5c] sm:$0x1]
        %v4367 = vld [vmem:[%s555 + $0x60] sm:$0xe]
        %v4368 = vld [vmem:[%s555 + $0x64] sm:$0xf]
        %v4369 = vld [vmem:[%s555 + $0x68] sm:$0x1]
        %v4370 = vld [vmem:[%s555 + $0x6c] sm:$0xe]
        %v4371 = vld [vmem:[%s555 + $0x70] sm:$0xf]
        %v4372 = vld [vmem:[%s555 + $0x74] sm:$0x1]
        %v4373 = vld [vmem:[%s555 + $0x78] sm:$0xe]
        %v4374 = vld [vmem:[%s555 + $0x7c] sm:$0xf]
        %v4375 = vld [vmem:[%s555 + $0x80] sm:$0x1]
        %v4376 = vld [vmem:[%s555 + $0x84] sm:$0xe]
        %v4377 = vld [vmem:[%s555 + $0x88] sm:$0xf]
        %v4378 = vld [vmem:[%s555 + $0x8c] sm:$0x1]
        %v4379 = vld [vmem:[%s555 + $0x90] sm:$0xe]
        %v4380 = vld [vmem:[%s555 + $0x94] sm:$0xf]
        %v4381 = vld [vmem:[%s555 + $0x98] sm:$0x1]
        %v4382 = vld [vmem:[%s555 + $0x9c] sm:$0xe]
        %v4383 = vld [vmem:[%s555 + $0xa0] sm:$0xf]
        %v4384 = vld [vmem:[%s555 + $0xa4] sm:$0x1]
        %v4385 = vld [vmem:[%s555 + $0xa8] sm:$0xe]
        %v4386 = vld [vmem:[%s555 + $0xac] sm:$0xf]
        %v4387 = vld [vmem:[%s555 + $0xb0] sm:$0x1]
        %v4388 = vld [vmem:[%s555 + $0xb4] sm:$0xe]
        %v4389 = vld [vmem:[%s555 + $0xb8] sm:$0xf]
        %v4390 = vld [vmem:[%s555 + $0xbc] sm:$0x1]
        %v4439 = vrot.slane %v4343, 5
        %v4440 = vrot.slane %v4439, 4
        %v4441 = vrot.slane %v4344, 5
        %v4442 = vsel %vm3872, %v4440, %v4441
        %v4443 = vrot.slane %v4441, 4
        %v4444 = vrot.slane %v4345, 5
        %v4445 = vsel %vm3872, %v4443, %v4444
        %v4446 = vrot.slane %v4346, 5
        %v4447 = vrot.slane %v4446, 4
        %v4448 = vrot.slane %v4347, 5
        %v4449 = vsel %vm3872, %v4447, %v4448
        %v4450 = vrot.slane %v4448, 4
        %v4451 = vrot.slane %v4348, 5
        %v4452 = vsel %vm3872, %v4450, %v4451
        %v4453 = vrot.slane %v4349, 5
        %v4454 = vrot.slane %v4453, 4
        %v4455 = vrot.slane %v4350, 5
        %v4456 = vsel %vm3872, %v4454, %v4455
        %v4457 = vrot.slane %v4455, 4
        %v4458 = vrot.slane %v4351, 5
        %v4459 = vsel %vm3872, %v4457, %v4458
        %v4460 = vrot.slane %v4352, 5
        %v4461 = vrot.slane %v4460, 4
        %v4462 = vrot.slane %v4353, 5
        %v4463 = vsel %vm3872, %v4461, %v4462
        %v4464 = vrot.slane %v4462, 4
        %v4465 = vrot.slane %v4354, 5
        %v4466 = vsel %vm3872, %v4464, %v4465
        %v4467 = vrot.slane %v4355, 5
        %v4468 = vrot.slane %v4467, 4
        %v4469 = vrot.slane %v4356, 5
        %v4470 = vsel %vm3872, %v4468, %v4469
        %v4471 = vrot.slane %v4469, 4
        %v4472 = vrot.slane %v4357, 5
        %v4473 = vsel %vm3872, %v4471, %v4472
        %v4474 = vrot.slane %v4358, 5
        %v4475 = vrot.slane %v4474, 4
        %v4476 = vrot.slane %v4359, 5
        %v4477 = vsel %vm3872, %v4475, %v4476
        %v4478 = vrot.slane %v4476, 4
        %v4479 = vrot.slane %v4360, 5
        %v4480 = vsel %vm3872, %v4478, %v4479
        %v4481 = vrot.slane %v4361, 5
        %v4482 = vrot.slane %v4481, 4
        %v4483 = vrot.slane %v4362, 5
        %v4484 = vsel %vm3872, %v4482, %v4483
        %v4485 = vrot.slane %v4483, 4
        %v4486 = vrot.slane %v4363, 5
        %v4487 = vsel %vm3872, %v4485, %v4486
        %v4488 = vrot.slane %v4364, 5
        %v4489 = vrot.slane %v4488, 4
        %v4490 = vrot.slane %v4365, 5
        %v4491 = vsel %vm3872, %v4489, %v4490
        %v4492 = vrot.slane %v4490, 4
        %v4493 = vrot.slane %v4366, 5
        %v4494 = vsel %vm3872, %v4492, %v4493
        %v4495 = vrot.slane %v4367, 5
        %v4496 = vrot.slane %v4495, 4
        %v4497 = vrot.slane %v4368, 5
        %v4498 = vsel %vm3872, %v4496, %v4497
        %v4499 = vrot.slane %v4497, 4
        %v4500 = vrot.slane %v4369, 5
        %v4501 = vsel %vm3872, %v4499, %v4500
        %v4502 = vrot.slane %v4370, 5
        %v4503 = vrot.slane %v4502, 4
        %v4504 = vrot.slane %v4371, 5
        %v4505 = vsel %vm3872, %v4503, %v4504
        %v4506 = vrot.slane %v4504, 4
        %v4507 = vrot.slane %v4372, 5
        %v4508 = vsel %vm3872, %v4506, %v4507
        %v4509 = vrot.slane %v4373, 5
        %v4510 = vrot.slane %v4509, 4
        %v4511 = vrot.slane %v4374, 5
        %v4512 = vsel %vm3872, %v4510, %v4511
        %v4513 = vrot.slane %v4511, 4
        %v4514 = vrot.slane %v4375, 5
        %v4515 = vsel %vm3872, %v4513, %v4514
        %v4516 = vrot.slane %v4376, 5
        %v4517 = vrot.slane %v4516, 4
        %v4518 = vrot.slane %v4377, 5
        %v4519 = vsel %vm3872, %v4517, %v4518
        %v4520 = vrot.slane %v4518, 4
        %v4521 = vrot.slane %v4378, 5
        %v4522 = vsel %vm3872, %v4520, %v4521
        %v4523 = vrot.slane %v4379, 5
        %v4524 = vrot.slane %v4523, 4
        %v4525 = vrot.slane %v4380, 5
        %v4526 = vsel %vm3872, %v4524, %v4525
        %v4527 = vrot.slane %v4525, 4
        %v4528 = vrot.slane %v4381, 5
        %v4529 = vsel %vm3872, %v4527, %v4528
        %v4530 = vrot.slane %v4382, 5
        %v4531 = vrot.slane %v4530, 4
        %v4532 = vrot.slane %v4383, 5
        %v4533 = vsel %vm3872, %v4531, %v4532
        %v4534 = vrot.slane %v4532, 4
        %v4535 = vrot.slane %v4384, 5
        %v4536 = vsel %vm3872, %v4534, %v4535
        %v4537 = vrot.slane %v4385, 5
        %v4538 = vrot.slane %v4537, 4
        %v4539 = vrot.slane %v4386, 5
        %v4540 = vsel %vm3872, %v4538, %v4539
        %v4541 = vrot.slane %v4539, 4
        %v4542 = vrot.slane %v4387, 5
        %v4543 = vsel %vm3872, %v4541, %v4542
        %v4544 = vrot.slane %v4388, 5
        %v4545 = vrot.slane %v4544, 4
        %v4546 = vrot.slane %v4389, 5
        %v4547 = vsel %vm3872, %v4545, %v4546
        %v4548 = vrot.slane %v4546, 4
        %v4549 = vrot.slane %v4390, 5
        %v4550 = vsel %vm3872, %v4548, %v4549
        %s4551 = scalar_lea.vmem %s1, 10
        %v4552 = vld [vmem:[%s4551] sm:$0x3]
        %v4553 = vunpack.c.l.b16 %v4442
        %v4554 = vunpack.c.l.b16 %v4445
        %v4555 = vunpack.c.l.b16 %v4449
        %v4556 = vunpack.c.l.b16 %v4452
        %v4557 = vunpack.c.l.b16 %v4456
        %v4558 = vunpack.c.l.b16 %v4459
        %v4559 = vunpack.c.l.b16 %v4463
        %v4560 = vunpack.c.l.b16 %v4466
        %v4561 = vunpack.c.l.b16 %v4470
        %v4562 = vunpack.c.l.b16 %v4473
        %v4563 = vunpack.c.l.b16 %v4477
        %v4564 = vunpack.c.l.b16 %v4480
        %v4565 = vunpack.c.l.b16 %v4484
        %v4566 = vunpack.c.l.b16 %v4487
        %v4567 = vunpack.c.l.b16 %v4491
        %v4568 = vunpack.c.l.b16 %v4494
        %v4569 = vunpack.c.l.b16 %v4498
        %v4570 = vunpack.c.l.b16 %v4501
        %v4571 = vunpack.c.l.b16 %v4505
        %v4572 = vunpack.c.l.b16 %v4508
        %v4573 = vunpack.c.l.b16 %v4512
        %v4574 = vunpack.c.l.b16 %v4515
        %v4575 = vunpack.c.l.b16 %v4519
        %v4576 = vunpack.c.l.b16 %v4522
        %v4577 = vunpack.c.l.b16 %v4526
        %v4578 = vunpack.c.l.b16 %v4529
        %v4579 = vunpack.c.l.b16 %v4533
        %v4580 = vunpack.c.l.b16 %v4536
        %v4581 = vunpack.c.l.b16 %v4540
        %v4582 = vunpack.c.l.b16 %v4543
        %v4583 = vunpack.c.l.b16 %v4547
        %v4584 = vunpack.c.l.b16 %v4550
        %v4585 = vpack.c.b16 %v4554, %v4553
        %v4586 = vpack.c.b16 %v4556, %v4555
        %v4587 = vpack.c.b16 %v4558, %v4557
        %v4588 = vpack.c.b16 %v4560, %v4559
        %v4589 = vpack.c.b16 %v4562, %v4561
        %v4590 = vpack.c.b16 %v4564, %v4563
        %v4591 = vpack.c.b16 %v4566, %v4565
        %v4592 = vpack.c.b16 %v4568, %v4567
        %v4593 = vpack.c.b16 %v4570, %v4569
        %v4594 = vpack.c.b16 %v4572, %v4571
        %v4595 = vpack.c.b16 %v4574, %v4573
        %v4596 = vpack.c.b16 %v4576, %v4575
        %v4597 = vpack.c.b16 %v4578, %v4577
        %v4598 = vpack.c.b16 %v4580, %v4579
        %v4599 = vpack.c.b16 %v4582, %v4581
        %v4600 = vpack.c.b16 %v4584, %v4583
        %v4602 = vsel %vm305, %v4585, 0
        %v4605 = vsel %vm305, %v4586, 0
        %v4608 = vsel %vm305, %v4587, 0
        %v4611 = vsel %vm305, %v4588, 0
        %v4614 = vsel %vm305, %v4589, 0
        %v4617 = vsel %vm305, %v4590, 0
        %v4620 = vsel %vm305, %v4591, 0
        %v4623 = vsel %vm305, %v4592, 0
        %v4626 = vsel %vm305, %v4593, 0
        %v4629 = vsel %vm305, %v4594, 0
        %v4632 = vsel %vm305, %v4595, 0
        %v4635 = vsel %vm305, %v4596, 0
        %v4638 = vsel %vm305, %v4597, 0
        %v4641 = vsel %vm305, %v4598, 0
        %v4644 = vsel %vm305, %v4599, 0
        %v4647 = vsel %vm305, %v4600, 0
        %v4650 = vand.u32 %v4552, %v357
        %4652 = vmatprep.subr.bf16.mxu0 0
        %4653 = vmatpush1.bf16.msra.mxu0 0
        %4654 = vmatprep.subr.bf16.mxu0 0
        %4655 = vmatpush1.bf16.msra.mxu0 0
        %4656 = vmatprep.subr.bf16.mxu0 0
        %4657 = vmatpush1.bf16.msra.mxu0 0
        %4658 = vmatprep.subr.bf16.mxu0 0
        %4659 = vmatpush1.bf16.msra.mxu0 0
        %4660 = vmatprep.subr.bf16.mxu0 0
        %4661 = vmatpush1.bf16.msra.mxu0 0
        %4662 = vmatprep.subr.bf16.mxu0 0
        %4663 = vmatpush1.bf16.msra.mxu0 0
        %4664 = vmatprep.subr.bf16.mxu0 0
        %4665 = vmatpush1.bf16.msra.mxu0 0
        %4666 = vmatprep.subr.bf16.mxu0 0
        %4667 = vmatpush1.bf16.msra.mxu0 %v4650
        %4668 = vmatprep.subr.bf16.mxu0 0
        %4669 = vmatpush2.bf16.msra.mxu0 0
        %4670 = vmatprep.subr.bf16.mxu0 0
        %4671 = vmatpush2.bf16.msra.mxu0 0
        %4672 = vmatprep.subr.bf16.mxu0 0
        %4673 = vmatpush2.bf16.msra.mxu0 0
        %4674 = vmatprep.subr.bf16.mxu0 0
        %4675 = vmatpush2.bf16.msra.mxu0 0
        %4676 = vmatprep.subr.bf16.mxu0 0
        %4677 = vmatpush2.bf16.msra.mxu0 0
        %4678 = vmatprep.subr.bf16.mxu0 0
        %4679 = vmatpush2.bf16.msra.mxu0 0
        %4680 = vmatprep.subr.bf16.mxu0 0
        %4681 = vmatpush2.bf16.msra.mxu0 0
        %4682 = vmatprep.subr.bf16.mxu0 0
        %4683 = vmatpush2.bf16.msra.mxu0 0
        %4684 = vmatprep.mubr.bf16.mxu0 0
        %4685 = vmatmul.mubr.bf16.gmra.mxu0 %v4602
        %v4686 = vpop.f32.mrf.mxu0
        %v4687 = vadd.f32 0.0, %v4686
        %v4688 = vpop.f32.mrf.mxu0
        %v4689 = vpop.f32.mrf.mxu0
        %v4690 = vadd.f32 0.0, %v4689
        %v4691 = vpop.f32.mrf.mxu0
        %4692 = vmatprep.mubr.bf16.mxu0 0
        %4693 = vmatmul.mubr.bf16.gmra.mxu0 %v4605
        %v4694 = vpop.f32.mrf.mxu0
        %v4695 = vadd.f32 0.0, %v4694
        %v4696 = vpop.f32.mrf.mxu0
        %v4697 = vpop.f32.mrf.mxu0
        %v4698 = vadd.f32 0.0, %v4697
        %v4699 = vpop.f32.mrf.mxu0
        %4700 = vmatprep.mubr.bf16.mxu0 0
        %4701 = vmatmul.mubr.bf16.gmra.mxu0 %v4608
        %v4702 = vpop.f32.mrf.mxu0
        %v4703 = vadd.f32 0.0, %v4702
        %v4704 = vpop.f32.mrf.mxu0
        %v4705 = vpop.f32.mrf.mxu0
        %v4706 = vadd.f32 0.0, %v4705
        %v4707 = vpop.f32.mrf.mxu0
        %4708 = vmatprep.mubr.bf16.mxu0 0
        %4709 = vmatmul.mubr.bf16.gmra.mxu0 %v4611
        %v4710 = vpop.f32.mrf.mxu0
        %v4711 = vadd.f32 0.0, %v4710
        %v4712 = vpop.f32.mrf.mxu0
        %v4713 = vpop.f32.mrf.mxu0
        %v4714 = vadd.f32 0.0, %v4713
        %v4715 = vpop.f32.mrf.mxu0
        %4716 = vmatprep.mubr.bf16.mxu0 0
        %4717 = vmatmul.mubr.bf16.gmra.mxu0 %v4614
        %v4718 = vpop.f32.mrf.mxu0
        %v4719 = vadd.f32 0.0, %v4718
        %v4720 = vpop.f32.mrf.mxu0
        %v4721 = vpop.f32.mrf.mxu0
        %v4722 = vadd.f32 0.0, %v4721
        %v4723 = vpop.f32.mrf.mxu0
        %4724 = vmatprep.mubr.bf16.mxu0 0
        %4725 = vmatmul.mubr.bf16.gmra.mxu0 %v4617
        %v4726 = vpop.f32.mrf.mxu0
        %v4727 = vadd.f32 0.0, %v4726
        %v4728 = vpop.f32.mrf.mxu0
        %v4729 = vpop.f32.mrf.mxu0
        %v4730 = vadd.f32 0.0, %v4729
        %v4731 = vpop.f32.mrf.mxu0
        %4732 = vmatprep.mubr.bf16.mxu0 0
        %4733 = vmatmul.mubr.bf16.gmra.mxu0 %v4620
        %v4734 = vpop.f32.mrf.mxu0
        %v4735 = vadd.f32 0.0, %v4734
        %v4736 = vpop.f32.mrf.mxu0
        %v4737 = vpop.f32.mrf.mxu0
        %v4738 = vadd.f32 0.0, %v4737
        %v4739 = vpop.f32.mrf.mxu0
        %4740 = vmatprep.mubr.bf16.mxu0 0
        %4741 = vmatmul.mubr.bf16.gmra.mxu0 %v4623
        %v4742 = vpop.f32.mrf.mxu0
        %v4743 = vadd.f32 0.0, %v4742
        %v4744 = vpop.f32.mrf.mxu0
        %v4745 = vpop.f32.mrf.mxu0
        %v4746 = vadd.f32 0.0, %v4745
        %v4747 = vpop.f32.mrf.mxu0
        %4748 = vmatprep.mubr.bf16.mxu0 0
        %4749 = vmatmul.mubr.bf16.gmra.mxu0 %v4626
        %v4750 = vpop.f32.mrf.mxu0
        %v4751 = vadd.f32 0.0, %v4750
        %v4752 = vpop.f32.mrf.mxu0
        %v4753 = vpop.f32.mrf.mxu0
        %v4754 = vadd.f32 0.0, %v4753
        %v4755 = vpop.f32.mrf.mxu0
        %4756 = vmatprep.mubr.bf16.mxu0 0
        %4757 = vmatmul.mubr.bf16.gmra.mxu0 %v4629
        %v4758 = vpop.f32.mrf.mxu0
        %v4759 = vadd.f32 0.0, %v4758
        %v4760 = vpop.f32.mrf.mxu0
        %v4761 = vpop.f32.mrf.mxu0
        %v4762 = vadd.f32 0.0, %v4761
        %v4763 = vpop.f32.mrf.mxu0
        %4764 = vmatprep.mubr.bf16.mxu0 0
        %4765 = vmatmul.mubr.bf16.gmra.mxu0 %v4632
        %v4766 = vpop.f32.mrf.mxu0
        %v4767 = vadd.f32 0.0, %v4766
        %v4768 = vpop.f32.mrf.mxu0
        %v4769 = vpop.f32.mrf.mxu0
        %v4770 = vadd.f32 0.0, %v4769
        %v4771 = vpop.f32.mrf.mxu0
        %4772 = vmatprep.mubr.bf16.mxu0 0
        %4773 = vmatmul.mubr.bf16.gmra.mxu0 %v4635
        %v4774 = vpop.f32.mrf.mxu0
        %v4775 = vadd.f32 0.0, %v4774
        %v4776 = vpop.f32.mrf.mxu0
        %v4777 = vpop.f32.mrf.mxu0
        %v4778 = vadd.f32 0.0, %v4777
        %v4779 = vpop.f32.mrf.mxu0
        %4780 = vmatprep.mubr.bf16.mxu0 0
        %4781 = vmatmul.mubr.bf16.gmra.mxu0 %v4638
        %v4782 = vpop.f32.mrf.mxu0
        %v4783 = vadd.f32 0.0, %v4782
        %v4784 = vpop.f32.mrf.mxu0
        %v4785 = vpop.f32.mrf.mxu0
        %v4786 = vadd.f32 0.0, %v4785
        %v4787 = vpop.f32.mrf.mxu0
        %4788 = vmatprep.mubr.bf16.mxu0 0
        %4789 = vmatmul.mubr.bf16.gmra.mxu0 %v4641
        %v4790 = vpop.f32.mrf.mxu0
        %v4791 = vadd.f32 0.0, %v4790
        %v4792 = vpop.f32.mrf.mxu0
        %v4793 = vpop.f32.mrf.mxu0
        %v4794 = vadd.f32 0.0, %v4793
        %v4795 = vpop.f32.mrf.mxu0
        %4796 = vmatprep.mubr.bf16.mxu0 0
        %4797 = vmatmul.mubr.bf16.gmra.mxu0 %v4644
        %v4798 = vpop.f32.mrf.mxu0
        %v4799 = vadd.f32 0.0, %v4798
        %v4800 = vpop.f32.mrf.mxu0
        %v4801 = vpop.f32.mrf.mxu0
        %v4802 = vadd.f32 0.0, %v4801
        %v4803 = vpop.f32.mrf.mxu0
        %4804 = vmatprep.mubr.bf16.mxu0 0
        %4805 = vmatmul.mubr.bf16.gmra.mxu0 %v4647
        %v4806 = vpop.f32.mrf.mxu0
        %v4807 = vadd.f32 0.0, %v4806
        %v4808 = vpop.f32.mrf.mxu0
        %v4809 = vpop.f32.mrf.mxu0
        %v4810 = vadd.f32 0.0, %v4809
        %v4811 = vpop.f32.mrf.mxu0
        %4812 = vdwg.mxu0
        %v4813 = vld [vmem:[#allocation2] sm:$0xff]
        %v4814 = vld [vmem:[#allocation2 + $0x8] sm:$0xff]
        %v4815 = vld [vmem:[#allocation2 + $0x10] sm:$0xff]
        %v4816 = vld [vmem:[#allocation2 + $0x18] sm:$0xff]
        %v4817 = vld [vmem:[#allocation2 + $0x20] sm:$0xff]
        %v4818 = vld [vmem:[#allocation2 + $0x28] sm:$0xff]
        %v4819 = vld [vmem:[#allocation2 + $0x30] sm:$0xff]
        %v4820 = vld [vmem:[#allocation2 + $0x38] sm:$0xff]
        %v4821 = vld [vmem:[#allocation2 + $0x40] sm:$0xff]
        %v4822 = vld [vmem:[#allocation2 + $0x48] sm:$0xff]
        %v4823 = vld [vmem:[#allocation2 + $0x50] sm:$0xff]
        %v4824 = vld [vmem:[#allocation2 + $0x58] sm:$0xff]
        %v4825 = vld [vmem:[#allocation2 + $0x60] sm:$0xff]
        %v4826 = vld [vmem:[#allocation2 + $0x68] sm:$0xff]
        %v4827 = vld [vmem:[#allocation2 + $0x70] sm:$0xff]
        %v4828 = vld [vmem:[#allocation2 + $0x78] sm:$0xff]
        %v4829 = vld [vmem:[#allocation2 + $0x80] sm:$0xff]
        %v4830 = vld [vmem:[#allocation2 + $0x88] sm:$0xff]
        %v4831 = vld [vmem:[#allocation2 + $0x90] sm:$0xff]
        %v4832 = vld [vmem:[#allocation2 + $0x98] sm:$0xff]
        %v4833 = vld [vmem:[#allocation2 + $0xa0] sm:$0xff]
        %v4834 = vld [vmem:[#allocation2 + $0xa8] sm:$0xff]
        %v4835 = vld [vmem:[#allocation2 + $0xb0] sm:$0xff]
        %v4836 = vld [vmem:[#allocation2 + $0xb8] sm:$0xff]
        %v4837 = vld [vmem:[#allocation2 + $0xc0] sm:$0xff]
        %v4838 = vld [vmem:[#allocation2 + $0xc8] sm:$0xff]
        %v4839 = vld [vmem:[#allocation2 + $0xd0] sm:$0xff]
        %v4840 = vld [vmem:[#allocation2 + $0xd8] sm:$0xff]
        %v4841 = vld [vmem:[#allocation2 + $0xe0] sm:$0xff]
        %v4842 = vld [vmem:[#allocation2 + $0xe8] sm:$0xff]
        %v4843 = vld [vmem:[#allocation2 + $0xf0] sm:$0xff]
        %v4844 = vld [vmem:[#allocation2 + $0xf8] sm:$0xff]
        %v4845 = vadd.f32 %v4813, %v4687
        %v4846 = vadd.f32 %v4814, %v4690
        %v4847 = vadd.f32 %v4815, %v4695
        %v4848 = vadd.f32 %v4816, %v4698
        %v4849 = vadd.f32 %v4817, %v4703
        %v4850 = vadd.f32 %v4818, %v4706
        %v4851 = vadd.f32 %v4819, %v4711
        %v4852 = vadd.f32 %v4820, %v4714
        %v4853 = vadd.f32 %v4821, %v4719
        %v4854 = vadd.f32 %v4822, %v4722
        %v4855 = vadd.f32 %v4823, %v4727
        %v4856 = vadd.f32 %v4824, %v4730
        %v4857 = vadd.f32 %v4825, %v4735
        %v4858 = vadd.f32 %v4826, %v4738
        %v4859 = vadd.f32 %v4827, %v4743
        %v4860 = vadd.f32 %v4828, %v4746
        %v4861 = vadd.f32 %v4829, %v4751
        %v4862 = vadd.f32 %v4830, %v4754
        %v4863 = vadd.f32 %v4831, %v4759
        %v4864 = vadd.f32 %v4832, %v4762
        %v4865 = vadd.f32 %v4833, %v4767
        %v4866 = vadd.f32 %v4834, %v4770
        %v4867 = vadd.f32 %v4835, %v4775
        %v4868 = vadd.f32 %v4836, %v4778
        %v4869 = vadd.f32 %v4837, %v4783
        %v4870 = vadd.f32 %v4838, %v4786
        %v4871 = vadd.f32 %v4839, %v4791
        %v4872 = vadd.f32 %v4840, %v4794
        %v4873 = vadd.f32 %v4841, %v4799
        %v4874 = vadd.f32 %v4842, %v4802
        %v4875 = vadd.f32 %v4843, %v4807
        %v4876 = vadd.f32 %v4844, %v4810
        %4877 = vst.msk [vmem:[#allocation2] sm:$0xff] %vm522, %v4845
        %4878 = vst.msk [vmem:[#allocation2 + $0x8] sm:$0xff] %vm522, %v4846
        %4879 = vst.msk [vmem:[#allocation2 + $0x10] sm:$0xff] %vm522, %v4847
        %4880 = vst.msk [vmem:[#allocation2 + $0x18] sm:$0xff] %vm522, %v4848
        %4881 = vst.msk [vmem:[#allocation2 + $0x20] sm:$0xff] %vm522, %v4849
        %4882 = vst.msk [vmem:[#allocation2 + $0x28] sm:$0xff] %vm522, %v4850
        %4883 = vst.msk [vmem:[#allocation2 + $0x30] sm:$0xff] %vm522, %v4851
        %4884 = vst.msk [vmem:[#allocation2 + $0x38] sm:$0xff] %vm522, %v4852
        %4885 = vst.msk [vmem:[#allocation2 + $0x40] sm:$0xff] %vm522, %v4853
        %4886 = vst.msk [vmem:[#allocation2 + $0x48] sm:$0xff] %vm522, %v4854
        %4887 = vst.msk [vmem:[#allocation2 + $0x50] sm:$0xff] %vm522, %v4855
        %4888 = vst.msk [vmem:[#allocation2 + $0x58] sm:$0xff] %vm522, %v4856
        %4889 = vst.msk [vmem:[#allocation2 + $0x60] sm:$0xff] %vm522, %v4857
        %4890 = vst.msk [vmem:[#allocation2 + $0x68] sm:$0xff] %vm522, %v4858
        %4891 = vst.msk [vmem:[#allocation2 + $0x70] sm:$0xff] %vm522, %v4859
        %4892 = vst.msk [vmem:[#allocation2 + $0x78] sm:$0xff] %vm522, %v4860
        %4893 = vst.msk [vmem:[#allocation2 + $0x80] sm:$0xff] %vm522, %v4861
        %4894 = vst.msk [vmem:[#allocation2 + $0x88] sm:$0xff] %vm522, %v4862
        %4895 = vst.msk [vmem:[#allocation2 + $0x90] sm:$0xff] %vm522, %v4863
        %4896 = vst.msk [vmem:[#allocation2 + $0x98] sm:$0xff] %vm522, %v4864
        %4897 = vst.msk [vmem:[#allocation2 + $0xa0] sm:$0xff] %vm522, %v4865
        %4898 = vst.msk [vmem:[#allocation2 + $0xa8] sm:$0xff] %vm522, %v4866
        %4899 = vst.msk [vmem:[#allocation2 + $0xb0] sm:$0xff] %vm522, %v4867
        %4900 = vst.msk [vmem:[#allocation2 + $0xb8] sm:$0xff] %vm522, %v4868
        %4901 = vst.msk [vmem:[#allocation2 + $0xc0] sm:$0xff] %vm522, %v4869
        %4902 = vst.msk [vmem:[#allocation2 + $0xc8] sm:$0xff] %vm522, %v4870
        %4903 = vst.msk [vmem:[#allocation2 + $0xd0] sm:$0xff] %vm522, %v4871
        %4904 = vst.msk [vmem:[#allocation2 + $0xd8] sm:$0xff] %vm522, %v4872
        %4905 = vst.msk [vmem:[#allocation2 + $0xe0] sm:$0xff] %vm522, %v4873
        %4906 = vst.msk [vmem:[#allocation2 + $0xe8] sm:$0xff] %vm522, %v4874
        %4907 = vst.msk [vmem:[#allocation2 + $0xf0] sm:$0xff] %vm522, %v4875
        %4908 = vst.msk [vmem:[#allocation2 + $0xf8] sm:$0xff] %vm522, %v4876
        %v4909 = vld [vmem:[%s978] sm:$0xe]
        %v4910 = vld [vmem:[%s978 + $0x4] sm:$0xf]
        %v4911 = vld [vmem:[%s978 + $0x8] sm:$0x1]
        %v4912 = vld [vmem:[%s978 + $0xc] sm:$0xe]
        %v4913 = vld [vmem:[%s978 + $0x10] sm:$0xf]
        %v4914 = vld [vmem:[%s978 + $0x14] sm:$0x1]
        %v4915 = vld [vmem:[%s978 + $0x18] sm:$0xe]
        %v4916 = vld [vmem:[%s978 + $0x1c] sm:$0xf]
        %v4917 = vld [vmem:[%s978 + $0x20] sm:$0x1]
        %v4918 = vld [vmem:[%s978 + $0x24] sm:$0xe]
        %v4919 = vld [vmem:[%s978 + $0x28] sm:$0xf]
        %v4920 = vld [vmem:[%s978 + $0x2c] sm:$0x1]
        %v4921 = vld [vmem:[%s978 + $0x30] sm:$0xe]
        %v4922 = vld [vmem:[%s978 + $0x34] sm:$0xf]
        %v4923 = vld [vmem:[%s978 + $0x38] sm:$0x1]
        %v4924 = vld [vmem:[%s978 + $0x3c] sm:$0xe]
        %v4925 = vld [vmem:[%s978 + $0x40] sm:$0xf]
        %v4926 = vld [vmem:[%s978 + $0x44] sm:$0x1]
        %v4927 = vld [vmem:[%s978 + $0x48] sm:$0xe]
        %v4928 = vld [vmem:[%s978 + $0x4c] sm:$0xf]
        %v4929 = vld [vmem:[%s978 + $0x50] sm:$0x1]
        %v4930 = vld [vmem:[%s978 + $0x54] sm:$0xe]
        %v4931 = vld [vmem:[%s978 + $0x58] sm:$0xf]
        %v4932 = vld [vmem:[%s978 + $0x5c] sm:$0x1]
        %v4933 = vld [vmem:[%s978 + $0x60] sm:$0xe]
        %v4934 = vld [vmem:[%s978 + $0x64] sm:$0xf]
        %v4935 = vld [vmem:[%s978 + $0x68] sm:$0x1]
        %v4936 = vld [vmem:[%s978 + $0x6c] sm:$0xe]
        %v4937 = vld [vmem:[%s978 + $0x70] sm:$0xf]
        %v4938 = vld [vmem:[%s978 + $0x74] sm:$0x1]
        %v4939 = vld [vmem:[%s978 + $0x78] sm:$0xe]
        %v4940 = vld [vmem:[%s978 + $0x7c] sm:$0xf]
        %v4941 = vld [vmem:[%s978 + $0x80] sm:$0x1]
        %v4942 = vld [vmem:[%s978 + $0x84] sm:$0xe]
        %v4943 = vld [vmem:[%s978 + $0x88] sm:$0xf]
        %v4944 = vld [vmem:[%s978 + $0x8c] sm:$0x1]
        %v4945 = vld [vmem:[%s978 + $0x90] sm:$0xe]
        %v4946 = vld [vmem:[%s978 + $0x94] sm:$0xf]
        %v4947 = vld [vmem:[%s978 + $0x98] sm:$0x1]
        %v4948 = vld [vmem:[%s978 + $0x9c] sm:$0xe]
        %v4949 = vld [vmem:[%s978 + $0xa0] sm:$0xf]
        %v4950 = vld [vmem:[%s978 + $0xa4] sm:$0x1]
        %v4951 = vld [vmem:[%s978 + $0xa8] sm:$0xe]
        %v4952 = vld [vmem:[%s978 + $0xac] sm:$0xf]
        %v4953 = vld [vmem:[%s978 + $0xb0] sm:$0x1]
        %v4954 = vld [vmem:[%s978 + $0xb4] sm:$0xe]
        %v4955 = vld [vmem:[%s978 + $0xb8] sm:$0xf]
        %v4956 = vld [vmem:[%s978 + $0xbc] sm:$0x1]
        %v5005 = vrot.slane %v4909, 5
        %v5006 = vrot.slane %v5005, 4
        %v5007 = vrot.slane %v4910, 5
        %v5008 = vsel %vm3872, %v5006, %v5007
        %v5009 = vrot.slane %v5007, 4
        %v5010 = vrot.slane %v4911, 5
        %v5011 = vsel %vm3872, %v5009, %v5010
        %v5012 = vrot.slane %v4912, 5
        %v5013 = vrot.slane %v5012, 4
        %v5014 = vrot.slane %v4913, 5
        %v5015 = vsel %vm3872, %v5013, %v5014
        %v5016 = vrot.slane %v5014, 4
        %v5017 = vrot.slane %v4914, 5
        %v5018 = vsel %vm3872, %v5016, %v5017
        %v5019 = vrot.slane %v4915, 5
        %v5020 = vrot.slane %v5019, 4
        %v5021 = vrot.slane %v4916, 5
        %v5022 = vsel %vm3872, %v5020, %v5021
        %v5023 = vrot.slane %v5021, 4
        %v5024 = vrot.slane %v4917, 5
        %v5025 = vsel %vm3872, %v5023, %v5024
        %v5026 = vrot.slane %v4918, 5
        %v5027 = vrot.slane %v5026, 4
        %v5028 = vrot.slane %v4919, 5
        %v5029 = vsel %vm3872, %v5027, %v5028
        %v5030 = vrot.slane %v5028, 4
        %v5031 = vrot.slane %v4920, 5
        %v5032 = vsel %vm3872, %v5030, %v5031
        %v5033 = vrot.slane %v4921, 5
        %v5034 = vrot.slane %v5033, 4
        %v5035 = vrot.slane %v4922, 5
        %v5036 = vsel %vm3872, %v5034, %v5035
        %v5037 = vrot.slane %v5035, 4
        %v5038 = vrot.slane %v4923, 5
        %v5039 = vsel %vm3872, %v5037, %v5038
        %v5040 = vrot.slane %v4924, 5
        %v5041 = vrot.slane %v5040, 4
        %v5042 = vrot.slane %v4925, 5
        %v5043 = vsel %vm3872, %v5041, %v5042
        %v5044 = vrot.slane %v5042, 4
        %v5045 = vrot.slane %v4926, 5
        %v5046 = vsel %vm3872, %v5044, %v5045
        %v5047 = vrot.slane %v4927, 5
        %v5048 = vrot.slane %v5047, 4
        %v5049 = vrot.slane %v4928, 5
        %v5050 = vsel %vm3872, %v5048, %v5049
        %v5051 = vrot.slane %v5049, 4
        %v5052 = vrot.slane %v4929, 5
        %v5053 = vsel %vm3872, %v5051, %v5052
        %v5054 = vrot.slane %v4930, 5
        %v5055 = vrot.slane %v5054, 4
        %v5056 = vrot.slane %v4931, 5
        %v5057 = vsel %vm3872, %v5055, %v5056
        %v5058 = vrot.slane %v5056, 4
        %v5059 = vrot.slane %v4932, 5
        %v5060 = vsel %vm3872, %v5058, %v5059
        %v5061 = vrot.slane %v4933, 5
        %v5062 = vrot.slane %v5061, 4
        %v5063 = vrot.slane %v4934, 5
        %v5064 = vsel %vm3872, %v5062, %v5063
        %v5065 = vrot.slane %v5063, 4
        %v5066 = vrot.slane %v4935, 5
        %v5067 = vsel %vm3872, %v5065, %v5066
        %v5068 = vrot.slane %v4936, 5
        %v5069 = vrot.slane %v5068, 4
        %v5070 = vrot.slane %v4937, 5
        %v5071 = vsel %vm3872, %v5069, %v5070
        %v5072 = vrot.slane %v5070, 4
        %v5073 = vrot.slane %v4938, 5
        %v5074 = vsel %vm3872, %v5072, %v5073
        %v5075 = vrot.slane %v4939, 5
        %v5076 = vrot.slane %v5075, 4
        %v5077 = vrot.slane %v4940, 5
        %v5078 = vsel %vm3872, %v5076, %v5077
        %v5079 = vrot.slane %v5077, 4
        %v5080 = vrot.slane %v4941, 5
        %v5081 = vsel %vm3872, %v5079, %v5080
        %v5082 = vrot.slane %v4942, 5
        %v5083 = vrot.slane %v5082, 4
        %v5084 = vrot.slane %v4943, 5
        %v5085 = vsel %vm3872, %v5083, %v5084
        %v5086 = vrot.slane %v5084, 4
        %v5087 = vrot.slane %v4944, 5
        %v5088 = vsel %vm3872, %v5086, %v5087
        %v5089 = vrot.slane %v4945, 5
        %v5090 = vrot.slane %v5089, 4
        %v5091 = vrot.slane %v4946, 5
        %v5092 = vsel %vm3872, %v5090, %v5091
        %v5093 = vrot.slane %v5091, 4
        %v5094 = vrot.slane %v4947, 5
        %v5095 = vsel %vm3872, %v5093, %v5094
        %v5096 = vrot.slane %v4948, 5
        %v5097 = vrot.slane %v5096, 4
        %v5098 = vrot.slane %v4949, 5
        %v5099 = vsel %vm3872, %v5097, %v5098
        %v5100 = vrot.slane %v5098, 4
        %v5101 = vrot.slane %v4950, 5
        %v5102 = vsel %vm3872, %v5100, %v5101
        %v5103 = vrot.slane %v4951, 5
        %v5104 = vrot.slane %v5103, 4
        %v5105 = vrot.slane %v4952, 5
        %v5106 = vsel %vm3872, %v5104, %v5105
        %v5107 = vrot.slane %v5105, 4
        %v5108 = vrot.slane %v4953, 5
        %v5109 = vsel %vm3872, %v5107, %v5108
        %v5110 = vrot.slane %v4954, 5
        %v5111 = vrot.slane %v5110, 4
        %v5112 = vrot.slane %v4955, 5
        %v5113 = vsel %vm3872, %v5111, %v5112
        %v5114 = vrot.slane %v5112, 4
        %v5115 = vrot.slane %v4956, 5
        %v5116 = vsel %vm3872, %v5114, %v5115
        %s5117 = scalar_lea.vmem %s1, 16
        %v5118 = vld [vmem:[%s5117] sm:$0x3]
        %v5119 = vunpack.c.l.b16 %v5008
        %v5120 = vunpack.c.l.b16 %v5011
        %v5121 = vunpack.c.l.b16 %v5015
        %v5122 = vunpack.c.l.b16 %v5018
        %v5123 = vunpack.c.l.b16 %v5022
        %v5124 = vunpack.c.l.b16 %v5025
        %v5125 = vunpack.c.l.b16 %v5029
        %v5126 = vunpack.c.l.b16 %v5032
        %v5127 = vunpack.c.l.b16 %v5036
        %v5128 = vunpack.c.l.b16 %v5039
        %v5129 = vunpack.c.l.b16 %v5043
        %v5130 = vunpack.c.l.b16 %v5046
        %v5131 = vunpack.c.l.b16 %v5050
        %v5132 = vunpack.c.l.b16 %v5053
        %v5133 = vunpack.c.l.b16 %v5057
        %v5134 = vunpack.c.l.b16 %v5060
        %v5135 = vunpack.c.l.b16 %v5064
        %v5136 = vunpack.c.l.b16 %v5067
        %v5137 = vunpack.c.l.b16 %v5071
        %v5138 = vunpack.c.l.b16 %v5074
        %v5139 = vunpack.c.l.b16 %v5078
        %v5140 = vunpack.c.l.b16 %v5081
        %v5141 = vunpack.c.l.b16 %v5085
        %v5142 = vunpack.c.l.b16 %v5088
        %v5143 = vunpack.c.l.b16 %v5092
        %v5144 = vunpack.c.l.b16 %v5095
        %v5145 = vunpack.c.l.b16 %v5099
        %v5146 = vunpack.c.l.b16 %v5102
        %v5147 = vunpack.c.l.b16 %v5106
        %v5148 = vunpack.c.l.b16 %v5109
        %v5149 = vunpack.c.l.b16 %v5113
        %v5150 = vunpack.c.l.b16 %v5116
        %v5151 = vpack.c.b16 %v5120, %v5119
        %v5152 = vpack.c.b16 %v5122, %v5121
        %v5153 = vpack.c.b16 %v5124, %v5123
        %v5154 = vpack.c.b16 %v5126, %v5125
        %v5155 = vpack.c.b16 %v5128, %v5127
        %v5156 = vpack.c.b16 %v5130, %v5129
        %v5157 = vpack.c.b16 %v5132, %v5131
        %v5158 = vpack.c.b16 %v5134, %v5133
        %v5159 = vpack.c.b16 %v5136, %v5135
        %v5160 = vpack.c.b16 %v5138, %v5137
        %v5161 = vpack.c.b16 %v5140, %v5139
        %v5162 = vpack.c.b16 %v5142, %v5141
        %v5163 = vpack.c.b16 %v5144, %v5143
        %v5164 = vpack.c.b16 %v5146, %v5145
        %v5165 = vpack.c.b16 %v5148, %v5147
        %v5166 = vpack.c.b16 %v5150, %v5149
        %v5168 = vsel %vm305, %v5151, 0
        %v5171 = vsel %vm305, %v5152, 0
        %v5174 = vsel %vm305, %v5153, 0
        %v5177 = vsel %vm305, %v5154, 0
        %v5180 = vsel %vm305, %v5155, 0
        %v5183 = vsel %vm305, %v5156, 0
        %v5186 = vsel %vm305, %v5157, 0
        %v5189 = vsel %vm305, %v5158, 0
        %v5192 = vsel %vm305, %v5159, 0
        %v5195 = vsel %vm305, %v5160, 0
        %v5198 = vsel %vm305, %v5161, 0
        %v5201 = vsel %vm305, %v5162, 0
        %v5204 = vsel %vm305, %v5163, 0
        %v5207 = vsel %vm305, %v5164, 0
        %v5210 = vsel %vm305, %v5165, 0
        %v5213 = vsel %vm305, %v5166, 0
        %v5216 = vand.u32 %v5118, %v357
        %5218 = vmatprep.subr.bf16.mxu0 0
        %5219 = vmatpush1.bf16.msra.mxu0 0
        %5220 = vmatprep.subr.bf16.mxu0 0
        %5221 = vmatpush1.bf16.msra.mxu0 0
        %5222 = vmatprep.subr.bf16.mxu0 0
        %5223 = vmatpush1.bf16.msra.mxu0 0
        %5224 = vmatprep.subr.bf16.mxu0 0
        %5225 = vmatpush1.bf16.msra.mxu0 0
        %5226 = vmatprep.subr.bf16.mxu0 0
        %5227 = vmatpush1.bf16.msra.mxu0 0
        %5228 = vmatprep.subr.bf16.mxu0 0
        %5229 = vmatpush1.bf16.msra.mxu0 0
        %5230 = vmatprep.subr.bf16.mxu0 0
        %5231 = vmatpush1.bf16.msra.mxu0 0
        %5232 = vmatprep.subr.bf16.mxu0 0
        %5233 = vmatpush1.bf16.msra.mxu0 %v5216
        %5234 = vmatprep.subr.bf16.mxu0 0
        %5235 = vmatpush2.bf16.msra.mxu0 0
        %5236 = vmatprep.subr.bf16.mxu0 0
        %5237 = vmatpush2.bf16.msra.mxu0 0
        %5238 = vmatprep.subr.bf16.mxu0 0
        %5239 = vmatpush2.bf16.msra.mxu0 0
        %5240 = vmatprep.subr.bf16.mxu0 0
        %5241 = vmatpush2.bf16.msra.mxu0 0
        %5242 = vmatprep.subr.bf16.mxu0 0
        %5243 = vmatpush2.bf16.msra.mxu0 0
        %5244 = vmatprep.subr.bf16.mxu0 0
        %5245 = vmatpush2.bf16.msra.mxu0 0
        %5246 = vmatprep.subr.bf16.mxu0 0
        %5247 = vmatpush2.bf16.msra.mxu0 0
        %5248 = vmatprep.subr.bf16.mxu0 0
        %5249 = vmatpush2.bf16.msra.mxu0 0
        %5250 = vmatprep.mubr.bf16.mxu0 0
        %5251 = vmatmul.mubr.bf16.gmra.mxu0 %v5168
        %v5252 = vpop.f32.mrf.mxu0
        %v5253 = vadd.f32 0.0, %v5252
        %v5254 = vpop.f32.mrf.mxu0
        %v5255 = vpop.f32.mrf.mxu0
        %v5256 = vadd.f32 0.0, %v5255
        %v5257 = vpop.f32.mrf.mxu0
        %5258 = vmatprep.mubr.bf16.mxu0 0
        %5259 = vmatmul.mubr.bf16.gmra.mxu0 %v5171
        %v5260 = vpop.f32.mrf.mxu0
        %v5261 = vadd.f32 0.0, %v5260
        %v5262 = vpop.f32.mrf.mxu0
        %v5263 = vpop.f32.mrf.mxu0
        %v5264 = vadd.f32 0.0, %v5263
        %v5265 = vpop.f32.mrf.mxu0
        %5266 = vmatprep.mubr.bf16.mxu0 0
        %5267 = vmatmul.mubr.bf16.gmra.mxu0 %v5174
        %v5268 = vpop.f32.mrf.mxu0
        %v5269 = vadd.f32 0.0, %v5268
        %v5270 = vpop.f32.mrf.mxu0
        %v5271 = vpop.f32.mrf.mxu0
        %v5272 = vadd.f32 0.0, %v5271
        %v5273 = vpop.f32.mrf.mxu0
        %5274 = vmatprep.mubr.bf16.mxu0 0
        %5275 = vmatmul.mubr.bf16.gmra.mxu0 %v5177
        %v5276 = vpop.f32.mrf.mxu0
        %v5277 = vadd.f32 0.0, %v5276
        %v5278 = vpop.f32.mrf.mxu0
        %v5279 = vpop.f32.mrf.mxu0
        %v5280 = vadd.f32 0.0, %v5279
        %v5281 = vpop.f32.mrf.mxu0
        %5282 = vmatprep.mubr.bf16.mxu0 0
        %5283 = vmatmul.mubr.bf16.gmra.mxu0 %v5180
        %v5284 = vpop.f32.mrf.mxu0
        %v5285 = vadd.f32 0.0, %v5284
        %v5286 = vpop.f32.mrf.mxu0
        %v5287 = vpop.f32.mrf.mxu0
        %v5288 = vadd.f32 0.0, %v5287
        %v5289 = vpop.f32.mrf.mxu0
        %5290 = vmatprep.mubr.bf16.mxu0 0
        %5291 = vmatmul.mubr.bf16.gmra.mxu0 %v5183
        %v5292 = vpop.f32.mrf.mxu0
        %v5293 = vadd.f32 0.0, %v5292
        %v5294 = vpop.f32.mrf.mxu0
        %v5295 = vpop.f32.mrf.mxu0
        %v5296 = vadd.f32 0.0, %v5295
        %v5297 = vpop.f32.mrf.mxu0
        %5298 = vmatprep.mubr.bf16.mxu0 0
        %5299 = vmatmul.mubr.bf16.gmra.mxu0 %v5186
        %v5300 = vpop.f32.mrf.mxu0
        %v5301 = vadd.f32 0.0, %v5300
        %v5302 = vpop.f32.mrf.mxu0
        %v5303 = vpop.f32.mrf.mxu0
        %v5304 = vadd.f32 0.0, %v5303
        %v5305 = vpop.f32.mrf.mxu0
        %5306 = vmatprep.mubr.bf16.mxu0 0
        %5307 = vmatmul.mubr.bf16.gmra.mxu0 %v5189
        %v5308 = vpop.f32.mrf.mxu0
        %v5309 = vadd.f32 0.0, %v5308
        %v5310 = vpop.f32.mrf.mxu0
        %v5311 = vpop.f32.mrf.mxu0
        %v5312 = vadd.f32 0.0, %v5311
        %v5313 = vpop.f32.mrf.mxu0
        %5314 = vmatprep.mubr.bf16.mxu0 0
        %5315 = vmatmul.mubr.bf16.gmra.mxu0 %v5192
        %v5316 = vpop.f32.mrf.mxu0
        %v5317 = vadd.f32 0.0, %v5316
        %v5318 = vpop.f32.mrf.mxu0
        %v5319 = vpop.f32.mrf.mxu0
        %v5320 = vadd.f32 0.0, %v5319
        %v5321 = vpop.f32.mrf.mxu0
        %5322 = vmatprep.mubr.bf16.mxu0 0
        %5323 = vmatmul.mubr.bf16.gmra.mxu0 %v5195
        %v5324 = vpop.f32.mrf.mxu0
        %v5325 = vadd.f32 0.0, %v5324
        %v5326 = vpop.f32.mrf.mxu0
        %v5327 = vpop.f32.mrf.mxu0
        %v5328 = vadd.f32 0.0, %v5327
        %v5329 = vpop.f32.mrf.mxu0
        %5330 = vmatprep.mubr.bf16.mxu0 0
        %5331 = vmatmul.mubr.bf16.gmra.mxu0 %v5198
        %v5332 = vpop.f32.mrf.mxu0
        %v5333 = vadd.f32 0.0, %v5332
        %v5334 = vpop.f32.mrf.mxu0
        %v5335 = vpop.f32.mrf.mxu0
        %v5336 = vadd.f32 0.0, %v5335
        %v5337 = vpop.f32.mrf.mxu0
        %5338 = vmatprep.mubr.bf16.mxu0 0
        %5339 = vmatmul.mubr.bf16.gmra.mxu0 %v5201
        %v5340 = vpop.f32.mrf.mxu0
        %v5341 = vadd.f32 0.0, %v5340
        %v5342 = vpop.f32.mrf.mxu0
        %v5343 = vpop.f32.mrf.mxu0
        %v5344 = vadd.f32 0.0, %v5343
        %v5345 = vpop.f32.mrf.mxu0
        %5346 = vmatprep.mubr.bf16.mxu0 0
        %5347 = vmatmul.mubr.bf16.gmra.mxu0 %v5204
        %v5348 = vpop.f32.mrf.mxu0
        %v5349 = vadd.f32 0.0, %v5348
        %v5350 = vpop.f32.mrf.mxu0
        %v5351 = vpop.f32.mrf.mxu0
        %v5352 = vadd.f32 0.0, %v5351
        %v5353 = vpop.f32.mrf.mxu0
        %5354 = vmatprep.mubr.bf16.mxu0 0
        %5355 = vmatmul.mubr.bf16.gmra.mxu0 %v5207
        %v5356 = vpop.f32.mrf.mxu0
        %v5357 = vadd.f32 0.0, %v5356
        %v5358 = vpop.f32.mrf.mxu0
        %v5359 = vpop.f32.mrf.mxu0
        %v5360 = vadd.f32 0.0, %v5359
        %v5361 = vpop.f32.mrf.mxu0
        %5362 = vmatprep.mubr.bf16.mxu0 0
        %5363 = vmatmul.mubr.bf16.gmra.mxu0 %v5210
        %v5364 = vpop.f32.mrf.mxu0
        %v5365 = vadd.f32 0.0, %v5364
        %v5366 = vpop.f32.mrf.mxu0
        %v5367 = vpop.f32.mrf.mxu0
        %v5368 = vadd.f32 0.0, %v5367
        %v5369 = vpop.f32.mrf.mxu0
        %5370 = vmatprep.mubr.bf16.mxu0 0
        %5371 = vmatmul.mubr.bf16.gmra.mxu0 %v5213
        %v5372 = vpop.f32.mrf.mxu0
        %v5373 = vadd.f32 0.0, %v5372
        %v5374 = vpop.f32.mrf.mxu0
        %v5375 = vpop.f32.mrf.mxu0
        %v5376 = vadd.f32 0.0, %v5375
        %v5377 = vpop.f32.mrf.mxu0
        %5378 = vdwg.mxu0
        %v5379 = vld [vmem:[#allocation2] sm:$0xff]
        %v5380 = vld [vmem:[#allocation2 + $0x8] sm:$0xff]
        %v5381 = vld [vmem:[#allocation2 + $0x10] sm:$0xff]
        %v5382 = vld [vmem:[#allocation2 + $0x18] sm:$0xff]
        %v5383 = vld [vmem:[#allocation2 + $0x20] sm:$0xff]
        %v5384 = vld [vmem:[#allocation2 + $0x28] sm:$0xff]
        %v5385 = vld [vmem:[#allocation2 + $0x30] sm:$0xff]
        %v5386 = vld [vmem:[#allocation2 + $0x38] sm:$0xff]
        %v5387 = vld [vmem:[#allocation2 + $0x40] sm:$0xff]
        %v5388 = vld [vmem:[#allocation2 + $0x48] sm:$0xff]
        %v5389 = vld [vmem:[#allocation2 + $0x50] sm:$0xff]
        %v5390 = vld [vmem:[#allocation2 + $0x58] sm:$0xff]
        %v5391 = vld [vmem:[#allocation2 + $0x60] sm:$0xff]
        %v5392 = vld [vmem:[#allocation2 + $0x68] sm:$0xff]
        %v5393 = vld [vmem:[#allocation2 + $0x70] sm:$0xff]
        %v5394 = vld [vmem:[#allocation2 + $0x78] sm:$0xff]
        %v5395 = vld [vmem:[#allocation2 + $0x80] sm:$0xff]
        %v5396 = vld [vmem:[#allocation2 + $0x88] sm:$0xff]
        %v5397 = vld [vmem:[#allocation2 + $0x90] sm:$0xff]
        %v5398 = vld [vmem:[#allocation2 + $0x98] sm:$0xff]
        %v5399 = vld [vmem:[#allocation2 + $0xa0] sm:$0xff]
        %v5400 = vld [vmem:[#allocation2 + $0xa8] sm:$0xff]
        %v5401 = vld [vmem:[#allocation2 + $0xb0] sm:$0xff]
        %v5402 = vld [vmem:[#allocation2 + $0xb8] sm:$0xff]
        %v5403 = vld [vmem:[#allocation2 + $0xc0] sm:$0xff]
        %v5404 = vld [vmem:[#allocation2 + $0xc8] sm:$0xff]
        %v5405 = vld [vmem:[#allocation2 + $0xd0] sm:$0xff]
        %v5406 = vld [vmem:[#allocation2 + $0xd8] sm:$0xff]
        %v5407 = vld [vmem:[#allocation2 + $0xe0] sm:$0xff]
        %v5408 = vld [vmem:[#allocation2 + $0xe8] sm:$0xff]
        %v5409 = vld [vmem:[#allocation2 + $0xf0] sm:$0xff]
        %v5410 = vld [vmem:[#allocation2 + $0xf8] sm:$0xff]
        %v5411 = vadd.f32 %v5379, %v5253
        %v5412 = vadd.f32 %v5380, %v5256
        %v5413 = vadd.f32 %v5381, %v5261
        %v5414 = vadd.f32 %v5382, %v5264
        %v5415 = vadd.f32 %v5383, %v5269
        %v5416 = vadd.f32 %v5384, %v5272
        %v5417 = vadd.f32 %v5385, %v5277
        %v5418 = vadd.f32 %v5386, %v5280
        %v5419 = vadd.f32 %v5387, %v5285
        %v5420 = vadd.f32 %v5388, %v5288
        %v5421 = vadd.f32 %v5389, %v5293
        %v5422 = vadd.f32 %v5390, %v5296
        %v5423 = vadd.f32 %v5391, %v5301
        %v5424 = vadd.f32 %v5392, %v5304
        %v5425 = vadd.f32 %v5393, %v5309
        %v5426 = vadd.f32 %v5394, %v5312
        %v5427 = vadd.f32 %v5395, %v5317
        %v5428 = vadd.f32 %v5396, %v5320
        %v5429 = vadd.f32 %v5397, %v5325
        %v5430 = vadd.f32 %v5398, %v5328
        %v5431 = vadd.f32 %v5399, %v5333
        %v5432 = vadd.f32 %v5400, %v5336
        %v5433 = vadd.f32 %v5401, %v5341
        %v5434 = vadd.f32 %v5402, %v5344
        %v5435 = vadd.f32 %v5403, %v5349
        %v5436 = vadd.f32 %v5404, %v5352
        %v5437 = vadd.f32 %v5405, %v5357
        %v5438 = vadd.f32 %v5406, %v5360
        %v5439 = vadd.f32 %v5407, %v5365
        %v5440 = vadd.f32 %v5408, %v5368
        %v5441 = vadd.f32 %v5409, %v5373
        %v5442 = vadd.f32 %v5410, %v5376
        %5443 = vst.msk [vmem:[#allocation2] sm:$0xff] %vm522, %v5411
        %5444 = vst.msk [vmem:[#allocation2 + $0x8] sm:$0xff] %vm522, %v5412
        %5445 = vst.msk [vmem:[#allocation2 + $0x10] sm:$0xff] %vm522, %v5413
        %5446 = vst.msk [vmem:[#allocation2 + $0x18] sm:$0xff] %vm522, %v5414
        %5447 = vst.msk [vmem:[#allocation2 + $0x20] sm:$0xff] %vm522, %v5415
        %5448 = vst.msk [vmem:[#allocation2 + $0x28] sm:$0xff] %vm522, %v5416
        %5449 = vst.msk [vmem:[#allocation2 + $0x30] sm:$0xff] %vm522, %v5417
        %5450 = vst.msk [vmem:[#allocation2 + $0x38] sm:$0xff] %vm522, %v5418
        %5451 = vst.msk [vmem:[#allocation2 + $0x40] sm:$0xff] %vm522, %v5419
        %5452 = vst.msk [vmem:[#allocation2 + $0x48] sm:$0xff] %vm522, %v5420
        %5453 = vst.msk [vmem:[#allocation2 + $0x50] sm:$0xff] %vm522, %v5421
        %5454 = vst.msk [vmem:[#allocation2 + $0x58] sm:$0xff] %vm522, %v5422
        %5455 = vst.msk [vmem:[#allocation2 + $0x60] sm:$0xff] %vm522, %v5423
        %5456 = vst.msk [vmem:[#allocation2 + $0x68] sm:$0xff] %vm522, %v5424
        %5457 = vst.msk [vmem:[#allocation2 + $0x70] sm:$0xff] %vm522, %v5425
        %5458 = vst.msk [vmem:[#allocation2 + $0x78] sm:$0xff] %vm522, %v5426
        %5459 = vst.msk [vmem:[#allocation2 + $0x80] sm:$0xff] %vm522, %v5427
        %5460 = vst.msk [vmem:[#allocation2 + $0x88] sm:$0xff] %vm522, %v5428
        %5461 = vst.msk [vmem:[#allocation2 + $0x90] sm:$0xff] %vm522, %v5429
        %5462 = vst.msk [vmem:[#allocation2 + $0x98] sm:$0xff] %vm522, %v5430
        %5463 = vst.msk [vmem:[#allocation2 + $0xa0] sm:$0xff] %vm522, %v5431
        %5464 = vst.msk [vmem:[#allocation2 + $0xa8] sm:$0xff] %vm522, %v5432
        %5465 = vst.msk [vmem:[#allocation2 + $0xb0] sm:$0xff] %vm522, %v5433
        %5466 = vst.msk [vmem:[#allocation2 + $0xb8] sm:$0xff] %vm522, %v5434
        %5467 = vst.msk [vmem:[#allocation2 + $0xc0] sm:$0xff] %vm522, %v5435
        %5468 = vst.msk [vmem:[#allocation2 + $0xc8] sm:$0xff] %vm522, %v5436
        %5469 = vst.msk [vmem:[#allocation2 + $0xd0] sm:$0xff] %vm522, %v5437
        %5470 = vst.msk [vmem:[#allocation2 + $0xd8] sm:$0xff] %vm522, %v5438
        %5471 = vst.msk [vmem:[#allocation2 + $0xe0] sm:$0xff] %vm522, %v5439
        %5472 = vst.msk [vmem:[#allocation2 + $0xe8] sm:$0xff] %vm522, %v5440
        %5473 = vst.msk [vmem:[#allocation2 + $0xf0] sm:$0xff] %vm522, %v5441
        %5474 = vst.msk [vmem:[#allocation2 + $0xf8] sm:$0xff] %vm522, %v5442
        %v5475 = vld [vmem:[#allocation2] sm:$0xff]
        %v5476 = vld [vmem:[#allocation2 + $0x8] sm:$0xff]
        %v5477 = vld [vmem:[#allocation2 + $0x10] sm:$0xff]
        %v5478 = vld [vmem:[#allocation2 + $0x18] sm:$0xff]
        %v5479 = vld [vmem:[#allocation2 + $0x20] sm:$0xff]
        %v5480 = vld [vmem:[#allocation2 + $0x28] sm:$0xff]
        %v5481 = vld [vmem:[#allocation2 + $0x30] sm:$0xff]
        %v5482 = vld [vmem:[#allocation2 + $0x38] sm:$0xff]
        %v5483 = vld [vmem:[#allocation2 + $0x40] sm:$0xff]
        %v5484 = vld [vmem:[#allocation2 + $0x48] sm:$0xff]
        %v5485 = vld [vmem:[#allocation2 + $0x50] sm:$0xff]
        %v5486 = vld [vmem:[#allocation2 + $0x58] sm:$0xff]
        %v5487 = vld [vmem:[#allocation2 + $0x60] sm:$0xff]
        %v5488 = vld [vmem:[#allocation2 + $0x68] sm:$0xff]
        %v5489 = vld [vmem:[#allocation2 + $0x70] sm:$0xff]
        %v5490 = vld [vmem:[#allocation2 + $0x78] sm:$0xff]
        %v5491 = vld [vmem:[#allocation2 + $0x80] sm:$0xff]
        %v5492 = vld [vmem:[#allocation2 + $0x88] sm:$0xff]
        %v5493 = vld [vmem:[#allocation2 + $0x90] sm:$0xff]
        %v5494 = vld [vmem:[#allocation2 + $0x98] sm:$0xff]
        %v5495 = vld [vmem:[#allocation2 + $0xa0] sm:$0xff]
        %v5496 = vld [vmem:[#allocation2 + $0xa8] sm:$0xff]
        %v5497 = vld [vmem:[#allocation2 + $0xb0] sm:$0xff]
        %v5498 = vld [vmem:[#allocation2 + $0xb8] sm:$0xff]
        %v5499 = vld [vmem:[#allocation2 + $0xc0] sm:$0xff]
        %v5500 = vld [vmem:[#allocation2 + $0xc8] sm:$0xff]
        %v5501 = vld [vmem:[#allocation2 + $0xd0] sm:$0xff]
        %v5502 = vld [vmem:[#allocation2 + $0xd8] sm:$0xff]
        %v5503 = vld [vmem:[#allocation2 + $0xe0] sm:$0xff]
        %v5504 = vld [vmem:[#allocation2 + $0xe8] sm:$0xff]
        %v5505 = vld [vmem:[#allocation2 + $0xf0] sm:$0xff]
        %v5506 = vld [vmem:[#allocation2 + $0xf8] sm:$0xff]
        %v5507 = vld [vmem:[%s2] sm:$0x1]
        %v5509 = vlaneseq
        %v5510 = vshrl.u32 %v5509, 7
        %v5511 = vsub.s32 0, %v5510
        %v5512 = vrot.slane %v5507, %v5511
        %v5514 = vadd.f32 %v5475, %v5512
        %v5515 = vadd.f32 %v5476, %v5512
        %v5516 = vadd.f32 %v5477, %v5512
        %v5517 = vadd.f32 %v5478, %v5512
        %v5518 = vadd.f32 %v5479, %v5512
        %v5519 = vadd.f32 %v5480, %v5512
        %v5520 = vadd.f32 %v5481, %v5512
        %v5521 = vadd.f32 %v5482, %v5512
        %v5522 = vadd.f32 %v5483, %v5512
        %v5523 = vadd.f32 %v5484, %v5512
        %v5524 = vadd.f32 %v5485, %v5512
        %v5525 = vadd.f32 %v5486, %v5512
        %v5526 = vadd.f32 %v5487, %v5512
        %v5527 = vadd.f32 %v5488, %v5512
        %v5528 = vadd.f32 %v5489, %v5512
        %v5529 = vadd.f32 %v5490, %v5512
        %v5530 = vadd.f32 %v5491, %v5512
        %v5531 = vadd.f32 %v5492, %v5512
        %v5532 = vadd.f32 %v5493, %v5512
        %v5533 = vadd.f32 %v5494, %v5512
        %v5534 = vadd.f32 %v5495, %v5512
        %v5535 = vadd.f32 %v5496, %v5512
        %v5536 = vadd.f32 %v5497, %v5512
        %v5537 = vadd.f32 %v5498, %v5512
        %v5538 = vadd.f32 %v5499, %v5512
        %v5539 = vadd.f32 %v5500, %v5512
        %v5540 = vadd.f32 %v5501, %v5512
        %v5541 = vadd.f32 %v5502, %v5512
        %v5542 = vadd.f32 %v5503, %v5512
        %v5543 = vadd.f32 %v5504, %v5512
        %v5544 = vadd.f32 %v5505, %v5512
        %v5545 = vadd.f32 %v5506, %v5512
        %v5546 = vmax.f32 %v5514, 0.0
        %v5547 = vmax.f32 %v5515, 0.0
        %v5548 = vmax.f32 %v5516, 0.0
        %v5549 = vmax.f32 %v5517, 0.0
        %v5550 = vmax.f32 %v5518, 0.0
        %v5551 = vmax.f32 %v5519, 0.0
        %v5552 = vmax.f32 %v5520, 0.0
        %v5553 = vmax.f32 %v5521, 0.0
        %v5554 = vmax.f32 %v5522, 0.0
        %v5555 = vmax.f32 %v5523, 0.0
        %v5556 = vmax.f32 %v5524, 0.0
        %v5557 = vmax.f32 %v5525, 0.0
        %v5558 = vmax.f32 %v5526, 0.0
        %v5559 = vmax.f32 %v5527, 0.0
        %v5560 = vmax.f32 %v5528, 0.0
        %v5561 = vmax.f32 %v5529, 0.0
        %v5562 = vmax.f32 %v5530, 0.0
        %v5563 = vmax.f32 %v5531, 0.0
        %v5564 = vmax.f32 %v5532, 0.0
        %v5565 = vmax.f32 %v5533, 0.0
        %v5566 = vmax.f32 %v5534, 0.0
        %v5567 = vmax.f32 %v5535, 0.0
        %v5568 = vmax.f32 %v5536, 0.0
        %v5569 = vmax.f32 %v5537, 0.0
        %v5570 = vmax.f32 %v5538, 0.0
        %v5571 = vmax.f32 %v5539, 0.0
        %v5572 = vmax.f32 %v5540, 0.0
        %v5573 = vmax.f32 %v5541, 0.0
        %v5574 = vmax.f32 %v5542, 0.0
        %v5575 = vmax.f32 %v5543, 0.0
        %v5576 = vmax.f32 %v5544, 0.0
        %v5577 = vmax.f32 %v5545, 0.0
        %v5578 = vpack.c.bf16 %v5547, %v5546
        %v5579 = vpack.c.bf16 %v5549, %v5548
        %v5580 = vpack.c.bf16 %v5551, %v5550
        %v5581 = vpack.c.bf16 %v5553, %v5552
        %v5582 = vpack.c.bf16 %v5555, %v5554
        %v5583 = vpack.c.bf16 %v5557, %v5556
        %v5584 = vpack.c.bf16 %v5559, %v5558
        %v5585 = vpack.c.bf16 %v5561, %v5560
        %v5586 = vpack.c.bf16 %v5563, %v5562
        %v5587 = vpack.c.bf16 %v5565, %v5564
        %v5588 = vpack.c.bf16 %v5567, %v5566
        %v5589 = vpack.c.bf16 %v5569, %v5568
        %v5590 = vpack.c.bf16 %v5571, %v5570
        %v5591 = vpack.c.bf16 %v5573, %v5572
        %v5592 = vpack.c.bf16 %v5575, %v5574
        %v5593 = vpack.c.bf16 %v5577, %v5576
        %v5610 = vunpack.c.l.b16 %v5578
        %v5611 = vunpack.c.h.b16 %v5578
        %v5612 = vunpack.c.l.b16 %v5579
        %v5613 = vunpack.c.h.b16 %v5579
        %v5614 = vunpack.c.l.b16 %v5580
        %v5615 = vunpack.c.h.b16 %v5580
        %v5616 = vunpack.c.l.b16 %v5581
        %v5617 = vunpack.c.h.b16 %v5581
        %v5618 = vunpack.c.l.b16 %v5582
        %v5619 = vunpack.c.h.b16 %v5582
        %v5620 = vunpack.c.l.b16 %v5583
        %v5621 = vunpack.c.h.b16 %v5583
        %v5622 = vunpack.c.l.b16 %v5584
        %v5623 = vunpack.c.h.b16 %v5584
        %v5624 = vunpack.c.l.b16 %v5585
        %v5625 = vunpack.c.h.b16 %v5585
        %v5626 = vunpack.c.l.b16 %v5586
        %v5627 = vunpack.c.h.b16 %v5586
        %v5628 = vunpack.c.l.b16 %v5587
        %v5629 = vunpack.c.h.b16 %v5587
        %v5630 = vunpack.c.l.b16 %v5588
        %v5631 = vunpack.c.h.b16 %v5588
        %v5632 = vunpack.c.l.b16 %v5589
        %v5633 = vunpack.c.h.b16 %v5589
        %v5634 = vunpack.c.l.b16 %v5590
        %v5635 = vunpack.c.h.b16 %v5590
        %v5636 = vunpack.c.l.b16 %v5591
        %v5637 = vunpack.c.h.b16 %v5591
        %v5638 = vunpack.c.l.b16 %v5592
        %v5639 = vunpack.c.h.b16 %v5592
        %v5640 = vunpack.c.l.b16 %v5593
        %v5641 = vunpack.c.h.b16 %v5593
        %v5642 = vpack.c.b16 %v5610, %v5610
        %v5643 = vpack.c.b16 %v5611, %v5611
        %v5644 = vpack.c.b16 %v5612, %v5612
        %v5645 = vpack.c.b16 %v5613, %v5613
        %v5646 = vpack.c.b16 %v5614, %v5614
        %v5647 = vpack.c.b16 %v5615, %v5615
        %v5648 = vpack.c.b16 %v5616, %v5616
        %v5649 = vpack.c.b16 %v5617, %v5617
        %v5650 = vpack.c.b16 %v5618, %v5618
        %v5651 = vpack.c.b16 %v5619, %v5619
        %v5652 = vpack.c.b16 %v5620, %v5620
        %v5653 = vpack.c.b16 %v5621, %v5621
        %v5654 = vpack.c.b16 %v5622, %v5622
        %v5655 = vpack.c.b16 %v5623, %v5623
        %v5656 = vpack.c.b16 %v5624, %v5624
        %v5657 = vpack.c.b16 %v5625, %v5625
        %v5658 = vpack.c.b16 %v5626, %v5626
        %v5659 = vpack.c.b16 %v5627, %v5627
        %v5660 = vpack.c.b16 %v5628, %v5628
        %v5661 = vpack.c.b16 %v5629, %v5629
        %v5662 = vpack.c.b16 %v5630, %v5630
        %v5663 = vpack.c.b16 %v5631, %v5631
        %v5664 = vpack.c.b16 %v5632, %v5632
        %v5665 = vpack.c.b16 %v5633, %v5633
        %v5666 = vpack.c.b16 %v5634, %v5634
        %v5667 = vpack.c.b16 %v5635, %v5635
        %v5668 = vpack.c.b16 %v5636, %v5636
        %v5669 = vpack.c.b16 %v5637, %v5637
        %v5670 = vpack.c.b16 %v5638, %v5638
        %v5671 = vpack.c.b16 %v5639, %v5639
        %v5672 = vpack.c.b16 %v5640, %v5640
        %v5673 = vpack.c.b16 %v5641, %v5641
        %vm5706 = vcmask 519168
        %5707 = vst.msk [vmem:[%s182] sm:$0xf] %vm5706, %v5642
        %5708 = vst.msk [vmem:[%s182 + $0x4] sm:$0xf] %vm5706, %v5643
        %5709 = vst.msk [vmem:[%s182 + $0x8] sm:$0xf] %vm5706, %v5644
        %5710 = vst.msk [vmem:[%s182 + $0xc] sm:$0xf] %vm5706, %v5645
        %5711 = vst.msk [vmem:[%s182 + $0x10] sm:$0xf] %vm5706, %v5646
        %5712 = vst.msk [vmem:[%s182 + $0x14] sm:$0xf] %vm5706, %v5647
        %5713 = vst.msk [vmem:[%s182 + $0x18] sm:$0xf] %vm5706, %v5648
        %5714 = vst.msk [vmem:[%s182 + $0x1c] sm:$0xf] %vm5706, %v5649
        %5715 = vst.msk [vmem:[%s182 + $0x20] sm:$0xf] %vm5706, %v5650
        %5716 = vst.msk [vmem:[%s182 + $0x24] sm:$0xf] %vm5706, %v5651
        %5717 = vst.msk [vmem:[%s182 + $0x28] sm:$0xf] %vm5706, %v5652
        %5718 = vst.msk [vmem:[%s182 + $0x2c] sm:$0xf] %vm5706, %v5653
        %5719 = vst.msk [vmem:[%s182 + $0x30] sm:$0xf] %vm5706, %v5654
        %5720 = vst.msk [vmem:[%s182 + $0x34] sm:$0xf] %vm5706, %v5655
        %5721 = vst.msk [vmem:[%s182 + $0x38] sm:$0xf] %vm5706, %v5656
        %5722 = vst.msk [vmem:[%s182 + $0x3c] sm:$0xf] %vm5706, %v5657
        %5723 = vst.msk [vmem:[%s182 + $0x40] sm:$0xf] %vm5706, %v5658
        %5724 = vst.msk [vmem:[%s182 + $0x44] sm:$0xf] %vm5706, %v5659
        %5725 = vst.msk [vmem:[%s182 + $0x48] sm:$0xf] %vm5706, %v5660
        %5726 = vst.msk [vmem:[%s182 + $0x4c] sm:$0xf] %vm5706, %v5661
        %5727 = vst.msk [vmem:[%s182 + $0x50] sm:$0xf] %vm5706, %v5662
        %5728 = vst.msk [vmem:[%s182 + $0x54] sm:$0xf] %vm5706, %v5663
        %5729 = vst.msk [vmem:[%s182 + $0x58] sm:$0xf] %vm5706, %v5664
        %5730 = vst.msk [vmem:[%s182 + $0x5c] sm:$0xf] %vm5706, %v5665
        %5731 = vst.msk [vmem:[%s182 + $0x60] sm:$0xf] %vm5706, %v5666
        %5732 = vst.msk [vmem:[%s182 + $0x64] sm:$0xf] %vm5706, %v5667
        %5733 = vst.msk [vmem:[%s182 + $0x68] sm:$0xf] %vm5706, %v5668
        %5734 = vst.msk [vmem:[%s182 + $0x6c] sm:$0xf] %vm5706, %v5669
        %5735 = vst.msk [vmem:[%s182 + $0x70] sm:$0xf] %vm5706, %v5670
        %5736 = vst.msk [vmem:[%s182 + $0x74] sm:$0xf] %vm5706, %v5671
        %5737 = vst.msk [vmem:[%s182 + $0x78] sm:$0xf] %vm5706, %v5672
        %5738 = vst.msk [vmem:[%s182 + $0x7c] sm:$0xf] %vm5706, %v5673
        %s5739 = sand.u32 %s109, 1
        %s5740 = scalar_lea.sflag [#allocation4], %s5739
        %s5741 = sand.u32 %s109, 1
        %s5742 = smul.addr %s5741, 128
        %s5743 = scalar_lea.vmem [#allocation3], %s5742
        // Predicated region
        $region33: #{tpu_custom_call.1} parent=31 // pred_check
          %p5744 = pneg %p119
        $region34: #{tpu_custom_call.1} parent=31 // pred_check_branch
          %5746 = sbr.rel (%p5744) target = $region36
        $region35: #{tpu_custom_call.1} parent=31 // pred_region
          %s5747 = smul.u32 16, %s22
          %s5749 = ssub.s32 2048, 2048
          %5750 = vsyncadd %s5740, %s5749
          %s5751 = smul.addr %s5747, 2
          %s5752 = smul.addr %s21, 32
          %s5753 = sadd.s32 %s5751, %s5752
          %s5754 = smul.addr %s5753, 64
          %s5755 = scalar_lea.hbm %s3, %s5754
          %s5756 = sshll.u32 %s5743, 4
          %s5757 = int_to_ptr.vmem [resolvable:$true] %s5756
          %5762 = dma.vmem_to_hbm [thread:$0]  %s5757, 2048, %s5755, %s5740, 64, 64, 4
        $region36: #{tpu_custom_call.1} parent=31 // pred_fallthru
          _
      $region32: #{tpu_custom_call.1} parent=5 // pred_fallthru
        _
      %p5763 = scmp.le.s32.totalorder 2, %s12
      // Predicated region
      $region37: #{tpu_custom_call.1} parent=5 // pred_check
        %p5764 = pneg %p5763
      $region38: #{tpu_custom_call.1} parent=5 // pred_check_branch
        %5766 = sbr.rel (%p5764) target = $region40
      $region39: #{tpu_custom_call.1} parent=5 // pred_region
        %s5767 = ssub.s32 %s12, 2
        // Predicated region
        $region41: #{tpu_custom_call.1} parent=39 // pred_check
          %p5768 = pneg %p125
        $region42: #{tpu_custom_call.1} parent=39 // pred_check_branch
          %5770 = sbr.rel (%p5768) target = $region44
        $region43: #{tpu_custom_call.1} parent=39 // pred_region
          %s5771 = sand.u32 %s110, 1
          %s5772 = scalar_lea.sflag [#allocation4], %s5771
          %s5773 = sand.u32 %s110, 1
          %s5774 = smul.addr %s5773, 128
          %s5775 = scalar_lea.vmem [#allocation3], %s5774
          %5776 = dma.done %s5772, 2048
        $region44: #{tpu_custom_call.1} parent=39 // pred_fallthru
          _
      $region40: #{tpu_custom_call.1} parent=5 // pred_fallthru
        _
    $region6: #{tpu_custom_call.1} parent=1 // loop_footer
      %s16 = sadd.s32 1, %s12
    $region7: #{tpu_custom_call.1} parent=1 // loop_footer_branch
      %11 = sbr.rel target = $region3
    $region8: #{tpu_custom_call.1} parent=1 // loop_exit
      _
    %5777 = vsyncpa [#allocation4], 1
    %s5778 = scalar_lea.sflag [#allocation4], 1
    %5779 = vsyncpa %s5778, 1

</llo_original>
